<compile_context>
chip_gen: v7x
topology: tpu7x:2x2x1
jax: 0.10.0
libtpu: 0.0.40
codegen_flags: <defaults>
</compile_context>

<pallas_src>
import functools

import jax
import jax.numpy as jnp
from jax import lax
from jax.experimental import pallas as pl
from jax.experimental.pallas import tpu as pltpu

_VMEM_LIMIT = 32 * 1024 * 1024


def _round_up(x, m):
    return (x + m - 1) // m * m


def _pick_tiles(n):
    """Row/col tile sizes and padded N (both tiles divide n_pad)."""
    if n <= 1024:
        tm = tk = 128
    else:
        tm, tk = 256, 512
    n_pad = _round_up(n, max(tm, tk))
    return n_pad, tm, tk


# ---------------------------------------------------------------------------
# Kernel 1: fused MLP  z = relu(x@W1+b1)@W2+b2,  hidden0 = temp[0] * z
# ---------------------------------------------------------------------------
def _mlp_kernel(t0_ref, x_ref, w1_ref, b1_ref, w2_ref, b2_ref,
                z_out_ref, hid_out_ref):
    x = x_ref[...]                                                   # [tm, F]
    h = jnp.dot(x, w1_ref[...], preferred_element_type=jnp.float32) + b1_ref[...]
    h = jnp.maximum(h, 0.0)                                          # ReLU
    z = jnp.dot(h, w2_ref[...], preferred_element_type=jnp.float32) + b2_ref[...]
    z_out_ref[...] = z
    hid_out_ref[...] = z * t0_ref[...]                               # temp[0] * z


def _mlp_call(params, x_pad, t0, tm):
    n_pad, f_in = x_pad.shape
    w1 = params["w1"]
    b1 = params["b1"].reshape(1, -1)
    w2 = params["w2"]
    b2 = params["b2"].reshape(1, -1)
    hdim = w1.shape[1]
    c = w2.shape[1]

    z, hid = pl.pallas_call(
        _mlp_kernel,
        grid=(n_pad // tm,),
        in_specs=[
            pl.BlockSpec((1, 1), lambda i: (0, 0)),          # temp[0]
            pl.BlockSpec((tm, f_in), lambda i: (i, 0)),      # x rows
            pl.BlockSpec((f_in, hdim), lambda i: (0, 0)),    # W1 (resident)
            pl.BlockSpec((1, hdim), lambda i: (0, 0)),       # b1
            pl.BlockSpec((hdim, c), lambda i: (0, 0)),       # W2
            pl.BlockSpec((1, c), lambda i: (0, 0)),          # b2
        ],
        out_specs=[
            pl.BlockSpec((tm, c), lambda i: (i, 0)),
            pl.BlockSpec((tm, c), lambda i: (i, 0)),
        ],
        out_shape=[
            jax.ShapeDtypeStruct((n_pad, c), jnp.float32),
            jax.ShapeDtypeStruct((n_pad, c), jnp.float32),
        ],
        compiler_params=pltpu.CompilerParams(
            dimension_semantics=("parallel",),
            vmem_limit_bytes=_VMEM_LIMIT),
    )(t0, x_pad, w1, b1, w2, b2)
    return z, hid


# ---------------------------------------------------------------------------
# Kernel 2: one GPR propagation step (tiled A_hat @ z, fused hidden update,
#           fused log_softmax on the last step).
#   A_hat = D^{-1/2} (A+I) D^{-1/2} is applied as:
#       acc += A_tile(int8->bf16) @ (d_col * z_tile)   ;   z_new = d_row * acc
# ---------------------------------------------------------------------------
def _gpr_step_kernel(gamma_ref, drow_ref, dcol_ref, adj_ref, z_ref, hid_ref,
                     z_out_ref, hid_out_ref, acc_ref, *, last_step):
    kc = pl.program_id(1)

    @pl.when(kc == 0)
    def _init():
        acc_ref[...] = jnp.zeros_like(acc_ref)

    # adjacency streamed as int8 {0,1}; bf16 MXU inputs, f32 accumulation
    a = adj_ref[...].astype(jnp.bfloat16)                     # [tm, tk]
    z_s = (z_ref[...] * dcol_ref[...]).astype(jnp.bfloat16)   # [tk, C] scaled (f32 math)
    acc_ref[...] += jnp.dot(a, z_s, preferred_element_type=jnp.float32)

    @pl.when(kc == pl.num_programs(1) - 1)
    def _finalize():
        z_new = acc_ref[...] * drow_ref[...]                  # row-side normalization
        z_out_ref[...] = z_new
        hid = hid_ref[...] + gamma_ref[...] * z_new           # hidden += gamma_k * z
        if last_step:
            m = jnp.max(hid, axis=-1, keepdims=True)
            hid = hid - m - jnp.log(jnp.sum(jnp.exp(hid - m), axis=-1, keepdims=True))
        hid_out_ref[...] = hid


def _gpr_step(gamma, dinv_col, adj_i8, z, hid, tm, tk, last_step):
    n_pad = adj_i8.shape[0]
    c = z.shape[1]
    kernel = functools.partial(_gpr_step_kernel, last_step=last_step)

    z_new, hid_new = pl.pallas_call(
        kernel,
        grid=(n_pad // tm, n_pad // tk),
        in_specs=[
            pl.BlockSpec((1, 1), lambda i, kc: (0, 0)),        # gamma_k
            pl.BlockSpec((tm, 1), lambda i, kc: (i, 0)),       # d^{-1/2} (rows)
            pl.BlockSpec((tk, 1), lambda i, kc: (kc, 0)),      # d^{-1/2} (cols)
            pl.BlockSpec((tm, tk), lambda i, kc: (i, kc)),     # adjacency tile (int8)
            pl.BlockSpec((tk, c), lambda i, kc: (kc, 0)),      # z (source rows)
            pl.BlockSpec((tm, c), lambda i, kc: (i, 0)),       # hidden in
        ],
        out_specs=[
            pl.BlockSpec((tm, c), lambda i, kc: (i, 0)),
            pl.BlockSpec((tm, c), lambda i, kc: (i, 0)),
        ],
        out_shape=[
            jax.ShapeDtypeStruct((n_pad, c), jnp.float32),
            jax.ShapeDtypeStruct((n_pad, c), jnp.float32),
        ],
        scratch_shapes=[pltpu.VMEM((tm, c), jnp.float32)],
        compiler_params=pltpu.CompilerParams(
            dimension_semantics=("parallel", "arbitrary"),
            vmem_limit_bytes=_VMEM_LIMIT),
    )(gamma, dinv_col, dinv_col, adj_i8, z, hid)
    return z_new, hid_new


# ---------------------------------------------------------------------------
# Wrapper
# ---------------------------------------------------------------------------
def build_norm_adj(edge_index, n):
    """Dense binary adjacency (adj[dst, src] = 1) with self-loops + gcn_norm degrees."""
    src, dst = edge_index[0], edge_index[1]
    adj = jnp.zeros((n, n), jnp.float32).at[dst, src].set(1.0)
    adj = jnp.maximum(adj, jnp.eye(n, dtype=jnp.float32))     # add self loops
    deg = jnp.sum(adj, axis=1)
    dinv = jnp.where(deg > 0, lax.rsqrt(deg), 0.0)
    return adj, dinv


@functools.partial(jax.jit, static_argnames=("K",))
def gprgnn_forward(params, x, edge_index, *, K):
    n, f_in = x.shape
    adj, dinv = build_norm_adj(edge_index, n)
    n_pad, tm, tk = _pick_tiles(n)

    # pad node dimension to the tile size; padded rows/cols have zero adjacency
    # and zero d^{-1/2}, so they never contribute and are sliced off at the end.
    adj_i8 = jnp.zeros((n_pad, n_pad), jnp.int8).at[:n, :n].set(adj.astype(jnp.int8))
    dinv_col = jnp.zeros((n_pad, 1), jnp.float32).at[:n, 0].set(dinv)
    x_pad = jnp.zeros((n_pad, f_in), jnp.float32).at[:n].set(x.astype(jnp.float32))

    temp = params["temp"].astype(jnp.float32).reshape(-1, 1)  # [K+1, 1]

    z, hid = _mlp_call(params, x_pad, temp[0:1], tm)          # z, temp[0]*z
    for k in range(K):
        z, hid = _gpr_step(temp[k + 1:k + 2], dinv_col, adj_i8, z, hid,
                           tm, tk, last_step=(k == K - 1))
    return hid[:n]                                            # log_softmax rows


def gprgnn_reference(params, x, edge_index, K):
    """Pure-JAX reference (dense), for validation."""
    adj, dinv = build_norm_adj(edge_index, x.shape[0])
    a_hat = dinv[:, None] * adj * dinv[None, :]
    h = jnp.maximum(x @ params["w1"] + params["b1"], 0.0)
    z = h @ params["w2"] + params["b2"]
    temp = params["temp"]
    hid = temp[0] * z
    for k in range(K):
        z = a_hat @ z
        hid = hid + temp[k + 1] * z
    return jax.nn.log_softmax(hid, axis=1)


def init_params(key, num_features, hidden, num_classes, K, alpha):
    k1, k2, k3, k4 = jax.random.split(key, 4)

    def glorot(k, shape):
        s = jnp.sqrt(6.0 / (shape[0] + shape[1]))
        return jax.random.uniform(k, shape, jnp.float32, -s, s)

    # GPR_prop 'PPR' init: temp[k] = alpha*(1-alpha)^k, temp[K] = (1-alpha)^K
    temp = alpha * (1.0 - alpha) ** jnp.arange(K + 1, dtype=jnp.float32)
    temp = temp.at[-1].set((1.0 - alpha) ** K)

    return {
        "w1": glorot(k1, (num_features, hidden)),
        "b1": 0.1 * jax.random.normal(k3, (hidden,), jnp.float32),
        "w2": glorot(k2, (hidden, num_classes)),
        "b2": 0.1 * jax.random.normal(k4, (num_classes,), jnp.float32),
        "temp": temp.astype(jnp.float32),
    }


if __name__ == "__main__":
    N, F, HIDDEN, NUM_CLASSES = 200, 16, 32, 4
    K, ALPHA = 8, 0.1

    key = jax.random.PRNGKey(0)
    kx, kp, ke = jax.random.split(key, 3)

    x = jax.random.normal(kx, (N, F), jnp.float32)

    # undirected ring + a few random chords, as a [2, E] edge_index
    ring_src = jnp.arange(N)
    ring_dst = (jnp.arange(N) + 1) % N
    extra_src = jax.random.randint(ke, (32,), 0, N)
    extra_dst = (extra_src + 7) % N
    src = jnp.concatenate([ring_src, ring_dst, extra_src, extra_dst])
    dst = jnp.concatenate([ring_dst, ring_src, extra_dst, extra_src])
    edge_index = jnp.stack([src, dst], axis=0)

    params = init_params(kp, F, HIDDEN, NUM_CLASSES, K, ALPHA)

    out = gprgnn_forward(params, x, edge_index, K=K)
    out = jax.block_until_ready(out)

    assert out.shape == (N, NUM_CLASSES), out.shape
    assert bool(jnp.all(jnp.isfinite(out)))
    # rows of log_softmax should exponentiate-sum to 1
    row_sums = jnp.sum(jnp.exp(out), axis=1)
    assert bool(jnp.allclose(row_sums, 1.0, atol=1e-4)), row_sums
    # compare against a pure-JAX dense reference (bf16 matmul inputs => loose tol)
    ref = gprgnn_reference(params, x, edge_index, K)
    err = float(jnp.max(jnp.abs(out - ref)))
    assert err < 5e-2, err
    print("KERNEL_OK")
</pallas_src>

<mosaic_0001>
module attributes {stable_mosaic.version = 11 : i64} {
  func.func @_mlp_kernel(%arg0: i32, %arg1: memref<1x1xf32, #tpu.memory_space<vmem>>, %arg2: memref<128x16xf32, #tpu.memory_space<vmem>>, %arg3: memref<16x32xf32, #tpu.memory_space<vmem>>, %arg4: memref<1x32xf32, #tpu.memory_space<vmem>>, %arg5: memref<32x4xf32, #tpu.memory_space<vmem>>, %arg6: memref<1x4xf32, #tpu.memory_space<vmem>>, %arg7: memref<128x4xf32, #tpu.memory_space<vmem>>, %arg8: memref<128x4xf32, #tpu.memory_space<vmem>>) attributes {dimension_semantics = [#tpu.dimension_semantics<parallel>], iteration_bounds = array<i64: 2>, scalar_prefetch = 0 : i64, scratch_operands = 0 : i64, tpu.core_type = #tpu.core_type<tc>, window_params = [{pipeline_mode = #tpu.pipeline_mode<synchronous>, transform_indices = @transform_0, window_bounds = array<i64: 1, 1>}, {transform_indices = @transform_1, window_bounds = array<i64: 128, 16>}, {pipeline_mode = #tpu.pipeline_mode<synchronous>, transform_indices = @transform_2, window_bounds = array<i64: 16, 32>}, {pipeline_mode = #tpu.pipeline_mode<synchronous>, transform_indices = @transform_3, window_bounds = array<i64: 1, 32>}, {pipeline_mode = #tpu.pipeline_mode<synchronous>, transform_indices = @transform_4, window_bounds = array<i64: 32, 4>}, {pipeline_mode = #tpu.pipeline_mode<synchronous>, transform_indices = @transform_5, window_bounds = array<i64: 1, 4>}, {transform_indices = @transform_6, window_bounds = array<i64: 128, 4>}, {transform_indices = @transform_7, window_bounds = array<i64: 128, 4>}]} {
    %c0 = arith.constant 0 : index
    %c0_0 = arith.constant 0 : index
    %0 = vector.load %arg2[%c0, %c0_0] : memref<128x16xf32, #tpu.memory_space<vmem>>, vector<128x16xf32>
    %c0_1 = arith.constant 0 : index
    %c0_2 = arith.constant 0 : index
    %1 = vector.load %arg3[%c0_1, %c0_2] : memref<16x32xf32, #tpu.memory_space<vmem>>, vector<16x32xf32>
    %cst = arith.constant dense<0.000000e+00> : vector<128x32xf32>
    %2 = tpu.matmul %0, %1, %cst {dimension_numbers = #tpu.dot_dimension_numbers<[1], [0], [0], [1], [0, 0, 1, 1], [], []>} : vector<128x16xf32>, vector<16x32xf32>, vector<128x32xf32> -> vector<128x32xf32>
    %c0_3 = arith.constant 0 : index
    %c0_4 = arith.constant 0 : index
    %3 = vector.load %arg4[%c0_3, %c0_4] : memref<1x32xf32, #tpu.memory_space<vmem>>, vector<1x32xf32>
    %4 = vector.broadcast %3 : vector<1x32xf32> to vector<128x32xf32>
    %5 = arith.addf %2, %4 : vector<128x32xf32>
    %cst_5 = arith.constant 0.000000e+00 : f32
    %6 = vector.broadcast %cst_5 : f32 to vector<128x32xf32>
    %7 = arith.maximumf %5, %6 : vector<128x32xf32>
    %c0_6 = arith.constant 0 : index
    %c0_7 = arith.constant 0 : index
    %8 = vector.load %arg5[%c0_6, %c0_7] : memref<32x4xf32, #tpu.memory_space<vmem>>, vector<32x4xf32>
    %cst_8 = arith.constant dense<0.000000e+00> : vector<128x4xf32>
    %9 = tpu.matmul %7, %8, %cst_8 {dimension_numbers = #tpu.dot_dimension_numbers<[1], [0], [0], [1], [0, 0, 1, 1], [], []>} : vector<128x32xf32>, vector<32x4xf32>, vector<128x4xf32> -> vector<128x4xf32>
    %c0_9 = arith.constant 0 : index
    %c0_10 = arith.constant 0 : index
    %10 = vector.load %arg6[%c0_9, %c0_10] : memref<1x4xf32, #tpu.memory_space<vmem>>, vector<1x4xf32>
    %11 = vector.broadcast %10 : vector<1x4xf32> to vector<128x4xf32>
    %12 = arith.addf %9, %11 : vector<128x4xf32>
    %c0_11 = arith.constant 0 : index
    %c0_12 = arith.constant 0 : index
    %13 = vector.load %arg7[%c0_11, %c0_12] : memref<128x4xf32, #tpu.memory_space<vmem>>, vector<128x4xf32>
    tpu.vector_store %arg7[%c0_11, %c0_12], %12 {strides = array<i32>} : memref<128x4xf32, #tpu.memory_space<vmem>>, vector<128x4xf32>,
    %c0_13 = arith.constant 0 : index
    %c0_14 = arith.constant 0 : index
    %14 = vector.load %arg1[%c0_13, %c0_14] : memref<1x1xf32, #tpu.memory_space<vmem>>, vector<1x1xf32>
    %15 = vector.broadcast %14 : vector<1x1xf32> to vector<128x4xf32>
    %16 = arith.mulf %12, %15 : vector<128x4xf32>
    %c0_15 = arith.constant 0 : index
    %c0_16 = arith.constant 0 : index
    %17 = vector.load %arg8[%c0_15, %c0_16] : memref<128x4xf32, #tpu.memory_space<vmem>>, vector<128x4xf32>
    tpu.vector_store %arg8[%c0_15, %c0_16], %16 {strides = array<i32>} : memref<128x4xf32, #tpu.memory_space<vmem>>, vector<128x4xf32>,
    return
  }
  func.func @transform_0(%arg0: i32) -> (i32, i32) {
    %c0_i32 = arith.constant 0 : i32
    %c0_i32_0 = arith.constant 0 : i32
    %c0_i32_1 = arith.constant 0 : i32
    return %c0_i32, %c0_i32_0 : i32, i32
  }
  func.func @transform_1(%arg0: i32) -> (i32, i32) {
    %c0_i32 = arith.constant 0 : i32
    %c0_i32_0 = arith.constant 0 : i32
    return %arg0, %c0_i32 : i32, i32
  }
  func.func @transform_2(%arg0: i32) -> (i32, i32) {
    %c0_i32 = arith.constant 0 : i32
    %c0_i32_0 = arith.constant 0 : i32
    %c0_i32_1 = arith.constant 0 : i32
    return %c0_i32, %c0_i32_0 : i32, i32
  }
  func.func @transform_3(%arg0: i32) -> (i32, i32) {
    %c0_i32 = arith.constant 0 : i32
    %c0_i32_0 = arith.constant 0 : i32
    %c0_i32_1 = arith.constant 0 : i32
    return %c0_i32, %c0_i32_0 : i32, i32
  }
  func.func @transform_4(%arg0: i32) -> (i32, i32) {
    %c0_i32 = arith.constant 0 : i32
    %c0_i32_0 = arith.constant 0 : i32
    %c0_i32_1 = arith.constant 0 : i32
    return %c0_i32, %c0_i32_0 : i32, i32
  }
  func.func @transform_5(%arg0: i32) -> (i32, i32) {
    %c0_i32 = arith.constant 0 : i32
    %c0_i32_0 = arith.constant 0 : i32
    %c0_i32_1 = arith.constant 0 : i32
    return %c0_i32, %c0_i32_0 : i32, i32
  }
  func.func @transform_6(%arg0: i32) -> (i32, i32) {
    %c0_i32 = arith.constant 0 : i32
    %c0_i32_0 = arith.constant 0 : i32
    return %arg0, %c0_i32 : i32, i32
  }
  func.func @transform_7(%arg0: i32) -> (i32, i32) {
    %c0_i32 = arith.constant 0 : i32
    %c0_i32_0 = arith.constant 0 : i32
    return %arg0, %c0_i32 : i32, i32
  }
}

module attributes {stable_mosaic.version = 11 : i64} {
  func.func @_gpr_step_kernel(%arg0: i32, %arg1: i32, %arg2: memref<1x1xf32, #tpu.memory_space<vmem>>, %arg3: memref<128x1xf32, #tpu.memory_space<vmem>>, %arg4: memref<128x1xf32, #tpu.memory_space<vmem>>, %arg5: memref<128x128xi8, #tpu.memory_space<vmem>>, %arg6: memref<128x4xf32, #tpu.memory_space<vmem>>, %arg7: memref<128x4xf32, #tpu.memory_space<vmem>>, %arg8: memref<128x4xf32, #tpu.memory_space<vmem>>, %arg9: memref<128x4xf32, #tpu.memory_space<vmem>>, %arg10: memref<128x4xf32, #tpu.memory_space<vmem>>) attributes {dimension_semantics = [#tpu.dimension_semantics<parallel>, #tpu.dimension_semantics<arbitrary>], iteration_bounds = array<i64: 2, 2>, scalar_prefetch = 0 : i64, scratch_operands = 1 : i64, tpu.core_type = #tpu.core_type<tc>, window_params = [{pipeline_mode = #tpu.pipeline_mode<synchronous>, transform_indices = @transform_0, window_bounds = array<i64: 1, 1>}, {transform_indices = @transform_1, window_bounds = array<i64: 128, 1>}, {transform_indices = @transform_2, window_bounds = array<i64: 128, 1>}, {transform_indices = @transform_3, window_bounds = array<i64: 128, 128>}, {transform_indices = @transform_4, window_bounds = array<i64: 128, 4>}, {transform_indices = @transform_5, window_bounds = array<i64: 128, 4>}, {transform_indices = @transform_6, window_bounds = array<i64: 128, 4>}, {transform_indices = @transform_7, window_bounds = array<i64: 128, 4>}]} {
    %c0_i32 = arith.constant 0 : i32
    %0 = arith.cmpi eq, %arg1, %c0_i32 : i32
    %1 = arith.extui %0 : i1 to i32
    %c0_i32_0 = arith.constant 0 : i32
    %2 = arith.cmpi ne, %1, %c0_i32_0 : i32
    scf.if %2 {
      %cst_11 = arith.constant 0.000000e+00 : f32
      %17 = vector.broadcast %cst_11 : f32 to vector<128x4xf32>
      %c0_12 = arith.constant 0 : index
      %c0_13 = arith.constant 0 : index
      %18 = vector.load %arg10[%c0_12, %c0_13] : memref<128x4xf32, #tpu.memory_space<vmem>>, vector<128x4xf32>
      tpu.vector_store %arg10[%c0_12, %c0_13], %17 {strides = array<i32>} : memref<128x4xf32, #tpu.memory_space<vmem>>, vector<128x4xf32>,
    } else {
    }
    %c0 = arith.constant 0 : index
    %c0_1 = arith.constant 0 : index
    %3 = vector.load %arg5[%c0, %c0_1] : memref<128x128xi8, #tpu.memory_space<vmem>>, vector<128x128xi8>
    %4 = arith.sitofp %3 : vector<128x128xi8> to vector<128x128xbf16>
    %c0_2 = arith.constant 0 : index
    %c0_3 = arith.constant 0 : index
    %5 = vector.load %arg6[%c0_2, %c0_3] : memref<128x4xf32, #tpu.memory_space<vmem>>, vector<128x4xf32>
    %c0_4 = arith.constant 0 : index
    %c0_5 = arith.constant 0 : index
    %6 = vector.load %arg4[%c0_4, %c0_5] : memref<128x1xf32, #tpu.memory_space<vmem>>, vector<128x1xf32>
    %7 = vector.broadcast %6 : vector<128x1xf32> to vector<128x4xf32>
    %8 = arith.mulf %5, %7 : vector<128x4xf32>
    %9 = arith.truncf %8 : vector<128x4xf32> to vector<128x4xbf16>
    %c0_6 = arith.constant 0 : index
    %c0_7 = arith.constant 0 : index
    %10 = vector.load %arg10[%c0_6, %c0_7] : memref<128x4xf32, #tpu.memory_space<vmem>>, vector<128x4xf32>
    %cst = arith.constant dense<0.000000e+00> : vector<128x4xf32>
    %11 = tpu.matmul %4, %9, %cst {dimension_numbers = #tpu.dot_dimension_numbers<[1], [0], [0], [1], [0, 0, 1, 1], [], []>} : vector<128x128xbf16>, vector<128x4xbf16>, vector<128x4xf32> -> vector<128x4xf32>
    %12 = arith.addf %10, %11 : vector<128x4xf32>
    %c0_8 = arith.constant 0 : index
    %c0_9 = arith.constant 0 : index
    %13 = vector.load %arg10[%c0_8, %c0_9] : memref<128x4xf32, #tpu.memory_space<vmem>>, vector<128x4xf32>
    tpu.vector_store %arg10[%c0_8, %c0_9], %12 {strides = array<i32>} : memref<128x4xf32, #tpu.memory_space<vmem>>, vector<128x4xf32>,
    %c1_i32 = arith.constant 1 : i32
    %14 = arith.cmpi eq, %arg1, %c1_i32 : i32
    %15 = arith.extui %14 : i1 to i32
    %c0_i32_10 = arith.constant 0 : i32
    %16 = arith.cmpi ne, %15, %c0_i32_10 : i32
    scf.if %16 {
      %c0_11 = arith.constant 0 : index
      %c0_12 = arith.constant 0 : index
      %17 = vector.load %arg10[%c0_11, %c0_12] : memref<128x4xf32, #tpu.memory_space<vmem>>, vector<128x4xf32>
      %c0_13 = arith.constant 0 : index
      %c0_14 = arith.constant 0 : index
      %18 = vector.load %arg3[%c0_13, %c0_14] : memref<128x1xf32, #tpu.memory_space<vmem>>, vector<128x1xf32>
      %19 = vector.broadcast %18 : vector<128x1xf32> to vector<128x4xf32>
      %20 = arith.mulf %17, %19 : vector<128x4xf32>
      %c0_15 = arith.constant 0 : index
      %c0_16 = arith.constant 0 : index
      %21 = vector.load %arg8[%c0_15, %c0_16] : memref<128x4xf32, #tpu.memory_space<vmem>>, vector<128x4xf32>
      tpu.vector_store %arg8[%c0_15, %c0_16], %20 {strides = array<i32>} : memref<128x4xf32, #tpu.memory_space<vmem>>, vector<128x4xf32>,
      %c0_17 = arith.constant 0 : index
      %c0_18 = arith.constant 0 : index
      %22 = vector.load %arg7[%c0_17, %c0_18] : memref<128x4xf32, #tpu.memory_space<vmem>>, vector<128x4xf32>
      %c0_19 = arith.constant 0 : index
      %c0_20 = arith.constant 0 : index
      %23 = vector.load %arg2[%c0_19, %c0_20] : memref<1x1xf32, #tpu.memory_space<vmem>>, vector<1x1xf32>
      %24 = vector.broadcast %23 : vector<1x1xf32> to vector<128x4xf32>
      %25 = arith.mulf %24, %20 : vector<128x4xf32>
      %26 = arith.addf %22, %25 : vector<128x4xf32>
      %c0_21 = arith.constant 0 : index
      %c0_22 = arith.constant 0 : index
      %27 = vector.load %arg9[%c0_21, %c0_22] : memref<128x4xf32, #tpu.memory_space<vmem>>, vector<128x4xf32>
      tpu.vector_store %arg9[%c0_21, %c0_22], %26 {strides = array<i32>} : memref<128x4xf32, #tpu.memory_space<vmem>>, vector<128x4xf32>,
    } else {
    }
    return
  }
  func.func @transform_0(%arg0: i32, %arg1: i32) -> (i32, i32) {
    %c0_i32 = arith.constant 0 : i32
    %c0_i32_0 = arith.constant 0 : i32
    %c0_i32_1 = arith.constant 0 : i32
    return %c0_i32, %c0_i32_0 : i32, i32
  }
  func.func @transform_1(%arg0: i32, %arg1: i32) -> (i32, i32) {
    %c0_i32 = arith.constant 0 : i32
    %c0_i32_0 = arith.constant 0 : i32
    return %arg0, %c0_i32 : i32, i32
  }
  func.func @transform_2(%arg0: i32, %arg1: i32) -> (i32, i32) {
    %c0_i32 = arith.constant 0 : i32
    %c0_i32_0 = arith.constant 0 : i32
    return %arg1, %c0_i32 : i32, i32
  }
  func.func @transform_3(%arg0: i32, %arg1: i32) -> (i32, i32) {
    %c0_i32 = arith.constant 0 : i32
    return %arg0, %arg1 : i32, i32
  }
  func.func @transform_4(%arg0: i32, %arg1: i32) -> (i32, i32) {
    %c0_i32 = arith.constant 0 : i32
    %c0_i32_0 = arith.constant 0 : i32
    return %arg1, %c0_i32 : i32, i32
  }
  func.func @transform_5(%arg0: i32, %arg1: i32) -> (i32, i32) {
    %c0_i32 = arith.constant 0 : i32
    %c0_i32_0 = arith.constant 0 : i32
    return %arg0, %c0_i32 : i32, i32
  }
  func.func @transform_6(%arg0: i32, %arg1: i32) -> (i32, i32) {
    %c0_i32 = arith.constant 0 : i32
    %c0_i32_0 = arith.constant 0 : i32
    return %arg0, %c0_i32 : i32, i32
  }
  func.func @transform_7(%arg0: i32, %arg1: i32) -> (i32, i32) {
    %c0_i32 = arith.constant 0 : i32
    %c0_i32_0 = arith.constant 0 : i32
    return %arg0, %c0_i32 : i32, i32
  }
}

module attributes {stable_mosaic.version = 11 : i64} {
  func.func @_gpr_step_kernel(%arg0: i32, %arg1: i32, %arg2: memref<1x1xf32, #tpu.memory_space<vmem>>, %arg3: memref<128x1xf32, #tpu.memory_space<vmem>>, %arg4: memref<128x1xf32, #tpu.memory_space<vmem>>, %arg5: memref<128x128xi8, #tpu.memory_space<vmem>>, %arg6: memref<128x4xf32, #tpu.memory_space<vmem>>, %arg7: memref<128x4xf32, #tpu.memory_space<vmem>>, %arg8: memref<128x4xf32, #tpu.memory_space<vmem>>, %arg9: memref<128x4xf32, #tpu.memory_space<vmem>>, %arg10: memref<128x4xf32, #tpu.memory_space<vmem>>) attributes {dimension_semantics = [#tpu.dimension_semantics<parallel>, #tpu.dimension_semantics<arbitrary>], iteration_bounds = array<i64: 2, 2>, scalar_prefetch = 0 : i64, scratch_operands = 1 : i64, tpu.core_type = #tpu.core_type<tc>, window_params = [{pipeline_mode = #tpu.pipeline_mode<synchronous>, transform_indices = @transform_0, window_bounds = array<i64: 1, 1>}, {transform_indices = @transform_1, window_bounds = array<i64: 128, 1>}, {transform_indices = @transform_2, window_bounds = array<i64: 128, 1>}, {transform_indices = @transform_3, window_bounds = array<i64: 128, 128>}, {transform_indices = @transform_4, window_bounds = array<i64: 128, 4>}, {transform_indices = @transform_5, window_bounds = array<i64: 128, 4>}, {transform_indices = @transform_6, window_bounds = array<i64: 128, 4>}, {transform_indices = @transform_7, window_bounds = array<i64: 128, 4>}]} {
    %c0_i32 = arith.constant 0 : i32
    %0 = arith.cmpi eq, %arg1, %c0_i32 : i32
    %1 = arith.extui %0 : i1 to i32
    %c0_i32_0 = arith.constant 0 : i32
    %2 = arith.cmpi ne, %1, %c0_i32_0 : i32
    scf.if %2 {
      %cst_11 = arith.constant 0.000000e+00 : f32
      %17 = vector.broadcast %cst_11 : f32 to vector<128x4xf32>
      %c0_12 = arith.constant 0 : index
      %c0_13 = arith.constant 0 : index
      %18 = vector.load %arg10[%c0_12, %c0_13] : memref<128x4xf32, #tpu.memory_space<vmem>>, vector<128x4xf32>
      tpu.vector_store %arg10[%c0_12, %c0_13], %17 {strides = array<i32>} : memref<128x4xf32, #tpu.memory_space<vmem>>, vector<128x4xf32>,
    } else {
    }
    %c0 = arith.constant 0 : index
    %c0_1 = arith.constant 0 : index
    %3 = vector.load %arg5[%c0, %c0_1] : memref<128x128xi8, #tpu.memory_space<vmem>>, vector<128x128xi8>
    %4 = arith.sitofp %3 : vector<128x128xi8> to vector<128x128xbf16>
    %c0_2 = arith.constant 0 : index
    %c0_3 = arith.constant 0 : index
    %5 = vector.load %arg6[%c0_2, %c0_3] : memref<128x4xf32, #tpu.memory_space<vmem>>, vector<128x4xf32>
    %c0_4 = arith.constant 0 : index
    %c0_5 = arith.constant 0 : index
    %6 = vector.load %arg4[%c0_4, %c0_5] : memref<128x1xf32, #tpu.memory_space<vmem>>, vector<128x1xf32>
    %7 = vector.broadcast %6 : vector<128x1xf32> to vector<128x4xf32>
    %8 = arith.mulf %5, %7 : vector<128x4xf32>
    %9 = arith.truncf %8 : vector<128x4xf32> to vector<128x4xbf16>
    %c0_6 = arith.constant 0 : index
    %c0_7 = arith.constant 0 : index
    %10 = vector.load %arg10[%c0_6, %c0_7] : memref<128x4xf32, #tpu.memory_space<vmem>>, vector<128x4xf32>
    %cst = arith.constant dense<0.000000e+00> : vector<128x4xf32>
    %11 = tpu.matmul %4, %9, %cst {dimension_numbers = #tpu.dot_dimension_numbers<[1], [0], [0], [1], [0, 0, 1, 1], [], []>} : vector<128x128xbf16>, vector<128x4xbf16>, vector<128x4xf32> -> vector<128x4xf32>
    %12 = arith.addf %10, %11 : vector<128x4xf32>
    %c0_8 = arith.constant 0 : index
    %c0_9 = arith.constant 0 : index
    %13 = vector.load %arg10[%c0_8, %c0_9] : memref<128x4xf32, #tpu.memory_space<vmem>>, vector<128x4xf32>
    tpu.vector_store %arg10[%c0_8, %c0_9], %12 {strides = array<i32>} : memref<128x4xf32, #tpu.memory_space<vmem>>, vector<128x4xf32>,
    %c1_i32 = arith.constant 1 : i32
    %14 = arith.cmpi eq, %arg1, %c1_i32 : i32
    %15 = arith.extui %14 : i1 to i32
    %c0_i32_10 = arith.constant 0 : i32
    %16 = arith.cmpi ne, %15, %c0_i32_10 : i32
    scf.if %16 {
      %c0_11 = arith.constant 0 : index
      %c0_12 = arith.constant 0 : index
      %17 = vector.load %arg10[%c0_11, %c0_12] : memref<128x4xf32, #tpu.memory_space<vmem>>, vector<128x4xf32>
      %c0_13 = arith.constant 0 : index
      %c0_14 = arith.constant 0 : index
      %18 = vector.load %arg3[%c0_13, %c0_14] : memref<128x1xf32, #tpu.memory_space<vmem>>, vector<128x1xf32>
      %19 = vector.broadcast %18 : vector<128x1xf32> to vector<128x4xf32>
      %20 = arith.mulf %17, %19 : vector<128x4xf32>
      %c0_15 = arith.constant 0 : index
      %c0_16 = arith.constant 0 : index
      %21 = vector.load %arg8[%c0_15, %c0_16] : memref<128x4xf32, #tpu.memory_space<vmem>>, vector<128x4xf32>
      tpu.vector_store %arg8[%c0_15, %c0_16], %20 {strides = array<i32>} : memref<128x4xf32, #tpu.memory_space<vmem>>, vector<128x4xf32>,
      %c0_17 = arith.constant 0 : index
      %c0_18 = arith.constant 0 : index
      %22 = vector.load %arg7[%c0_17, %c0_18] : memref<128x4xf32, #tpu.memory_space<vmem>>, vector<128x4xf32>
      %c0_19 = arith.constant 0 : index
      %c0_20 = arith.constant 0 : index
      %23 = vector.load %arg2[%c0_19, %c0_20] : memref<1x1xf32, #tpu.memory_space<vmem>>, vector<1x1xf32>
      %24 = vector.broadcast %23 : vector<1x1xf32> to vector<128x4xf32>
      %25 = arith.mulf %24, %20 : vector<128x4xf32>
      %26 = arith.addf %22, %25 : vector<128x4xf32>
      %cst_21 = arith.constant dense<0xFF800000> : vector<128xf32>
      %27 = vector.multi_reduction <maximumf>, %26, %cst_21 [1] : vector<128x4xf32> to vector<128xf32>
      %28 = vector.shape_cast %27 : vector<128xf32> to vector<128x1xf32>
      %29 = vector.broadcast %28 : vector<128x1xf32> to vector<128x4xf32>
      %30 = arith.subf %26, %29 : vector<128x4xf32>
      %31 = vector.broadcast %28 : vector<128x1xf32> to vector<128x4xf32>
      %32 = arith.subf %26, %31 : vector<128x4xf32>
      %33 = math.exp %32 : vector<128x4xf32>
      %cst_22 = arith.constant dense<0.000000e+00> : vector<128xf32>
      %34 = vector.multi_reduction <add>, %33, %cst_22 [1] : vector<128x4xf32> to vector<128xf32>
      %35 = vector.shape_cast %34 : vector<128xf32> to vector<128x1xf32>
      %36 = math.log %35 : vector<128x1xf32>
      %37 = vector.broadcast %36 : vector<128x1xf32> to vector<128x4xf32>
      %38 = arith.subf %30, %37 : vector<128x4xf32>
      %c0_23 = arith.constant 0 : index
      %c0_24 = arith.constant 0 : index
      %39 = vector.load %arg9[%c0_23, %c0_24] : memref<128x4xf32, #tpu.memory_space<vmem>>, vector<128x4xf32>
      tpu.vector_store %arg9[%c0_23, %c0_24], %38 {strides = array<i32>} : memref<128x4xf32, #tpu.memory_space<vmem>>, vector<128x4xf32>,
    } else {
    }
    return
  }
  func.func @transform_0(%arg0: i32, %arg1: i32) -> (i32, i32) {
    %c0_i32 = arith.constant 0 : i32
    %c0_i32_0 = arith.constant 0 : i32
    %c0_i32_1 = arith.constant 0 : i32
    return %c0_i32, %c0_i32_0 : i32, i32
  }
  func.func @transform_1(%arg0: i32, %arg1: i32) -> (i32, i32) {
    %c0_i32 = arith.constant 0 : i32
    %c0_i32_0 = arith.constant 0 : i32
    return %arg0, %c0_i32 : i32, i32
  }
  func.func @transform_2(%arg0: i32, %arg1: i32) -> (i32, i32) {
    %c0_i32 = arith.constant 0 : i32
    %c0_i32_0 = arith.constant 0 : i32
    return %arg1, %c0_i32 : i32, i32
  }
  func.func @transform_3(%arg0: i32, %arg1: i32) -> (i32, i32) {
    %c0_i32 = arith.constant 0 : i32
    return %arg0, %arg1 : i32, i32
  }
  func.func @transform_4(%arg0: i32, %arg1: i32) -> (i32, i32) {
    %c0_i32 = arith.constant 0 : i32
    %c0_i32_0 = arith.constant 0 : i32
    return %arg1, %c0_i32 : i32, i32
  }
  func.func @transform_5(%arg0: i32, %arg1: i32) -> (i32, i32) {
    %c0_i32 = arith.constant 0 : i32
    %c0_i32_0 = arith.constant 0 : i32
    return %arg0, %c0_i32 : i32, i32
  }
  func.func @transform_6(%arg0: i32, %arg1: i32) -> (i32, i32) {
    %c0_i32 = arith.constant 0 : i32
    %c0_i32_0 = arith.constant 0 : i32
    return %arg0, %c0_i32 : i32, i32
  }
  func.func @transform_7(%arg0: i32, %arg1: i32) -> (i32, i32) {
    %c0_i32 = arith.constant 0 : i32
    %c0_i32_0 = arith.constant 0 : i32
    return %arg0, %c0_i32 : i32, i32
  }
}

</mosaic_0001>

<llo_original>
// kernel: gprgnn_forward.9
$region0: #{gprgnn_forward.9}
  #allocation0 [shape = 'u32[]', space=smem, size = 0x4, offset = 0x4, fixed_abs, tag = 'smem constant byte address 0x4 - core index']
  #allocation1 [shape = 'u32[144,128]{1,0:T(1,128)}', space=vmem, size = 0x12000, scoped, tag = 'internal scratch']
  #allocation2 [shape = 'f32[1,1]{1,0:T(1,128)S(1)}', space=vmem, size = 0x200, scoped, tag = 'scoped memory for gprgnn_forward.9']
  %s0 = inlined_call_operand.<no memory space> [shape: f32[1,1], index: 0, kind: input, shape index: {}]
  %s1 = inlined_call_operand.vmem [shape: f32[256,16], index: 1, kind: input, shape index: {}]
  %s2 = inlined_call_operand.vmem [shape: f32[16,32], index: 2, kind: input, shape index: {}]
  %s3 = inlined_call_operand.vmem [shape: f32[1,32], index: 3, kind: input, shape index: {}]
  %s4 = inlined_call_operand.vmem [shape: f32[32,4], index: 4, kind: input, shape index: {}]
  %s5 = inlined_call_operand.vmem [shape: f32[1,4], index: 5, kind: input, shape index: {}]
  %s6 = inlined_call_operand.vmem [shape: f32[256,4], index: 6, kind: output, shape index: {0}]
  %s7 = inlined_call_operand.vmem [shape: f32[256,4], index: 7, kind: output, shape index: {1}]
  %8 = xla_tuple %s6, %s7
  %s9 = sld [smem:[#allocation0]]
  $region65: #{gprgnn_forward.9} parent=0
    _
  %s11 = ssub.s32 1, %s9
  %s12 = scalar_select 0, %s11, %s9
  %v13 = vstv %s0
  %14 = vst [vmem:[#allocation2] sm:$0x1] %v13
  loop: start=0, step=1, limit=4
  $region2: #{gprgnn_forward.9} parent=0 // loop_pre_header
    _
  $region3: #{gprgnn_forward.9} parent=0 // loop_header
    %s16 = sphi 0, %s20
    %p17 = scmp.ge.s32.totalorder %s16, 4
    %s24 = sphi 0, %s24
    %s26 = sphi 0, %s24
    %s27 = sphi 0, %s26
    %s41 = sphi 0, %s27
    %s47 = sphi 0, %s49
    %s50 = sphi 0, %s47
    %s51 = sphi 0, %s50
    %s67 = sphi 0, %s51
    %s71 = sphi 0, %s71
    %s73 = sphi 0, %s71
    %s74 = sphi 0, %s73
    %s88 = sphi 0, %s74
    %s92 = sphi 0, %s92
    %s94 = sphi 0, %s92
    %s95 = sphi 0, %s94
    %s109 = sphi 0, %s95
    %s113 = sphi 0, %s113
    %s115 = sphi 0, %s113
    %s116 = sphi 0, %s115
    %s130 = sphi 0, %s116
    %s134 = sphi 0, %s134
    %s136 = sphi 0, %s134
    %s137 = sphi 0, %s136
    %s151 = sphi 0, %s137
    %s157 = sphi 0, %s159
    %s160 = sphi 0, %s157
    %s161 = sphi 0, %s160
    %s177 = sphi 0, %s161
    %s183 = sphi 0, %s185
    %s186 = sphi 0, %s183
    %s187 = sphi 0, %s186
    %s203 = sphi 0, %s187
  $region4: #{gprgnn_forward.9} parent=0 // loop_header_branch
    %19 = sbr.rel (%p17) target = $region8
  $region5: #{gprgnn_forward.9} parent=0 // loop_body
    %s21 = ssub.s32 %s16, 1
    %s22 = ssub.s32 %s16, 2
    %s23 = sadd.s32 %s16, 1
    %s25 = sadd.s32 %s24, 1
    %p28 = scmp.eq.s32.totalorder %s16, 1
    %p29 = scmp.ne.s32.totalorder %s24, %s26
    %p30 = scmp.eq.s32.totalorder %s16, 0
    %p31 = por %p29, %p30
    %p32 = scmp.ne.s32.totalorder %s24, %s26
    %p33 = scmp.eq.s32.totalorder %s21, 1
    %p34 = por %p32, %p33
    %p35 = scmp.ne.s32.totalorder %s26, %s27
    %p36 = scmp.eq.s32.totalorder %s21, 0
    %p37 = por %p35, %p36
    %p38 = scmp.ne.s32.totalorder %s26, %s27
    %p39 = scmp.eq.s32.totalorder %s22, 1
    %p40 = por %p38, %p39
    %p42 = scmp.ne.s32.totalorder %s27, %s41
    %p43 = scmp.eq.s32.totalorder %s22, 0
    %p44 = por %p42, %p43
    %s45 = ssub.s32 %s16, %s23
    %p46 = scmp.eq.s32.totalorder %s45, 0
    %s48 = sadd.s32 %s47, 1
    %s49 = scalar_select %p46, %s47, %s48
    %p52 = pneg %p46
    %p53 = scmp.eq.s32.totalorder %s16, 1
    %p54 = por %p52, %p53
    %p55 = scmp.ne.s32.totalorder %s47, %s50
    %p56 = scmp.eq.s32.totalorder %s16, 0
    %p57 = por %p55, %p56
    %p58 = scmp.ne.s32.totalorder %s47, %s50
    %p59 = scmp.eq.s32.totalorder %s21, 1
    %p60 = por %p58, %p59
    %p61 = scmp.ne.s32.totalorder %s50, %s51
    %p62 = scmp.eq.s32.totalorder %s21, 0
    %p63 = por %p61, %p62
    %p64 = scmp.ne.s32.totalorder %s50, %s51
    %p65 = scmp.eq.s32.totalorder %s22, 1
    %p66 = por %p64, %p65
    %p68 = scmp.ne.s32.totalorder %s51, %s67
    %p69 = scmp.eq.s32.totalorder %s22, 0
    %p70 = por %p68, %p69
    %s72 = sadd.s32 %s71, 1
    %p75 = scmp.eq.s32.totalorder %s16, 1
    %p76 = scmp.ne.s32.totalorder %s71, %s73
    %p77 = scmp.eq.s32.totalorder %s16, 0
    %p78 = por %p76, %p77
    %p79 = scmp.ne.s32.totalorder %s71, %s73
    %p80 = scmp.eq.s32.totalorder %s21, 1
    %p81 = por %p79, %p80
    %p82 = scmp.ne.s32.totalorder %s73, %s74
    %p83 = scmp.eq.s32.totalorder %s21, 0
    %p84 = por %p82, %p83
    %p85 = scmp.ne.s32.totalorder %s73, %s74
    %p86 = scmp.eq.s32.totalorder %s22, 1
    %p87 = por %p85, %p86
    %p89 = scmp.ne.s32.totalorder %s74, %s88
    %p90 = scmp.eq.s32.totalorder %s22, 0
    %p91 = por %p89, %p90
    %s93 = sadd.s32 %s92, 1
    %p96 = scmp.eq.s32.totalorder %s16, 1
    %p97 = scmp.ne.s32.totalorder %s92, %s94
    %p98 = scmp.eq.s32.totalorder %s16, 0
    %p99 = por %p97, %p98
    %p100 = scmp.ne.s32.totalorder %s92, %s94
    %p101 = scmp.eq.s32.totalorder %s21, 1
    %p102 = por %p100, %p101
    %p103 = scmp.ne.s32.totalorder %s94, %s95
    %p104 = scmp.eq.s32.totalorder %s21, 0
    %p105 = por %p103, %p104
    %p106 = scmp.ne.s32.totalorder %s94, %s95
    %p107 = scmp.eq.s32.totalorder %s22, 1
    %p108 = por %p106, %p107
    %p110 = scmp.ne.s32.totalorder %s95, %s109
    %p111 = scmp.eq.s32.totalorder %s22, 0
    %p112 = por %p110, %p111
    %s114 = sadd.s32 %s113, 1
    %p117 = scmp.eq.s32.totalorder %s16, 1
    %p118 = scmp.ne.s32.totalorder %s113, %s115
    %p119 = scmp.eq.s32.totalorder %s16, 0
    %p120 = por %p118, %p119
    %p121 = scmp.ne.s32.totalorder %s113, %s115
    %p122 = scmp.eq.s32.totalorder %s21, 1
    %p123 = por %p121, %p122
    %p124 = scmp.ne.s32.totalorder %s115, %s116
    %p125 = scmp.eq.s32.totalorder %s21, 0
    %p126 = por %p124, %p125
    %p127 = scmp.ne.s32.totalorder %s115, %s116
    %p128 = scmp.eq.s32.totalorder %s22, 1
    %p129 = por %p127, %p128
    %p131 = scmp.ne.s32.totalorder %s116, %s130
    %p132 = scmp.eq.s32.totalorder %s22, 0
    %p133 = por %p131, %p132
    %s135 = sadd.s32 %s134, 1
    %p138 = scmp.eq.s32.totalorder %s16, 1
    %p139 = scmp.ne.s32.totalorder %s134, %s136
    %p140 = scmp.eq.s32.totalorder %s16, 0
    %p141 = por %p139, %p140
    %p142 = scmp.ne.s32.totalorder %s134, %s136
    %p143 = scmp.eq.s32.totalorder %s21, 1
    %p144 = por %p142, %p143
    %p145 = scmp.ne.s32.totalorder %s136, %s137
    %p146 = scmp.eq.s32.totalorder %s21, 0
    %p147 = por %p145, %p146
    %p148 = scmp.ne.s32.totalorder %s136, %s137
    %p149 = scmp.eq.s32.totalorder %s22, 1
    %p150 = por %p148, %p149
    %p152 = scmp.ne.s32.totalorder %s137, %s151
    %p153 = scmp.eq.s32.totalorder %s22, 0
    %p154 = por %p152, %p153
    %s155 = ssub.s32 %s16, %s23
    %p156 = scmp.eq.s32.totalorder %s155, 0
    %s158 = sadd.s32 %s157, 1
    %s159 = scalar_select %p156, %s157, %s158
    %p162 = pneg %p156
    %p163 = scmp.eq.s32.totalorder %s16, 1
    %p164 = por %p162, %p163
    %p165 = scmp.ne.s32.totalorder %s157, %s160
    %p166 = scmp.eq.s32.totalorder %s16, 0
    %p167 = por %p165, %p166
    %p168 = scmp.ne.s32.totalorder %s157, %s160
    %p169 = scmp.eq.s32.totalorder %s21, 1
    %p170 = por %p168, %p169
    %p171 = scmp.ne.s32.totalorder %s160, %s161
    %p172 = scmp.eq.s32.totalorder %s21, 0
    %p173 = por %p171, %p172
    %p174 = scmp.ne.s32.totalorder %s160, %s161
    %p175 = scmp.eq.s32.totalorder %s22, 1
    %p176 = por %p174, %p175
    %p178 = scmp.ne.s32.totalorder %s161, %s177
    %p179 = scmp.eq.s32.totalorder %s22, 0
    %p180 = por %p178, %p179
    %s181 = ssub.s32 %s16, %s23
    %p182 = scmp.eq.s32.totalorder %s181, 0
    %s184 = sadd.s32 %s183, 1
    %s185 = scalar_select %p182, %s183, %s184
    %p188 = pneg %p182
    %p189 = scmp.eq.s32.totalorder %s16, 1
    %p190 = por %p188, %p189
    %p191 = scmp.ne.s32.totalorder %s183, %s186
    %p192 = scmp.eq.s32.totalorder %s16, 0
    %p193 = por %p191, %p192
    %p194 = scmp.ne.s32.totalorder %s183, %s186
    %p195 = scmp.eq.s32.totalorder %s21, 1
    %p196 = por %p194, %p195
    %p197 = scmp.ne.s32.totalorder %s186, %s187
    %p198 = scmp.eq.s32.totalorder %s21, 0
    %p199 = por %p197, %p198
    %p200 = scmp.ne.s32.totalorder %s186, %s187
    %p201 = scmp.eq.s32.totalorder %s22, 1
    %p202 = por %p200, %p201
    %p204 = scmp.ne.s32.totalorder %s187, %s203
    %p205 = scmp.eq.s32.totalorder %s22, 0
    %p206 = por %p204, %p205
    %p207 = scmp.le.s32.totalorder 1, %s16
    %p208 = scmp.lt.s32.totalorder %s16, 3
    %p209 = pnand %p207, %p208
    %p210 = pneg %p209
    // Predicated region
    $region9: #{gprgnn_forward.9} parent=5 // pred_check
      _
    $region10: #{gprgnn_forward.9} parent=5 // pred_check_branch
      %212 = sbr.rel (%p209) target = $region12
    $region11: #{gprgnn_forward.9} parent=5 // pred_region
      %s213 = ssub.s32 %s16, 1
      // Predicated region
      $region13: #{gprgnn_forward.9} parent=11 // pred_check
        %p214 = pneg %p37
      $region14: #{gprgnn_forward.9} parent=11 // pred_check_branch
        %216 = sbr.rel (%p214) target = $region16
      $region15: #{gprgnn_forward.9} parent=11 // pred_region
        _
      $region16: #{gprgnn_forward.9} parent=11 // pred_fallthru
        _
      // Predicated region
      $region17: #{gprgnn_forward.9} parent=11 // pred_check
        %p217 = pneg %p84
      $region18: #{gprgnn_forward.9} parent=11 // pred_check_branch
        %219 = sbr.rel (%p217) target = $region20
      $region19: #{gprgnn_forward.9} parent=11 // pred_region
        _
      $region20: #{gprgnn_forward.9} parent=11 // pred_fallthru
        _
      // Predicated region
      $region21: #{gprgnn_forward.9} parent=11 // pred_check
        %p220 = pneg %p105
      $region22: #{gprgnn_forward.9} parent=11 // pred_check_branch
        %222 = sbr.rel (%p220) target = $region24
      $region23: #{gprgnn_forward.9} parent=11 // pred_region
        _
      $region24: #{gprgnn_forward.9} parent=11 // pred_fallthru
        _
      // Predicated region
      $region25: #{gprgnn_forward.9} parent=11 // pred_check
        %p223 = pneg %p126
      $region26: #{gprgnn_forward.9} parent=11 // pred_check_branch
        %225 = sbr.rel (%p223) target = $region28
      $region27: #{gprgnn_forward.9} parent=11 // pred_region
        _
      $region28: #{gprgnn_forward.9} parent=11 // pred_fallthru
        _
      // Predicated region
      $region29: #{gprgnn_forward.9} parent=11 // pred_check
        %p226 = pneg %p147
      $region30: #{gprgnn_forward.9} parent=11 // pred_check_branch
        %228 = sbr.rel (%p226) target = $region32
      $region31: #{gprgnn_forward.9} parent=11 // pred_region
        _
      $region32: #{gprgnn_forward.9} parent=11 // pred_fallthru
        _
    $region12: #{gprgnn_forward.9} parent=5 // pred_fallthru
      _
    %p229 = scmp.lt.s32.totalorder %s16, 2
    // Predicated region
    $region33: #{gprgnn_forward.9} parent=5 // pred_check
      %p230 = pneg %p229
    $region34: #{gprgnn_forward.9} parent=5 // pred_check_branch
      %232 = sbr.rel (%p230) target = $region36
    $region35: #{gprgnn_forward.9} parent=5 // pred_region
      // Predicated region
      $region37: #{gprgnn_forward.9} parent=35 // pred_check
        %p233 = pneg %p57
      $region38: #{gprgnn_forward.9} parent=35 // pred_check_branch
        %235 = sbr.rel (%p233) target = $region40
      $region39: #{gprgnn_forward.9} parent=35 // pred_region
        %s236 = smul.u32 16, %s16
        %p237 = scmp.lt.s32.totalorder %s236, 31
        %s238 = scalar_select %p237, %s236, 31
        %s239 = smul.addr %s238, 8
        %s240 = scalar_lea.vmem %s1, %s239
        %s241 = smul.u32 16, %s16
      $region40: #{gprgnn_forward.9} parent=35 // pred_fallthru
        _
    $region36: #{gprgnn_forward.9} parent=5 // pred_fallthru
      _
    %p242 = scmp.le.s32.totalorder 1, %s16
    %p243 = scmp.lt.s32.totalorder %s16, 3
    %p244 = pnand %p242, %p243
    %p245 = pneg %p244
    // Predicated region
    $region41: #{gprgnn_forward.9} parent=5 // pred_check
      _
    $region42: #{gprgnn_forward.9} parent=5 // pred_check_branch
      %247 = sbr.rel (%p244) target = $region44
    $region43: #{gprgnn_forward.9} parent=5 // pred_region
      %s248 = ssub.s32 %s16, 1
      %p249 = pneg %p37
      %p250 = pneg %p34
      %s251 = smul.u32 16, %s21
      %p252 = scmp.lt.s32.totalorder %s251, 31
      %s253 = scalar_select %p252, %s251, 31
      %s254 = smul.addr %s253, 8
      %s255 = scalar_lea.vmem %s1, %s254
      %p256 = pneg %p63
      %p257 = pneg %p60
      %p258 = pneg %p84
      %p259 = pneg %p81
      %p260 = pneg %p105
      %p261 = pneg %p102
      %p262 = pneg %p126
      %p263 = pneg %p123
      %p264 = pneg %p147
      %p265 = pneg %p144
      %p266 = pneg %p173
      %p267 = pneg %p170
      %s268 = smul.u32 16, %s21
      %p269 = scmp.lt.s32.totalorder %s268, 31
      %s270 = scalar_select %p269, %s268, 31
      %s271 = smul.addr %s270, 8
      %s272 = scalar_lea.vmem %s6, %s271
      %p273 = pneg %p199
      %p274 = pneg %p196
      %s275 = smul.u32 16, %s21
      %p276 = scmp.lt.s32.totalorder %s275, 31
      %s277 = scalar_select %p276, %s275, 31
      %s278 = smul.addr %s277, 8
      %s279 = scalar_lea.vmem %s7, %s278
      %s280 = smul.u32 16, %s21
      %p281 = scmp.lt.s32.totalorder %s280, 31
      %s282 = scalar_select %p281, %s280, 31
      %s283 = smul.addr %s282, 8
      %s284 = scalar_lea.vmem %s1, %s283
      %s285 = smul.u32 16, %s21
      %s286 = smul.u32 16, %s21
      %p287 = scmp.lt.s32.totalorder %s286, 31
      %s288 = scalar_select %p287, %s286, 31
      %s289 = smul.addr %s288, 8
      %s290 = scalar_lea.vmem %s6, %s289
      %s291 = smul.u32 16, %s21
      %s292 = smul.u32 16, %s21
      %p293 = scmp.lt.s32.totalorder %s292, 31
      %s294 = scalar_select %p293, %s292, 31
      %s295 = smul.addr %s294, 8
      %s296 = scalar_lea.vmem %s7, %s295
      %s297 = smul.u32 16, %s21
      %v298 = vld [vmem:[%s284] sm:$0xff]
      %v299 = vld [vmem:[%s284 + $0x8] sm:$0xff]
      %v300 = vld [vmem:[%s284 + $0x10] sm:$0xff]
      %v301 = vld [vmem:[%s284 + $0x18] sm:$0xff]
      %v302 = vld [vmem:[%s284 + $0x20] sm:$0xff]
      %v303 = vld [vmem:[%s284 + $0x28] sm:$0xff]
      %v304 = vld [vmem:[%s284 + $0x30] sm:$0xff]
      %v305 = vld [vmem:[%s284 + $0x38] sm:$0xff]
      %v306 = vld [vmem:[%s284 + $0x40] sm:$0xff]
      %v307 = vld [vmem:[%s284 + $0x48] sm:$0xff]
      %v308 = vld [vmem:[%s284 + $0x50] sm:$0xff]
      %v309 = vld [vmem:[%s284 + $0x58] sm:$0xff]
      %v310 = vld [vmem:[%s284 + $0x60] sm:$0xff]
      %v311 = vld [vmem:[%s284 + $0x68] sm:$0xff]
      %v312 = vld [vmem:[%s284 + $0x70] sm:$0xff]
      %v313 = vld [vmem:[%s284 + $0x78] sm:$0xff]
      %v314 = vld [vmem:[%s2] sm:$0xff]
      %v315 = vld [vmem:[%s2 + $0x8] sm:$0xff]
      %v316 = vld [vmem:[%s3] sm:$0x1]
      %v318 = vlaneseq
      %v319 = vshrl.u32 %v318, 7
      %v320 = vsub.s32 0, %v319
      %v321 = vrot.slane %v316, %v320
      %vm323 = vcmask 130048
      %v325 = vsel %vm323, %v298, 0
      %v328 = vsel %vm323, %v299, 0
      %v331 = vsel %vm323, %v300, 0
      %v334 = vsel %vm323, %v301, 0
      %v337 = vsel %vm323, %v302, 0
      %v340 = vsel %vm323, %v303, 0
      %v343 = vsel %vm323, %v304, 0
      %v346 = vsel %vm323, %v305, 0
      %v349 = vsel %vm323, %v306, 0
      %v352 = vsel %vm323, %v307, 0
      %v355 = vsel %vm323, %v308, 0
      %v358 = vsel %vm323, %v309, 0
      %v361 = vsel %vm323, %v310, 0
      %v364 = vsel %vm323, %v311, 0
      %v367 = vsel %vm323, %v312, 0
      %v370 = vsel %vm323, %v313, 0
      %372 = vmatprep.subr.mxu0 0.0
      %373 = vmatpush1.msra.mxu0 %v314
      %374 = vmatprep.subr.mxu0 0.0
      %375 = vmatpush1.msra.mxu0 %v315
      %376 = vmatprep.subr.mxu0 0.0
      %377 = vmatpush1.msra.mxu0 0.0
      %378 = vmatprep.subr.mxu0 0.0
      %379 = vmatpush1.msra.mxu0 0.0
      %380 = vmatprep.subr.mxu0 0.0
      %381 = vmatpush1.msra.mxu0 0.0
      %382 = vmatprep.subr.mxu0 0.0
      %383 = vmatpush1.msra.mxu0 0.0
      %384 = vmatprep.subr.mxu0 0.0
      %385 = vmatpush1.msra.mxu0 0.0
      %386 = vmatprep.subr.mxu0 0.0
      %387 = vmatpush1.msra.mxu0 0.0
      %388 = vmatprep.subr.mxu0 0.0
      %389 = vmatpush1.msra.mxu0 0.0
      %390 = vmatprep.subr.mxu0 0.0
      %391 = vmatpush1.msra.mxu0 0.0
      %392 = vmatprep.subr.mxu0 0.0
      %393 = vmatpush1.msra.mxu0 0.0
      %394 = vmatprep.subr.mxu0 0.0
      %395 = vmatpush1.msra.mxu0 0.0
      %396 = vmatprep.subr.mxu0 0.0
      %397 = vmatpush1.msra.mxu0 0.0
      %398 = vmatprep.subr.mxu0 0.0
      %399 = vmatpush1.msra.mxu0 0.0
      %400 = vmatprep.subr.mxu0 0.0
      %401 = vmatpush1.msra.mxu0 0.0
      %402 = vmatprep.subr.mxu0 0.0
      %403 = vmatpush1.msra.mxu0 0.0
      %404 = vmatprep.subr.mxu0 0.0
      %405 = vmatpush1.msra.mxu0 0.0
      %406 = vmatprep.subr.mxu0 0.0
      %407 = vmatpush1.msra.mxu0 0.0
      %408 = vmatprep.subr.mxu0 0.0
      %409 = vmatpush1.msra.mxu0 0.0
      %410 = vmatprep.subr.mxu0 0.0
      %411 = vmatpush1.msra.mxu0 0.0
      %412 = vmatprep.subr.mxu0 0.0
      %413 = vmatpush1.msra.mxu0 0.0
      %414 = vmatprep.subr.mxu0 0.0
      %415 = vmatpush1.msra.mxu0 0.0
      %416 = vmatprep.subr.mxu0 0.0
      %417 = vmatpush1.msra.mxu0 0.0
      %418 = vmatprep.subr.mxu0 0.0
      %419 = vmatpush1.msra.mxu0 0.0
      %420 = vmatprep.subr.mxu0 0.0
      %421 = vmatpush1.msra.mxu0 0.0
      %422 = vmatprep.subr.mxu0 0.0
      %423 = vmatpush1.msra.mxu0 0.0
      %424 = vmatprep.subr.mxu0 0.0
      %425 = vmatpush1.msra.mxu0 0.0
      %426 = vmatprep.subr.mxu0 0.0
      %427 = vmatpush1.msra.mxu0 0.0
      %428 = vmatprep.subr.mxu0 0.0
      %429 = vmatpush1.msra.mxu0 0.0
      %430 = vmatprep.subr.mxu0 0.0
      %431 = vmatpush1.msra.mxu0 0.0
      %432 = vmatprep.subr.mxu0 0.0
      %433 = vmatpush1.msra.mxu0 0.0
      %434 = vmatprep.subr.mxu0 0.0
      %435 = vmatpush1.msra.mxu0 0.0
      %436 = vmatprep.mubr.f32.mxu0 0.0
      %437 = vmatmul.mubr.f32.gmra.mrb[0].mxu0 %v325
      %v438 = vpop.f32.mrb[0].mxu0
      %v439 = vadd.f32 %v321, %v438
      %v440 = vpop.f32.mrb[0].mxu0
      %441 = vmatprep.mubr.f32.mxu0 0.0
      %442 = vmatmul.mubr.f32.gmra.mrb[0].mxu0 %v328
      %v443 = vpop.f32.mrb[0].mxu0
      %v444 = vadd.f32 %v321, %v443
      %v445 = vpop.f32.mrb[0].mxu0
      %446 = vmatprep.mubr.f32.mxu0 0.0
      %447 = vmatmul.mubr.f32.gmra.mrb[0].mxu0 %v331
      %v448 = vpop.f32.mrb[0].mxu0
      %v449 = vadd.f32 %v321, %v448
      %v450 = vpop.f32.mrb[0].mxu0
      %451 = vmatprep.mubr.f32.mxu0 0.0
      %452 = vmatmul.mubr.f32.gmra.mrb[0].mxu0 %v334
      %v453 = vpop.f32.mrb[0].mxu0
      %v454 = vadd.f32 %v321, %v453
      %v455 = vpop.f32.mrb[0].mxu0
      %456 = vmatprep.mubr.f32.mxu0 0.0
      %457 = vmatmul.mubr.f32.gmra.mrb[0].mxu0 %v337
      %v458 = vpop.f32.mrb[0].mxu0
      %v459 = vadd.f32 %v321, %v458
      %v460 = vpop.f32.mrb[0].mxu0
      %461 = vmatprep.mubr.f32.mxu0 0.0
      %462 = vmatmul.mubr.f32.gmra.mrb[0].mxu0 %v340
      %v463 = vpop.f32.mrb[0].mxu0
      %v464 = vadd.f32 %v321, %v463
      %v465 = vpop.f32.mrb[0].mxu0
      %466 = vmatprep.mubr.f32.mxu0 0.0
      %467 = vmatmul.mubr.f32.gmra.mrb[0].mxu0 %v343
      %v468 = vpop.f32.mrb[0].mxu0
      %v469 = vadd.f32 %v321, %v468
      %v470 = vpop.f32.mrb[0].mxu0
      %471 = vmatprep.mubr.f32.mxu0 0.0
      %472 = vmatmul.mubr.f32.gmra.mrb[0].mxu0 %v346
      %v473 = vpop.f32.mrb[0].mxu0
      %v474 = vadd.f32 %v321, %v473
      %v475 = vpop.f32.mrb[0].mxu0
      %476 = vmatprep.mubr.f32.mxu0 0.0
      %477 = vmatmul.mubr.f32.gmra.mrb[0].mxu0 %v349
      %v478 = vpop.f32.mrb[0].mxu0
      %v479 = vadd.f32 %v321, %v478
      %v480 = vpop.f32.mrb[0].mxu0
      %481 = vmatprep.mubr.f32.mxu0 0.0
      %482 = vmatmul.mubr.f32.gmra.mrb[0].mxu0 %v352
      %v483 = vpop.f32.mrb[0].mxu0
      %v484 = vadd.f32 %v321, %v483
      %v485 = vpop.f32.mrb[0].mxu0
      %486 = vmatprep.mubr.f32.mxu0 0.0
      %487 = vmatmul.mubr.f32.gmra.mrb[0].mxu0 %v355
      %v488 = vpop.f32.mrb[0].mxu0
      %v489 = vadd.f32 %v321, %v488
      %v490 = vpop.f32.mrb[0].mxu0
      %491 = vmatprep.mubr.f32.mxu0 0.0
      %492 = vmatmul.mubr.f32.gmra.mrb[0].mxu0 %v358
      %v493 = vpop.f32.mrb[0].mxu0
      %v494 = vadd.f32 %v321, %v493
      %v495 = vpop.f32.mrb[0].mxu0
      %496 = vmatprep.mubr.f32.mxu0 0.0
      %497 = vmatmul.mubr.f32.gmra.mrb[0].mxu0 %v361
      %v498 = vpop.f32.mrb[0].mxu0
      %v499 = vadd.f32 %v321, %v498
      %v500 = vpop.f32.mrb[0].mxu0
      %501 = vmatprep.mubr.f32.mxu0 0.0
      %502 = vmatmul.mubr.f32.gmra.mrb[0].mxu0 %v364
      %v503 = vpop.f32.mrb[0].mxu0
      %v504 = vadd.f32 %v321, %v503
      %v505 = vpop.f32.mrb[0].mxu0
      %506 = vmatprep.mubr.f32.mxu0 0.0
      %507 = vmatmul.mubr.f32.gmra.mrb[0].mxu0 %v367
      %v508 = vpop.f32.mrb[0].mxu0
      %v509 = vadd.f32 %v321, %v508
      %v510 = vpop.f32.mrb[0].mxu0
      %511 = vmatprep.mubr.f32.mxu0 0.0
      %512 = vmatmul.mubr.f32.gmra.mrb[0].mxu0 %v370
      %v513 = vpop.f32.mrb[0].mxu0
      %v514 = vadd.f32 %v321, %v513
      %v515 = vpop.f32.mrb[0].mxu0
      %516 = vdwg.mxu0
      %v517 = vmax.f32 %v439, 0.0
      %v518 = vmax.f32 %v444, 0.0
      %v519 = vmax.f32 %v449, 0.0
      %v520 = vmax.f32 %v454, 0.0
      %v521 = vmax.f32 %v459, 0.0
      %v522 = vmax.f32 %v464, 0.0
      %v523 = vmax.f32 %v469, 0.0
      %v524 = vmax.f32 %v474, 0.0
      %v525 = vmax.f32 %v479, 0.0
      %v526 = vmax.f32 %v484, 0.0
      %v527 = vmax.f32 %v489, 0.0
      %v528 = vmax.f32 %v494, 0.0
      %v529 = vmax.f32 %v499, 0.0
      %v530 = vmax.f32 %v504, 0.0
      %v531 = vmax.f32 %v509, 0.0
      %v532 = vmax.f32 %v514, 0.0
      %v533 = vld [vmem:[%s4] sm:$0xff]
      %v534 = vld [vmem:[%s4 + $0x8] sm:$0xff]
      %v535 = vld [vmem:[%s4 + $0x10] sm:$0xff]
      %v536 = vld [vmem:[%s4 + $0x18] sm:$0xff]
      %v537 = vld [vmem:[%s5] sm:$0x1]
      %v539 = vlaneseq
      %v540 = vshrl.u32 %v539, 7
      %v541 = vsub.s32 0, %v540
      %v542 = vrot.slane %v537, %v541
      %vm544 = vcmask 261120
      %v546 = vsel %vm544, %v517, 0
      %v549 = vsel %vm544, %v518, 0
      %v552 = vsel %vm544, %v519, 0
      %v555 = vsel %vm544, %v520, 0
      %v558 = vsel %vm544, %v521, 0
      %v561 = vsel %vm544, %v522, 0
      %v564 = vsel %vm544, %v523, 0
      %v567 = vsel %vm544, %v524, 0
      %v570 = vsel %vm544, %v525, 0
      %v573 = vsel %vm544, %v526, 0
      %v576 = vsel %vm544, %v527, 0
      %v579 = vsel %vm544, %v528, 0
      %v582 = vsel %vm544, %v529, 0
      %v585 = vsel %vm544, %v530, 0
      %v588 = vsel %vm544, %v531, 0
      %v591 = vsel %vm544, %v532, 0
      %593 = vmatprep.subr.mxu0 0.0
      %594 = vmatpush1.msra.mxu0 %v533
      %595 = vmatprep.subr.mxu0 0.0
      %596 = vmatpush1.msra.mxu0 %v534
      %597 = vmatprep.subr.mxu0 0.0
      %598 = vmatpush1.msra.mxu0 %v535
      %599 = vmatprep.subr.mxu0 0.0
      %600 = vmatpush1.msra.mxu0 %v536
      %601 = vmatprep.subr.mxu0 0.0
      %602 = vmatpush1.msra.mxu0 0.0
      %603 = vmatprep.subr.mxu0 0.0
      %604 = vmatpush1.msra.mxu0 0.0
      %605 = vmatprep.subr.mxu0 0.0
      %606 = vmatpush1.msra.mxu0 0.0
      %607 = vmatprep.subr.mxu0 0.0
      %608 = vmatpush1.msra.mxu0 0.0
      %609 = vmatprep.subr.mxu0 0.0
      %610 = vmatpush1.msra.mxu0 0.0
      %611 = vmatprep.subr.mxu0 0.0
      %612 = vmatpush1.msra.mxu0 0.0
      %613 = vmatprep.subr.mxu0 0.0
      %614 = vmatpush1.msra.mxu0 0.0
      %615 = vmatprep.subr.mxu0 0.0
      %616 = vmatpush1.msra.mxu0 0.0
      %617 = vmatprep.subr.mxu0 0.0
      %618 = vmatpush1.msra.mxu0 0.0
      %619 = vmatprep.subr.mxu0 0.0
      %620 = vmatpush1.msra.mxu0 0.0
      %621 = vmatprep.subr.mxu0 0.0
      %622 = vmatpush1.msra.mxu0 0.0
      %623 = vmatprep.subr.mxu0 0.0
      %624 = vmatpush1.msra.mxu0 0.0
      %625 = vmatprep.subr.mxu0 0.0
      %626 = vmatpush1.msra.mxu0 0.0
      %627 = vmatprep.subr.mxu0 0.0
      %628 = vmatpush1.msra.mxu0 0.0
      %629 = vmatprep.subr.mxu0 0.0
      %630 = vmatpush1.msra.mxu0 0.0
      %631 = vmatprep.subr.mxu0 0.0
      %632 = vmatpush1.msra.mxu0 0.0
      %633 = vmatprep.subr.mxu0 0.0
      %634 = vmatpush1.msra.mxu0 0.0
      %635 = vmatprep.subr.mxu0 0.0
      %636 = vmatpush1.msra.mxu0 0.0
      %637 = vmatprep.subr.mxu0 0.0
      %638 = vmatpush1.msra.mxu0 0.0
      %639 = vmatprep.subr.mxu0 0.0
      %640 = vmatpush1.msra.mxu0 0.0
      %641 = vmatprep.subr.mxu0 0.0
      %642 = vmatpush1.msra.mxu0 0.0
      %643 = vmatprep.subr.mxu0 0.0
      %644 = vmatpush1.msra.mxu0 0.0
      %645 = vmatprep.subr.mxu0 0.0
      %646 = vmatpush1.msra.mxu0 0.0
      %647 = vmatprep.subr.mxu0 0.0
      %648 = vmatpush1.msra.mxu0 0.0
      %649 = vmatprep.subr.mxu0 0.0
      %650 = vmatpush1.msra.mxu0 0.0
      %651 = vmatprep.subr.mxu0 0.0
      %652 = vmatpush1.msra.mxu0 0.0
      %653 = vmatprep.subr.mxu0 0.0
      %654 = vmatpush1.msra.mxu0 0.0
      %655 = vmatprep.subr.mxu0 0.0
      %656 = vmatpush1.msra.mxu0 0.0
      %657 = vmatprep.mubr.f32.mxu0 0.0
      %658 = vmatmul.mubr.f32.gmra.mrb[0].mxu0 %v546
      %v659 = vpop.f32.mrb[0].mxu0
      %v660 = vadd.f32 %v542, %v659
      %v661 = vpop.f32.mrb[0].mxu0
      %662 = vmatprep.mubr.f32.mxu0 0.0
      %663 = vmatmul.mubr.f32.gmra.mrb[0].mxu0 %v549
      %v664 = vpop.f32.mrb[0].mxu0
      %v665 = vadd.f32 %v542, %v664
      %v666 = vpop.f32.mrb[0].mxu0
      %667 = vmatprep.mubr.f32.mxu0 0.0
      %668 = vmatmul.mubr.f32.gmra.mrb[0].mxu0 %v552
      %v669 = vpop.f32.mrb[0].mxu0
      %v670 = vadd.f32 %v542, %v669
      %v671 = vpop.f32.mrb[0].mxu0
      %672 = vmatprep.mubr.f32.mxu0 0.0
      %673 = vmatmul.mubr.f32.gmra.mrb[0].mxu0 %v555
      %v674 = vpop.f32.mrb[0].mxu0
      %v675 = vadd.f32 %v542, %v674
      %v676 = vpop.f32.mrb[0].mxu0
      %677 = vmatprep.mubr.f32.mxu0 0.0
      %678 = vmatmul.mubr.f32.gmra.mrb[0].mxu0 %v558
      %v679 = vpop.f32.mrb[0].mxu0
      %v680 = vadd.f32 %v542, %v679
      %v681 = vpop.f32.mrb[0].mxu0
      %682 = vmatprep.mubr.f32.mxu0 0.0
      %683 = vmatmul.mubr.f32.gmra.mrb[0].mxu0 %v561
      %v684 = vpop.f32.mrb[0].mxu0
      %v685 = vadd.f32 %v542, %v684
      %v686 = vpop.f32.mrb[0].mxu0
      %687 = vmatprep.mubr.f32.mxu0 0.0
      %688 = vmatmul.mubr.f32.gmra.mrb[0].mxu0 %v564
      %v689 = vpop.f32.mrb[0].mxu0
      %v690 = vadd.f32 %v542, %v689
      %v691 = vpop.f32.mrb[0].mxu0
      %692 = vmatprep.mubr.f32.mxu0 0.0
      %693 = vmatmul.mubr.f32.gmra.mrb[0].mxu0 %v567
      %v694 = vpop.f32.mrb[0].mxu0
      %v695 = vadd.f32 %v542, %v694
      %v696 = vpop.f32.mrb[0].mxu0
      %697 = vmatprep.mubr.f32.mxu0 0.0
      %698 = vmatmul.mubr.f32.gmra.mrb[0].mxu0 %v570
      %v699 = vpop.f32.mrb[0].mxu0
      %v700 = vadd.f32 %v542, %v699
      %v701 = vpop.f32.mrb[0].mxu0
      %702 = vmatprep.mubr.f32.mxu0 0.0
      %703 = vmatmul.mubr.f32.gmra.mrb[0].mxu0 %v573
      %v704 = vpop.f32.mrb[0].mxu0
      %v705 = vadd.f32 %v542, %v704
      %v706 = vpop.f32.mrb[0].mxu0
      %707 = vmatprep.mubr.f32.mxu0 0.0
      %708 = vmatmul.mubr.f32.gmra.mrb[0].mxu0 %v576
      %v709 = vpop.f32.mrb[0].mxu0
      %v710 = vadd.f32 %v542, %v709
      %v711 = vpop.f32.mrb[0].mxu0
      %712 = vmatprep.mubr.f32.mxu0 0.0
      %713 = vmatmul.mubr.f32.gmra.mrb[0].mxu0 %v579
      %v714 = vpop.f32.mrb[0].mxu0
      %v715 = vadd.f32 %v542, %v714
      %v716 = vpop.f32.mrb[0].mxu0
      %717 = vmatprep.mubr.f32.mxu0 0.0
      %718 = vmatmul.mubr.f32.gmra.mrb[0].mxu0 %v582
      %v719 = vpop.f32.mrb[0].mxu0
      %v720 = vadd.f32 %v542, %v719
      %v721 = vpop.f32.mrb[0].mxu0
      %722 = vmatprep.mubr.f32.mxu0 0.0
      %723 = vmatmul.mubr.f32.gmra.mrb[0].mxu0 %v585
      %v724 = vpop.f32.mrb[0].mxu0
      %v725 = vadd.f32 %v542, %v724
      %v726 = vpop.f32.mrb[0].mxu0
      %727 = vmatprep.mubr.f32.mxu0 0.0
      %728 = vmatmul.mubr.f32.gmra.mrb[0].mxu0 %v588
      %v729 = vpop.f32.mrb[0].mxu0
      %v730 = vadd.f32 %v542, %v729
      %v731 = vpop.f32.mrb[0].mxu0
      %732 = vmatprep.mubr.f32.mxu0 0.0
      %733 = vmatmul.mubr.f32.gmra.mrb[0].mxu0 %v591
      %v734 = vpop.f32.mrb[0].mxu0
      %v735 = vadd.f32 %v542, %v734
      %v736 = vpop.f32.mrb[0].mxu0
      %737 = vdwg.mxu0
      %vm738 = vcmask 31744
      %739 = vst.msk [vmem:[%s290] sm:$0xff] %vm738, %v660
      %740 = vst.msk [vmem:[%s290 + $0x8] sm:$0xff] %vm738, %v665
      %741 = vst.msk [vmem:[%s290 + $0x10] sm:$0xff] %vm738, %v670
      %742 = vst.msk [vmem:[%s290 + $0x18] sm:$0xff] %vm738, %v675
      %743 = vst.msk [vmem:[%s290 + $0x20] sm:$0xff] %vm738, %v680
      %744 = vst.msk [vmem:[%s290 + $0x28] sm:$0xff] %vm738, %v685
      %745 = vst.msk [vmem:[%s290 + $0x30] sm:$0xff] %vm738, %v690
      %746 = vst.msk [vmem:[%s290 + $0x38] sm:$0xff] %vm738, %v695
      %747 = vst.msk [vmem:[%s290 + $0x40] sm:$0xff] %vm738, %v700
      %748 = vst.msk [vmem:[%s290 + $0x48] sm:$0xff] %vm738, %v705
      %749 = vst.msk [vmem:[%s290 + $0x50] sm:$0xff] %vm738, %v710
      %750 = vst.msk [vmem:[%s290 + $0x58] sm:$0xff] %vm738, %v715
      %751 = vst.msk [vmem:[%s290 + $0x60] sm:$0xff] %vm738, %v720
      %752 = vst.msk [vmem:[%s290 + $0x68] sm:$0xff] %vm738, %v725
      %753 = vst.msk [vmem:[%s290 + $0x70] sm:$0xff] %vm738, %v730
      %754 = vst.msk [vmem:[%s290 + $0x78] sm:$0xff] %vm738, %v735
      %v755 = vld [vmem:[#allocation2] sm:$0x1]
      %v757 = vlaneseq
      %v758 = vshrl.u32 %v757, 7
      %v759 = vsub.s32 0, %v758
      %v760 = vrot.slane %v755, %v759
      %761 = vset.pattern.permute.xlu0 0
      %762 = vperm.xlu0 %761, %v760
      %v763 = vpop.permute.xlu0 %762
      %v765 = vmul.f32 %v660, %v763
      %v766 = vmul.f32 %v665, %v763
      %v767 = vmul.f32 %v670, %v763
      %v768 = vmul.f32 %v675, %v763
      %v769 = vmul.f32 %v680, %v763
      %v770 = vmul.f32 %v685, %v763
      %v771 = vmul.f32 %v690, %v763
      %v772 = vmul.f32 %v695, %v763
      %v773 = vmul.f32 %v700, %v763
      %v774 = vmul.f32 %v705, %v763
      %v775 = vmul.f32 %v710, %v763
      %v776 = vmul.f32 %v715, %v763
      %v777 = vmul.f32 %v720, %v763
      %v778 = vmul.f32 %v725, %v763
      %v779 = vmul.f32 %v730, %v763
      %v780 = vmul.f32 %v735, %v763
      %781 = vst.msk [vmem:[%s296] sm:$0xff] %vm738, %v765
      %782 = vst.msk [vmem:[%s296 + $0x8] sm:$0xff] %vm738, %v766
      %783 = vst.msk [vmem:[%s296 + $0x10] sm:$0xff] %vm738, %v767
      %784 = vst.msk [vmem:[%s296 + $0x18] sm:$0xff] %vm738, %v768
      %785 = vst.msk [vmem:[%s296 + $0x20] sm:$0xff] %vm738, %v769
      %786 = vst.msk [vmem:[%s296 + $0x28] sm:$0xff] %vm738, %v770
      %787 = vst.msk [vmem:[%s296 + $0x30] sm:$0xff] %vm738, %v771
      %788 = vst.msk [vmem:[%s296 + $0x38] sm:$0xff] %vm738, %v772
      %789 = vst.msk [vmem:[%s296 + $0x40] sm:$0xff] %vm738, %v773
      %790 = vst.msk [vmem:[%s296 + $0x48] sm:$0xff] %vm738, %v774
      %791 = vst.msk [vmem:[%s296 + $0x50] sm:$0xff] %vm738, %v775
      %792 = vst.msk [vmem:[%s296 + $0x58] sm:$0xff] %vm738, %v776
      %793 = vst.msk [vmem:[%s296 + $0x60] sm:$0xff] %vm738, %v777
      %794 = vst.msk [vmem:[%s296 + $0x68] sm:$0xff] %vm738, %v778
      %795 = vst.msk [vmem:[%s296 + $0x70] sm:$0xff] %vm738, %v779
      %796 = vst.msk [vmem:[%s296 + $0x78] sm:$0xff] %vm738, %v780
      %s797 = smul.u32 16, %s21
      %p798 = scmp.lt.s32.totalorder %s797, 31
      %s799 = scalar_select %p798, %s797, 31
      %s800 = smul.addr %s799, 8
      %s801 = scalar_lea.vmem %s6, %s800
      %s802 = smul.u32 16, %s21
      %p803 = scmp.lt.s32.totalorder %s802, 31
      %s804 = scalar_select %p803, %s802, 31
      %s805 = smul.addr %s804, 8
      %s806 = scalar_lea.vmem %s7, %s805
      // Predicated region
      $region45: #{gprgnn_forward.9} parent=43 // pred_check
        %p807 = pneg %p170
      $region46: #{gprgnn_forward.9} parent=43 // pred_check_branch
        %809 = sbr.rel (%p807) target = $region48
      $region47: #{gprgnn_forward.9} parent=43 // pred_region
        %s810 = smul.u32 16, %s21
      $region48: #{gprgnn_forward.9} parent=43 // pred_fallthru
        _
      // Predicated region
      $region49: #{gprgnn_forward.9} parent=43 // pred_check
        %p811 = pneg %p196
      $region50: #{gprgnn_forward.9} parent=43 // pred_check_branch
        %813 = sbr.rel (%p811) target = $region52
      $region51: #{gprgnn_forward.9} parent=43 // pred_region
        %s814 = smul.u32 16, %s21
      $region52: #{gprgnn_forward.9} parent=43 // pred_fallthru
        _
    $region44: #{gprgnn_forward.9} parent=5 // pred_fallthru
      _
    %p815 = scmp.le.s32.totalorder 2, %s16
    // Predicated region
    $region53: #{gprgnn_forward.9} parent=5 // pred_check
      %p816 = pneg %p815
    $region54: #{gprgnn_forward.9} parent=5 // pred_check_branch
      %818 = sbr.rel (%p816) target = $region56
    $region55: #{gprgnn_forward.9} parent=5 // pred_region
      %s819 = ssub.s32 %s16, 2
      // Predicated region
      $region57: #{gprgnn_forward.9} parent=55 // pred_check
        %p820 = pneg %p176
      $region58: #{gprgnn_forward.9} parent=55 // pred_check_branch
        %822 = sbr.rel (%p820) target = $region60
      $region59: #{gprgnn_forward.9} parent=55 // pred_region
        %s823 = smul.u32 16, %s22
        %p824 = scmp.lt.s32.totalorder %s823, 31
        %s825 = scalar_select %p824, %s823, 31
        %s826 = smul.addr %s825, 8
        %s827 = scalar_lea.vmem %s6, %s826
      $region60: #{gprgnn_forward.9} parent=55 // pred_fallthru
        _
      // Predicated region
      $region61: #{gprgnn_forward.9} parent=55 // pred_check
        %p828 = pneg %p202
      $region62: #{gprgnn_forward.9} parent=55 // pred_check_branch
        %830 = sbr.rel (%p828) target = $region64
      $region63: #{gprgnn_forward.9} parent=55 // pred_region
        %s831 = smul.u32 16, %s22
        %p832 = scmp.lt.s32.totalorder %s831, 31
        %s833 = scalar_select %p832, %s831, 31
        %s834 = smul.addr %s833, 8
        %s835 = scalar_lea.vmem %s7, %s834
      $region64: #{gprgnn_forward.9} parent=55 // pred_fallthru
        _
    $region56: #{gprgnn_forward.9} parent=5 // pred_fallthru
      _
  $region6: #{gprgnn_forward.9} parent=0 // loop_footer
    %s20 = sadd.s32 1, %s16
  $region7: #{gprgnn_forward.9} parent=0 // loop_footer_branch
    %15 = sbr.rel target = $region3
  $region8: #{gprgnn_forward.9} parent=0 // loop_exit
    _

// kernel: gprgnn_forward.10
$region0: #{gprgnn_forward.10}
  #allocation0 [shape = 'u32[]', space=smem, size = 0x4, offset = 0x4, fixed_abs, tag = 'smem constant byte address 0x4 - core index']
  #allocation1 [shape = 'u32[144,128]{1,0:T(1,128)}', space=vmem, size = 0x12000, scoped, tag = 'internal scratch']
  #allocation2 [shape = 'f32[128,4]{1,0:T(8,128)}', space=vmem, size = 0x10000, scoped, tag = 'scratch operand']
  #allocation3 [shape = 'f32[1,1]{1,0:T(1,128)S(1)}', space=vmem, size = 0x200, scoped, tag = 'scoped memory for gprgnn_forward.10']
  %s0 = inlined_call_operand.<no memory space> [shape: f32[1,1], index: 0, kind: input, shape index: {}]
  %s1 = inlined_call_operand.vmem [shape: f32[256,1], index: 1, kind: input, shape index: {}, may-alias: {1,2}]
  %s2 = inlined_call_operand.vmem [shape: f32[256,1], index: 2, kind: input, shape index: {}, may-alias: {1,2}]
  %s3 = inlined_call_operand.vmem [shape: s8[256,256], index: 3, kind: input, shape index: {}]
  %s4 = inlined_call_operand.vmem [shape: f32[256,4], index: 4, kind: input, shape index: {}]
  %s5 = inlined_call_operand.vmem [shape: f32[256,4], index: 5, kind: input, shape index: {}]
  %s6 = inlined_call_operand.vmem [shape: f32[256,4], index: 6, kind: output, shape index: {0}]
  %s7 = inlined_call_operand.vmem [shape: f32[256,4], index: 7, kind: output, shape index: {1}]
  %8 = xla_tuple %s6, %s7
  %s9 = sld [smem:[#allocation0]]
  $region111: #{gprgnn_forward.10} parent=0
    _
  %s11 = ssub.s32 1, %s9
  %s12 = scalar_select 0, %s11, %s9
  %v13 = vstv %s0
  %14 = vst [vmem:[#allocation3] sm:$0x1] %v13
  $region1: #{gprgnn_forward.10} parent=0
    #allocation4 [shape = 'u8[32768]{0}', space=vmem, size = 0x8000, scoped, tag = 'input window, operand 3']
    loop: start=0, step=1, limit=6
    $region2: #{gprgnn_forward.10} parent=1 // loop_pre_header
      _
    $region3: #{gprgnn_forward.10} parent=1 // loop_header
      %s16 = sphi 0, %s20
      %p17 = scmp.ge.s32.totalorder %s16, 6
      %s23 = sphi 0, %s35
      %s24 = sphi 0, %s31
      %s25 = sphi 0, %s23
      %s26 = sphi 0, %s24
      %s27 = sphi 0, %s25
      %s28 = sphi 0, %s26
      %s36 = sphi 0, %s36
      %s38 = sphi 0, %s36
      %s39 = sphi 0, %s38
      %s53 = sphi 0, %s39
      %s59 = sphi 0, %s61
      %s62 = sphi 0, %s59
      %s63 = sphi 0, %s62
      %s79 = sphi 0, %s63
      %s85 = sphi 0, %s87
      %s88 = sphi 0, %s85
      %s89 = sphi 0, %s88
      %s105 = sphi 0, %s89
      %s113 = sphi 0, %s115
      %s116 = sphi 0, %s113
      %s117 = sphi 0, %s116
      %s133 = sphi 0, %s117
      %s139 = sphi 0, %s141
      %s142 = sphi 0, %s139
      %s143 = sphi 0, %s142
      %s159 = sphi 0, %s143
      %s165 = sphi 0, %s167
      %s168 = sphi 0, %s165
      %s169 = sphi 0, %s168
      %s185 = sphi 0, %s169
      %s191 = sphi 0, %s193
      %s194 = sphi 0, %s191
      %s195 = sphi 0, %s194
      %s211 = sphi 0, %s195
      %s217 = sphi 0, %s219
      %s220 = sphi 0, %s217
      %s221 = sphi 0, %s220
      %s237 = sphi 0, %s221
    $region4: #{gprgnn_forward.10} parent=1 // loop_header_branch
      %19 = sbr.rel (%p17) target = $region8
    $region5: #{gprgnn_forward.10} parent=1 // loop_body
      %s21 = ssub.s32 %s16, 1
      %s22 = ssub.s32 %s16, 2
      %s29 = sadd.s32 1, %s24
      %p30 = scmp.ge.s32.totalorder %s29, 2
      %s31 = scalar_select %p30, 0, %s29
      %s32 = sadd.s32 1, %s23
      %s33 = scalar_select %p30, %s32, %s23
      %p34 = scmp.ge.s32.totalorder %s33, 2
      %s35 = scalar_select %p34, 0, %s33
      %s37 = sadd.s32 %s36, 1
      %p40 = scmp.eq.s32.totalorder %s16, 3
      %p41 = scmp.ne.s32.totalorder %s36, %s38
      %p42 = scmp.eq.s32.totalorder %s16, 0
      %p43 = por %p41, %p42
      %p44 = scmp.ne.s32.totalorder %s36, %s38
      %p45 = scmp.eq.s32.totalorder %s21, 3
      %p46 = por %p44, %p45
      %p47 = scmp.ne.s32.totalorder %s38, %s39
      %p48 = scmp.eq.s32.totalorder %s21, 0
      %p49 = por %p47, %p48
      %p50 = scmp.ne.s32.totalorder %s38, %s39
      %p51 = scmp.eq.s32.totalorder %s22, 3
      %p52 = por %p50, %p51
      %p54 = scmp.ne.s32.totalorder %s39, %s53
      %p55 = scmp.eq.s32.totalorder %s22, 0
      %p56 = por %p54, %p55
      %s57 = ssub.s32 %s23, %s35
      %p58 = scmp.eq.s32.totalorder %s57, 0
      %s60 = sadd.s32 %s59, 1
      %s61 = scalar_select %p58, %s59, %s60
      %p64 = pneg %p58
      %p65 = scmp.eq.s32.totalorder %s16, 3
      %p66 = por %p64, %p65
      %p67 = scmp.ne.s32.totalorder %s59, %s62
      %p68 = scmp.eq.s32.totalorder %s16, 0
      %p69 = por %p67, %p68
      %p70 = scmp.ne.s32.totalorder %s59, %s62
      %p71 = scmp.eq.s32.totalorder %s21, 3
      %p72 = por %p70, %p71
      %p73 = scmp.ne.s32.totalorder %s62, %s63
      %p74 = scmp.eq.s32.totalorder %s21, 0
      %p75 = por %p73, %p74
      %p76 = scmp.ne.s32.totalorder %s62, %s63
      %p77 = scmp.eq.s32.totalorder %s22, 3
      %p78 = por %p76, %p77
      %p80 = scmp.ne.s32.totalorder %s63, %s79
      %p81 = scmp.eq.s32.totalorder %s22, 0
      %p82 = por %p80, %p81
      %s83 = ssub.s32 %s24, %s31
      %p84 = scmp.eq.s32.totalorder %s83, 0
      %s86 = sadd.s32 %s85, 1
      %s87 = scalar_select %p84, %s85, %s86
      %p90 = pneg %p84
      %p91 = scmp.eq.s32.totalorder %s16, 3
      %p92 = por %p90, %p91
      %p93 = scmp.ne.s32.totalorder %s85, %s88
      %p94 = scmp.eq.s32.totalorder %s16, 0
      %p95 = por %p93, %p94
      %p96 = scmp.ne.s32.totalorder %s85, %s88
      %p97 = scmp.eq.s32.totalorder %s21, 3
      %p98 = por %p96, %p97
      %p99 = scmp.ne.s32.totalorder %s88, %s89
      %p100 = scmp.eq.s32.totalorder %s21, 0
      %p101 = por %p99, %p100
      %p102 = scmp.ne.s32.totalorder %s88, %s89
      %p103 = scmp.eq.s32.totalorder %s22, 3
      %p104 = por %p102, %p103
      %p106 = scmp.ne.s32.totalorder %s89, %s105
      %p107 = scmp.eq.s32.totalorder %s22, 0
      %p108 = por %p106, %p107
      %s109 = ssub.s32 %s23, %s35
      %s110 = ssub.s32 %s24, %s31
      %s111 = sor.u32 %s109, %s110
      %p112 = scmp.eq.s32.totalorder %s111, 0
      %s114 = sadd.s32 %s113, 1
      %s115 = scalar_select %p112, %s113, %s114
      %p118 = pneg %p112
      %p119 = scmp.eq.s32.totalorder %s16, 3
      %p120 = por %p118, %p119
      %p121 = scmp.ne.s32.totalorder %s113, %s116
      %p122 = scmp.eq.s32.totalorder %s16, 0
      %p123 = por %p121, %p122
      %p124 = scmp.ne.s32.totalorder %s113, %s116
      %p125 = scmp.eq.s32.totalorder %s21, 3
      %p126 = por %p124, %p125
      %p127 = scmp.ne.s32.totalorder %s116, %s117
      %p128 = scmp.eq.s32.totalorder %s21, 0
      %p129 = por %p127, %p128
      %p130 = scmp.ne.s32.totalorder %s116, %s117
      %p131 = scmp.eq.s32.totalorder %s22, 3
      %p132 = por %p130, %p131
      %p134 = scmp.ne.s32.totalorder %s117, %s133
      %p135 = scmp.eq.s32.totalorder %s22, 0
      %p136 = por %p134, %p135
      %s137 = ssub.s32 %s24, %s31
      %p138 = scmp.eq.s32.totalorder %s137, 0
      %s140 = sadd.s32 %s139, 1
      %s141 = scalar_select %p138, %s139, %s140
      %p144 = pneg %p138
      %p145 = scmp.eq.s32.totalorder %s16, 3
      %p146 = por %p144, %p145
      %p147 = scmp.ne.s32.totalorder %s139, %s142
      %p148 = scmp.eq.s32.totalorder %s16, 0
      %p149 = por %p147, %p148
      %p150 = scmp.ne.s32.totalorder %s139, %s142
      %p151 = scmp.eq.s32.totalorder %s21, 3
      %p152 = por %p150, %p151
      %p153 = scmp.ne.s32.totalorder %s142, %s143
      %p154 = scmp.eq.s32.totalorder %s21, 0
      %p155 = por %p153, %p154
      %p156 = scmp.ne.s32.totalorder %s142, %s143
      %p157 = scmp.eq.s32.totalorder %s22, 3
      %p158 = por %p156, %p157
      %p160 = scmp.ne.s32.totalorder %s143, %s159
      %p161 = scmp.eq.s32.totalorder %s22, 0
      %p162 = por %p160, %p161
      %s163 = ssub.s32 %s23, %s35
      %p164 = scmp.eq.s32.totalorder %s163, 0
      %s166 = sadd.s32 %s165, 1
      %s167 = scalar_select %p164, %s165, %s166
      %p170 = pneg %p164
      %p171 = scmp.eq.s32.totalorder %s16, 3
      %p172 = por %p170, %p171
      %p173 = scmp.ne.s32.totalorder %s165, %s168
      %p174 = scmp.eq.s32.totalorder %s16, 0
      %p175 = por %p173, %p174
      %p176 = scmp.ne.s32.totalorder %s165, %s168
      %p177 = scmp.eq.s32.totalorder %s21, 3
      %p178 = por %p176, %p177
      %p179 = scmp.ne.s32.totalorder %s168, %s169
      %p180 = scmp.eq.s32.totalorder %s21, 0
      %p181 = por %p179, %p180
      %p182 = scmp.ne.s32.totalorder %s168, %s169
      %p183 = scmp.eq.s32.totalorder %s22, 3
      %p184 = por %p182, %p183
      %p186 = scmp.ne.s32.totalorder %s169, %s185
      %p187 = scmp.eq.s32.totalorder %s22, 0
      %p188 = por %p186, %p187
      %s189 = ssub.s32 %s23, %s35
      %p190 = scmp.eq.s32.totalorder %s189, 0
      %s192 = sadd.s32 %s191, 1
      %s193 = scalar_select %p190, %s191, %s192
      %p196 = pneg %p190
      %p197 = scmp.eq.s32.totalorder %s16, 3
      %p198 = por %p196, %p197
      %p199 = scmp.ne.s32.totalorder %s191, %s194
      %p200 = scmp.eq.s32.totalorder %s16, 0
      %p201 = por %p199, %p200
      %p202 = scmp.ne.s32.totalorder %s191, %s194
      %p203 = scmp.eq.s32.totalorder %s21, 3
      %p204 = por %p202, %p203
      %p205 = scmp.ne.s32.totalorder %s194, %s195
      %p206 = scmp.eq.s32.totalorder %s21, 0
      %p207 = por %p205, %p206
      %p208 = scmp.ne.s32.totalorder %s194, %s195
      %p209 = scmp.eq.s32.totalorder %s22, 3
      %p210 = por %p208, %p209
      %p212 = scmp.ne.s32.totalorder %s195, %s211
      %p213 = scmp.eq.s32.totalorder %s22, 0
      %p214 = por %p212, %p213
      %s215 = ssub.s32 %s23, %s35
      %p216 = scmp.eq.s32.totalorder %s215, 0
      %s218 = sadd.s32 %s217, 1
      %s219 = scalar_select %p216, %s217, %s218
      %p222 = pneg %p216
      %p223 = scmp.eq.s32.totalorder %s16, 3
      %p224 = por %p222, %p223
      %p225 = scmp.ne.s32.totalorder %s217, %s220
      %p226 = scmp.eq.s32.totalorder %s16, 0
      %p227 = por %p225, %p226
      %p228 = scmp.ne.s32.totalorder %s217, %s220
      %p229 = scmp.eq.s32.totalorder %s21, 3
      %p230 = por %p228, %p229
      %p231 = scmp.ne.s32.totalorder %s220, %s221
      %p232 = scmp.eq.s32.totalorder %s21, 0
      %p233 = por %p231, %p232
      %p234 = scmp.ne.s32.totalorder %s220, %s221
      %p235 = scmp.eq.s32.totalorder %s22, 3
      %p236 = por %p234, %p235
      %p238 = scmp.ne.s32.totalorder %s221, %s237
      %p239 = scmp.eq.s32.totalorder %s22, 0
      %p240 = por %p238, %p239
      %p241 = scmp.le.s32.totalorder 1, %s16
      %p242 = scmp.lt.s32.totalorder %s16, 5
      %p243 = pnand %p241, %p242
      %p244 = pneg %p243
      // Predicated region
      $region9: #{gprgnn_forward.10} parent=5 // pred_check
        _
      $region10: #{gprgnn_forward.10} parent=5 // pred_check_branch
        %246 = sbr.rel (%p243) target = $region12
      $region11: #{gprgnn_forward.10} parent=5 // pred_region
        %s247 = ssub.s32 %s16, 1
        // Predicated region
        $region13: #{gprgnn_forward.10} parent=11 // pred_check
          %p248 = pneg %p49
        $region14: #{gprgnn_forward.10} parent=11 // pred_check_branch
          %250 = sbr.rel (%p248) target = $region16
        $region15: #{gprgnn_forward.10} parent=11 // pred_region
          _
        $region16: #{gprgnn_forward.10} parent=11 // pred_fallthru
          _
      $region12: #{gprgnn_forward.10} parent=5 // pred_fallthru
        _
      %p251 = scmp.lt.s32.totalorder %s16, 4
      // Predicated region
      $region17: #{gprgnn_forward.10} parent=5 // pred_check
        %p252 = pneg %p251
      $region18: #{gprgnn_forward.10} parent=5 // pred_check_branch
        %254 = sbr.rel (%p252) target = $region20
      $region19: #{gprgnn_forward.10} parent=5 // pred_region
        // Predicated region
        $region21: #{gprgnn_forward.10} parent=19 // pred_check
          %p255 = pneg %p69
        $region22: #{gprgnn_forward.10} parent=19 // pred_check_branch
          %257 = sbr.rel (%p255) target = $region24
        $region23: #{gprgnn_forward.10} parent=19 // pred_region
          %s258 = smul.u32 16, %s23
          %p259 = scmp.lt.s32.totalorder %s258, 31
          %s260 = scalar_select %p259, %s258, 31
          %s261 = smul.addr %s260, 8
          %s262 = scalar_lea.vmem %s1, %s261
          %s263 = smul.u32 16, %s23
        $region24: #{gprgnn_forward.10} parent=19 // pred_fallthru
          _
        // Predicated region
        $region25: #{gprgnn_forward.10} parent=19 // pred_check
          %p264 = pneg %p95
        $region26: #{gprgnn_forward.10} parent=19 // pred_check_branch
          %266 = sbr.rel (%p264) target = $region28
        $region27: #{gprgnn_forward.10} parent=19 // pred_region
          %s267 = smul.u32 16, %s24
          %p268 = scmp.lt.s32.totalorder %s267, 31
          %s269 = scalar_select %p268, %s267, 31
          %s270 = smul.addr %s269, 8
          %s271 = scalar_lea.vmem %s2, %s270
          %s272 = smul.u32 16, %s24
        $region28: #{gprgnn_forward.10} parent=19 // pred_fallthru
          _
        // Predicated region
        $region29: #{gprgnn_forward.10} parent=19 // pred_check
          %p273 = pneg %p123
        $region30: #{gprgnn_forward.10} parent=19 // pred_check_branch
          %275 = sbr.rel (%p273) target = $region32
        $region31: #{gprgnn_forward.10} parent=19 // pred_region
          %s276 = sand.u32 %s113, 1
          %s277 = sand.u32 %s113, 1
          %s278 = smul.addr %s277, 32
          %s279 = scalar_lea.vmem [#allocation4], %s278
          %s280 = smul.u32 4, %s23
          %s281 = smul.addr %s280, 2
          %s282 = sadd.s32 %s24, %s281
          %s283 = smul.addr %s282, 8
          %s284 = scalar_lea.vmem %s3, %s283
          // Predicated region
          $region33: #{gprgnn_forward.10} parent=31 // pred_check
            _
          $region34: #{gprgnn_forward.10} parent=31 // pred_check_branch
            %286 = sbr.rel (0) target = $region36
          $region35: #{gprgnn_forward.10} parent=31 // pred_region
            // Predicated region
            $region37: #{gprgnn_forward.10} parent=35 // pred_check
              _
            $region38: #{gprgnn_forward.10} parent=35 // pred_check_branch
              %288 = sbr.rel (0) target = $region40
            $region39: #{gprgnn_forward.10} parent=35 // pred_region
              // Predicated region
              $region52: #{gprgnn_forward.10} parent=39 // pred_check
                _
              $region53: #{gprgnn_forward.10} parent=39 // pred_check_branch
                %309 = sbr.rel (0) target = $region55
              $region54: #{gprgnn_forward.10} parent=39 // pred_region
                loop: start=0, step=1, limit=1
                $region56: #{gprgnn_forward.10} parent=54 // loop_pre_header
                  _
                $region57: #{gprgnn_forward.10} parent=54 // loop_header
                  %s311 = sphi 0, %s315
                  %p312 = scmp.ge.s32.totalorder %s311, 1
                  %s316 = sphi %s284, %s284
                  %s317 = sphi %s279, %s279
                $region58: #{gprgnn_forward.10} parent=54 // loop_header_branch
                  %314 = sbr.rel (%p312) target = $region62
                $region59: #{gprgnn_forward.10} parent=54 // loop_body
                  %v318 = vld [vmem:[%s316] sm:$0xff]
                  %319 = vst [vmem:[%s317] sm:$0xff] %v318
                  %v320 = vld [vmem:[%s316 + $0x10] sm:$0xff]
                  %321 = vst [vmem:[%s317 + $0x8] sm:$0xff] %v320
                  %v322 = vld [vmem:[%s316 + $0x20] sm:$0xff]
                  %323 = vst [vmem:[%s317 + $0x10] sm:$0xff] %v322
                  %v324 = vld [vmem:[%s316 + $0x30] sm:$0xff]
                  %325 = vst [vmem:[%s317 + $0x18] sm:$0xff] %v324
                $region60: #{gprgnn_forward.10} parent=54 // loop_footer
                  %s315 = sadd.s32 1, %s311
                $region61: #{gprgnn_forward.10} parent=54 // loop_footer_branch
                  %310 = sbr.rel target = $region57
                $region62: #{gprgnn_forward.10} parent=54 // loop_exit
                  _
              $region55: #{gprgnn_forward.10} parent=39 // pred_fallthru
                _
              // Predicated region
              $region63: #{gprgnn_forward.10} parent=39 // pred_check
                _
              $region64: #{gprgnn_forward.10} parent=39 // pred_check_branch
                %327 = sbr.rel target = $region66
              $region65: #{gprgnn_forward.10} parent=39 // pred_region
                _
              $region66: #{gprgnn_forward.10} parent=39 // pred_fallthru
                _
            $region40: #{gprgnn_forward.10} parent=35 // pred_fallthru
              _
            // Predicated region
            $region41: #{gprgnn_forward.10} parent=35 // pred_check
              _
            $region42: #{gprgnn_forward.10} parent=35 // pred_check_branch
              %290 = sbr.rel target = $region44
            $region43: #{gprgnn_forward.10} parent=35 // pred_region
              loop: start=0, step=1, limit=1
              $region45: #{gprgnn_forward.10} parent=43 // loop_pre_header
                _
              $region46: #{gprgnn_forward.10} parent=43 // loop_header
                %s293 = sphi 0, %s297
                %p294 = scmp.ge.s32.totalorder %s293, 1
                %s298 = sphi %s284, %s284
                %s299 = sphi %s279, %s279
              $region47: #{gprgnn_forward.10} parent=43 // loop_header_branch
                %296 = sbr.rel (%p294) target = $region51
              $region48: #{gprgnn_forward.10} parent=43 // loop_body
                %v300 = vld [vmem:[%s298] sm:$0xff]
                %301 = vst [vmem:[%s299] sm:$0xff] %v300
                %v302 = vld [vmem:[%s298 + $0x10] sm:$0xff]
                %303 = vst [vmem:[%s299 + $0x8] sm:$0xff] %v302
                %v304 = vld [vmem:[%s298 + $0x20] sm:$0xff]
                %305 = vst [vmem:[%s299 + $0x10] sm:$0xff] %v304
                %v306 = vld [vmem:[%s298 + $0x30] sm:$0xff]
                %307 = vst [vmem:[%s299 + $0x18] sm:$0xff] %v306
              $region49: #{gprgnn_forward.10} parent=43 // loop_footer
                %s297 = sadd.s32 1, %s293
              $region50: #{gprgnn_forward.10} parent=43 // loop_footer_branch
                %292 = sbr.rel target = $region46
              $region51: #{gprgnn_forward.10} parent=43 // loop_exit
                _
            $region44: #{gprgnn_forward.10} parent=35 // pred_fallthru
              _
          $region36: #{gprgnn_forward.10} parent=31 // pred_fallthru
            _
          %328 = vnop
        $region32: #{gprgnn_forward.10} parent=19 // pred_fallthru
          _
        // Predicated region
        $region67: #{gprgnn_forward.10} parent=19 // pred_check
          %p329 = pneg %p149
        $region68: #{gprgnn_forward.10} parent=19 // pred_check_branch
          %331 = sbr.rel (%p329) target = $region70
        $region69: #{gprgnn_forward.10} parent=19 // pred_region
          %s332 = smul.u32 16, %s24
          %p333 = scmp.lt.s32.totalorder %s332, 31
          %s334 = scalar_select %p333, %s332, 31
          %s335 = smul.addr %s334, 8
          %s336 = scalar_lea.vmem %s4, %s335
          %s337 = smul.u32 16, %s24
        $region70: #{gprgnn_forward.10} parent=19 // pred_fallthru
          _
        // Predicated region
        $region71: #{gprgnn_forward.10} parent=19 // pred_check
          %p338 = pneg %p175
        $region72: #{gprgnn_forward.10} parent=19 // pred_check_branch
          %340 = sbr.rel (%p338) target = $region74
        $region73: #{gprgnn_forward.10} parent=19 // pred_region
          %s341 = smul.u32 16, %s23
          %p342 = scmp.lt.s32.totalorder %s341, 31
          %s343 = scalar_select %p342, %s341, 31
          %s344 = smul.addr %s343, 8
          %s345 = scalar_lea.vmem %s5, %s344
          %s346 = smul.u32 16, %s23
        $region74: #{gprgnn_forward.10} parent=19 // pred_fallthru
          _
      $region20: #{gprgnn_forward.10} parent=5 // pred_fallthru
        _
      %p347 = scmp.le.s32.totalorder 1, %s16
      %p348 = scmp.lt.s32.totalorder %s16, 5
      %p349 = pnand %p347, %p348
      %p350 = pneg %p349
      // Predicated region
      $region75: #{gprgnn_forward.10} parent=5 // pred_check
        _
      $region76: #{gprgnn_forward.10} parent=5 // pred_check_branch
        %352 = sbr.rel (%p349) target = $region78
      $region77: #{gprgnn_forward.10} parent=5 // pred_region
        %s353 = ssub.s32 %s16, 1
        %s354 = sand.u32 %s116, 1
        %s355 = sand.u32 %s116, 1
        %s356 = smul.addr %s355, 32
        %s357 = scalar_lea.vmem [#allocation4], %s356
        // Predicated region
        $region79: #{gprgnn_forward.10} parent=77 // pred_check
          %p358 = pneg %p129
        $region80: #{gprgnn_forward.10} parent=77 // pred_check_branch
          %360 = sbr.rel (%p358) target = $region82
        $region81: #{gprgnn_forward.10} parent=77 // pred_region
          _
        $region82: #{gprgnn_forward.10} parent=77 // pred_fallthru
          _
        %p361 = pneg %p49
        %p362 = pneg %p46
        %s363 = smul.u32 16, %s25
        %p364 = scmp.lt.s32.totalorder %s363, 31
        %s365 = scalar_select %p364, %s363, 31
        %s366 = smul.addr %s365, 8
        %s367 = scalar_lea.vmem %s1, %s366
        %p368 = pneg %p75
        %p369 = pneg %p72
        %s370 = smul.u32 16, %s26
        %p371 = scmp.lt.s32.totalorder %s370, 31
        %s372 = scalar_select %p371, %s370, 31
        %s373 = smul.addr %s372, 8
        %s374 = scalar_lea.vmem %s2, %s373
        %p375 = pneg %p101
        %p376 = pneg %p98
        %s377 = sand.u32 %s116, 1
        %s378 = sand.u32 %s116, 1
        %s379 = smul.addr %s378, 32
        %s380 = scalar_lea.vmem [#allocation4], %s379
        %p381 = pneg %p129
        %p382 = pneg %p126
        %s383 = smul.u32 16, %s26
        %p384 = scmp.lt.s32.totalorder %s383, 31
        %s385 = scalar_select %p384, %s383, 31
        %s386 = smul.addr %s385, 8
        %s387 = scalar_lea.vmem %s4, %s386
        %p388 = pneg %p155
        %p389 = pneg %p152
        %s390 = smul.u32 16, %s25
        %p391 = scmp.lt.s32.totalorder %s390, 31
        %s392 = scalar_select %p391, %s390, 31
        %s393 = smul.addr %s392, 8
        %s394 = scalar_lea.vmem %s5, %s393
        %p395 = pneg %p181
        %p396 = pneg %p178
        %p397 = pneg %p207
        %p398 = pneg %p204
        %s399 = smul.u32 16, %s25
        %p400 = scmp.lt.s32.totalorder %s399, 31
        %s401 = scalar_select %p400, %s399, 31
        %s402 = smul.addr %s401, 8
        %s403 = scalar_lea.vmem %s6, %s402
        %p404 = pneg %p233
        %p405 = pneg %p230
        %s406 = smul.u32 16, %s25
        %p407 = scmp.lt.s32.totalorder %s406, 31
        %s408 = scalar_select %p407, %s406, 31
        %s409 = smul.addr %s408, 8
        %s410 = scalar_lea.vmem %s7, %s409
        %s411 = smul.u32 16, %s25
        %p412 = scmp.lt.s32.totalorder %s411, 31
        %s413 = scalar_select %p412, %s411, 31
        %s414 = smul.addr %s413, 8
        %s415 = scalar_lea.vmem %s1, %s414
        %s416 = smul.u32 16, %s25
        %s417 = smul.u32 16, %s26
        %p418 = scmp.lt.s32.totalorder %s417, 31
        %s419 = scalar_select %p418, %s417, 31
        %s420 = smul.addr %s419, 8
        %s421 = scalar_lea.vmem %s2, %s420
        %s422 = smul.u32 16, %s26
        %s423 = smul.u32 4, %s25
        %s424 = smul.u32 16, %s26
        %p425 = scmp.lt.s32.totalorder %s424, 31
        %s426 = scalar_select %p425, %s424, 31
        %s427 = smul.addr %s426, 8
        %s428 = scalar_lea.vmem %s4, %s427
        %s429 = smul.u32 16, %s26
        %s430 = smul.u32 16, %s25
        %p431 = scmp.lt.s32.totalorder %s430, 31
        %s432 = scalar_select %p431, %s430, 31
        %s433 = smul.addr %s432, 8
        %s434 = scalar_lea.vmem %s5, %s433
        %s435 = smul.u32 16, %s25
        %s436 = smul.u32 16, %s25
        %p437 = scmp.lt.s32.totalorder %s436, 31
        %s438 = scalar_select %p437, %s436, 31
        %s439 = smul.addr %s438, 8
        %s440 = scalar_lea.vmem %s6, %s439
        %s441 = smul.u32 16, %s25
        %s442 = smul.u32 16, %s25
        %p443 = scmp.lt.s32.totalorder %s442, 31
        %s444 = scalar_select %p443, %s442, 31
        %s445 = smul.addr %s444, 8
        %s446 = scalar_lea.vmem %s7, %s445
        %s447 = smul.u32 16, %s25
        %p449 = scmp.eq.s32.totalorder %s26, 0
        // Predicated region
        $region83: #{gprgnn_forward.10} parent=77 // pred_check
          %p450 = pneg %p449
        $region84: #{gprgnn_forward.10} parent=77 // pred_check_branch
          %452 = sbr.rel (%p450) target = $region86
        $region85: #{gprgnn_forward.10} parent=77 // pred_region
          %vm453 = vcmask 31744
          %454 = vst.msk [vmem:[#allocation2] sm:$0xff] %vm453, 0.0
          %455 = vst.msk [vmem:[#allocation2 + $0x8] sm:$0xff] %vm453, 0.0
          %456 = vst.msk [vmem:[#allocation2 + $0x10] sm:$0xff] %vm453, 0.0
          %457 = vst.msk [vmem:[#allocation2 + $0x18] sm:$0xff] %vm453, 0.0
          %458 = vst.msk [vmem:[#allocation2 + $0x20] sm:$0xff] %vm453, 0.0
          %459 = vst.msk [vmem:[#allocation2 + $0x28] sm:$0xff] %vm453, 0.0
          %460 = vst.msk [vmem:[#allocation2 + $0x30] sm:$0xff] %vm453, 0.0
          %461 = vst.msk [vmem:[#allocation2 + $0x38] sm:$0xff] %vm453, 0.0
          %462 = vst.msk [vmem:[#allocation2 + $0x40] sm:$0xff] %vm453, 0.0
          %463 = vst.msk [vmem:[#allocation2 + $0x48] sm:$0xff] %vm453, 0.0
          %464 = vst.msk [vmem:[#allocation2 + $0x50] sm:$0xff] %vm453, 0.0
          %465 = vst.msk [vmem:[#allocation2 + $0x58] sm:$0xff] %vm453, 0.0
          %466 = vst.msk [vmem:[#allocation2 + $0x60] sm:$0xff] %vm453, 0.0
          %467 = vst.msk [vmem:[#allocation2 + $0x68] sm:$0xff] %vm453, 0.0
          %468 = vst.msk [vmem:[#allocation2 + $0x70] sm:$0xff] %vm453, 0.0
          %469 = vst.msk [vmem:[#allocation2 + $0x78] sm:$0xff] %vm453, 0.0
        $region86: #{gprgnn_forward.10} parent=77 // pred_fallthru
          _
        %v470 = vld [vmem:[%s357] sm:$0xff]
        %v471 = vld [vmem:[%s357 + $0x8] sm:$0xff]
        %v472 = vld [vmem:[%s357 + $0x10] sm:$0xff]
        %v473 = vld [vmem:[%s357 + $0x18] sm:$0xff]
        %v474 = vunpack.c.l.s8.bf16 %v470
        %v475 = vunpack.c.h.s8.bf16 %v470
        %v476 = vunpack.c.l.s8.bf16 %v471
        %v477 = vunpack.c.h.s8.bf16 %v471
        %v478 = vunpack.c.l.s8.bf16 %v472
        %v479 = vunpack.c.h.s8.bf16 %v472
        %v480 = vunpack.c.l.s8.bf16 %v473
        %v481 = vunpack.c.h.s8.bf16 %v473
        %v482 = vld [vmem:[%s428] sm:$0xff]
        %v483 = vld [vmem:[%s428 + $0x8] sm:$0xff]
        %v484 = vld [vmem:[%s428 + $0x10] sm:$0xff]
        %v485 = vld [vmem:[%s428 + $0x18] sm:$0xff]
        %v486 = vld [vmem:[%s428 + $0x20] sm:$0xff]
        %v487 = vld [vmem:[%s428 + $0x28] sm:$0xff]
        %v488 = vld [vmem:[%s428 + $0x30] sm:$0xff]
        %v489 = vld [vmem:[%s428 + $0x38] sm:$0xff]
        %v490 = vld [vmem:[%s428 + $0x40] sm:$0xff]
        %v491 = vld [vmem:[%s428 + $0x48] sm:$0xff]
        %v492 = vld [vmem:[%s428 + $0x50] sm:$0xff]
        %v493 = vld [vmem:[%s428 + $0x58] sm:$0xff]
        %v494 = vld [vmem:[%s428 + $0x60] sm:$0xff]
        %v495 = vld [vmem:[%s428 + $0x68] sm:$0xff]
        %v496 = vld [vmem:[%s428 + $0x70] sm:$0xff]
        %v497 = vld [vmem:[%s428 + $0x78] sm:$0xff]
        %v498 = vld [vmem:[%s421] sm:$0xff]
        %v499 = vld [vmem:[%s421 + $0x8] sm:$0xff]
        %v500 = vld [vmem:[%s421 + $0x10] sm:$0xff]
        %v501 = vld [vmem:[%s421 + $0x18] sm:$0xff]
        %v502 = vld [vmem:[%s421 + $0x20] sm:$0xff]
        %v503 = vld [vmem:[%s421 + $0x28] sm:$0xff]
        %v504 = vld [vmem:[%s421 + $0x30] sm:$0xff]
        %v505 = vld [vmem:[%s421 + $0x38] sm:$0xff]
        %v506 = vld [vmem:[%s421 + $0x40] sm:$0xff]
        %v507 = vld [vmem:[%s421 + $0x48] sm:$0xff]
        %v508 = vld [vmem:[%s421 + $0x50] sm:$0xff]
        %v509 = vld [vmem:[%s421 + $0x58] sm:$0xff]
        %v510 = vld [vmem:[%s421 + $0x60] sm:$0xff]
        %v511 = vld [vmem:[%s421 + $0x68] sm:$0xff]
        %v512 = vld [vmem:[%s421 + $0x70] sm:$0xff]
        %v513 = vld [vmem:[%s421 + $0x78] sm:$0xff]
        %515 = vset.pattern.permute.xlu0 0
        %516 = vperm.xlu0 %515, %v498
        %v517 = vpop.permute.xlu0 %516
        %520 = vset.pattern.permute.xlu0 0
        %521 = vperm.xlu0 %520, %v499
        %v522 = vpop.permute.xlu0 %521
        %525 = vset.pattern.permute.xlu0 0
        %526 = vperm.xlu0 %525, %v500
        %v527 = vpop.permute.xlu0 %526
        %530 = vset.pattern.permute.xlu0 0
        %531 = vperm.xlu0 %530, %v501
        %v532 = vpop.permute.xlu0 %531
        %535 = vset.pattern.permute.xlu0 0
        %536 = vperm.xlu0 %535, %v502
        %v537 = vpop.permute.xlu0 %536
        %540 = vset.pattern.permute.xlu0 0
        %541 = vperm.xlu0 %540, %v503
        %v542 = vpop.permute.xlu0 %541
        %545 = vset.pattern.permute.xlu0 0
        %546 = vperm.xlu0 %545, %v504
        %v547 = vpop.permute.xlu0 %546
        %550 = vset.pattern.permute.xlu0 0
        %551 = vperm.xlu0 %550, %v505
        %v552 = vpop.permute.xlu0 %551
        %555 = vset.pattern.permute.xlu0 0
        %556 = vperm.xlu0 %555, %v506
        %v557 = vpop.permute.xlu0 %556
        %560 = vset.pattern.permute.xlu0 0
        %561 = vperm.xlu0 %560, %v507
        %v562 = vpop.permute.xlu0 %561
        %565 = vset.pattern.permute.xlu0 0
        %566 = vperm.xlu0 %565, %v508
        %v567 = vpop.permute.xlu0 %566
        %570 = vset.pattern.permute.xlu0 0
        %571 = vperm.xlu0 %570, %v509
        %v572 = vpop.permute.xlu0 %571
        %575 = vset.pattern.permute.xlu0 0
        %576 = vperm.xlu0 %575, %v510
        %v577 = vpop.permute.xlu0 %576
        %580 = vset.pattern.permute.xlu0 0
        %581 = vperm.xlu0 %580, %v511
        %v582 = vpop.permute.xlu0 %581
        %585 = vset.pattern.permute.xlu0 0
        %586 = vperm.xlu0 %585, %v512
        %v587 = vpop.permute.xlu0 %586
        %590 = vset.pattern.permute.xlu0 0
        %591 = vperm.xlu0 %590, %v513
        %v592 = vpop.permute.xlu0 %591
        %v594 = vmul.f32 %v482, %v517
        %v595 = vmul.f32 %v483, %v522
        %v596 = vmul.f32 %v484, %v527
        %v597 = vmul.f32 %v485, %v532
        %v598 = vmul.f32 %v486, %v537
        %v599 = vmul.f32 %v487, %v542
        %v600 = vmul.f32 %v488, %v547
        %v601 = vmul.f32 %v489, %v552
        %v602 = vmul.f32 %v490, %v557
        %v603 = vmul.f32 %v491, %v562
        %v604 = vmul.f32 %v492, %v567
        %v605 = vmul.f32 %v493, %v572
        %v606 = vmul.f32 %v494, %v577
        %v607 = vmul.f32 %v495, %v582
        %v608 = vmul.f32 %v496, %v587
        %v609 = vmul.f32 %v497, %v592
        %v610 = vpack.c.bf16 %v595, %v594
        %v611 = vpack.c.bf16 %v597, %v596
        %v612 = vpack.c.bf16 %v599, %v598
        %v613 = vpack.c.bf16 %v601, %v600
        %v614 = vpack.c.bf16 %v603, %v602
        %v615 = vpack.c.bf16 %v605, %v604
        %v616 = vpack.c.bf16 %v607, %v606
        %v617 = vpack.c.bf16 %v609, %v608
        %v618 = vld [vmem:[#allocation2] sm:$0xff]
        %v619 = vld [vmem:[#allocation2 + $0x8] sm:$0xff]
        %v620 = vld [vmem:[#allocation2 + $0x10] sm:$0xff]
        %v621 = vld [vmem:[#allocation2 + $0x18] sm:$0xff]
        %v622 = vld [vmem:[#allocation2 + $0x20] sm:$0xff]
        %v623 = vld [vmem:[#allocation2 + $0x28] sm:$0xff]
        %v624 = vld [vmem:[#allocation2 + $0x30] sm:$0xff]
        %v625 = vld [vmem:[#allocation2 + $0x38] sm:$0xff]
        %v626 = vld [vmem:[#allocation2 + $0x40] sm:$0xff]
        %v627 = vld [vmem:[#allocation2 + $0x48] sm:$0xff]
        %v628 = vld [vmem:[#allocation2 + $0x50] sm:$0xff]
        %v629 = vld [vmem:[#allocation2 + $0x58] sm:$0xff]
        %v630 = vld [vmem:[#allocation2 + $0x60] sm:$0xff]
        %v631 = vld [vmem:[#allocation2 + $0x68] sm:$0xff]
        %v632 = vld [vmem:[#allocation2 + $0x70] sm:$0xff]
        %v633 = vld [vmem:[#allocation2 + $0x78] sm:$0xff]
        %634 = vmatprep.subr.bf16.mxu0 0
        %635 = vmatpush1.bf16.msra.mxu0 %v610
        %636 = vmatprep.subr.bf16.mxu0 0
        %637 = vmatpush1.bf16.msra.mxu0 %v611
        %638 = vmatprep.subr.bf16.mxu0 0
        %639 = vmatpush1.bf16.msra.mxu0 %v612
        %640 = vmatprep.subr.bf16.mxu0 0
        %641 = vmatpush1.bf16.msra.mxu0 %v613
        %642 = vmatprep.subr.bf16.mxu0 0
        %643 = vmatpush1.bf16.msra.mxu0 %v614
        %644 = vmatprep.subr.bf16.mxu0 0
        %645 = vmatpush1.bf16.msra.mxu0 %v615
        %646 = vmatprep.subr.bf16.mxu0 0
        %647 = vmatpush1.bf16.msra.mxu0 %v616
        %648 = vmatprep.subr.bf16.mxu0 0
        %649 = vmatpush1.bf16.msra.mxu0 %v617
        %650 = vmatprep.subr.bf16.mxu0 0
        %651 = vmatpush1.bf16.msra.mxu0 0
        %652 = vmatprep.subr.bf16.mxu0 0
        %653 = vmatpush1.bf16.msra.mxu0 0
        %654 = vmatprep.subr.bf16.mxu0 0
        %655 = vmatpush1.bf16.msra.mxu0 0
        %656 = vmatprep.subr.bf16.mxu0 0
        %657 = vmatpush1.bf16.msra.mxu0 0
        %658 = vmatprep.subr.bf16.mxu0 0
        %659 = vmatpush1.bf16.msra.mxu0 0
        %660 = vmatprep.subr.bf16.mxu0 0
        %661 = vmatpush1.bf16.msra.mxu0 0
        %662 = vmatprep.subr.bf16.mxu0 0
        %663 = vmatpush1.bf16.msra.mxu0 0
        %664 = vmatprep.subr.bf16.mxu0 0
        %665 = vmatpush1.bf16.msra.mxu0 0
        %666 = vmatprep.mubr.bf16.mxu0 0
        %667 = vmatmul.mubr.bf16.gmra.mrb[0].mxu0 %v474
        %v668 = vpop.f32.mrb[0].mxu0
        %v669 = vadd.f32 0.0, %v668
        %v670 = vpop.f32.mrb[0].mxu0
        %v671 = vpop.f32.mrb[0].mxu0
        %v672 = vadd.f32 0.0, %v671
        %v673 = vpop.f32.mrb[0].mxu0
        %674 = vmatprep.mubr.bf16.mxu0 0
        %675 = vmatmul.mubr.bf16.gmra.mrb[0].mxu0 %v475
        %v676 = vpop.f32.mrb[0].mxu0
        %v677 = vadd.f32 0.0, %v676
        %v678 = vpop.f32.mrb[0].mxu0
        %v679 = vpop.f32.mrb[0].mxu0
        %v680 = vadd.f32 0.0, %v679
        %v681 = vpop.f32.mrb[0].mxu0
        %682 = vmatprep.mubr.bf16.mxu0 0
        %683 = vmatmul.mubr.bf16.gmra.mrb[0].mxu0 %v476
        %v684 = vpop.f32.mrb[0].mxu0
        %v685 = vadd.f32 0.0, %v684
        %v686 = vpop.f32.mrb[0].mxu0
        %v687 = vpop.f32.mrb[0].mxu0
        %v688 = vadd.f32 0.0, %v687
        %v689 = vpop.f32.mrb[0].mxu0
        %690 = vmatprep.mubr.bf16.mxu0 0
        %691 = vmatmul.mubr.bf16.gmra.mrb[0].mxu0 %v477
        %v692 = vpop.f32.mrb[0].mxu0
        %v693 = vadd.f32 0.0, %v692
        %v694 = vpop.f32.mrb[0].mxu0
        %v695 = vpop.f32.mrb[0].mxu0
        %v696 = vadd.f32 0.0, %v695
        %v697 = vpop.f32.mrb[0].mxu0
        %698 = vmatprep.mubr.bf16.mxu0 0
        %699 = vmatmul.mubr.bf16.gmra.mrb[0].mxu0 %v478
        %v700 = vpop.f32.mrb[0].mxu0
        %v701 = vadd.f32 0.0, %v700
        %v702 = vpop.f32.mrb[0].mxu0
        %v703 = vpop.f32.mrb[0].mxu0
        %v704 = vadd.f32 0.0, %v703
        %v705 = vpop.f32.mrb[0].mxu0
        %706 = vmatprep.mubr.bf16.mxu0 0
        %707 = vmatmul.mubr.bf16.gmra.mrb[0].mxu0 %v479
        %v708 = vpop.f32.mrb[0].mxu0
        %v709 = vadd.f32 0.0, %v708
        %v710 = vpop.f32.mrb[0].mxu0
        %v711 = vpop.f32.mrb[0].mxu0
        %v712 = vadd.f32 0.0, %v711
        %v713 = vpop.f32.mrb[0].mxu0
        %714 = vmatprep.mubr.bf16.mxu0 0
        %715 = vmatmul.mubr.bf16.gmra.mrb[0].mxu0 %v480
        %v716 = vpop.f32.mrb[0].mxu0
        %v717 = vadd.f32 0.0, %v716
        %v718 = vpop.f32.mrb[0].mxu0
        %v719 = vpop.f32.mrb[0].mxu0
        %v720 = vadd.f32 0.0, %v719
        %v721 = vpop.f32.mrb[0].mxu0
        %722 = vmatprep.mubr.bf16.mxu0 0
        %723 = vmatmul.mubr.bf16.gmra.mrb[0].mxu0 %v481
        %v724 = vpop.f32.mrb[0].mxu0
        %v725 = vadd.f32 0.0, %v724
        %v726 = vpop.f32.mrb[0].mxu0
        %v727 = vpop.f32.mrb[0].mxu0
        %v728 = vadd.f32 0.0, %v727
        %v729 = vpop.f32.mrb[0].mxu0
        %730 = vdwg.mxu0
        %v731 = vadd.f32 %v618, %v669
        %v732 = vadd.f32 %v619, %v672
        %v733 = vadd.f32 %v620, %v677
        %v734 = vadd.f32 %v621, %v680
        %v735 = vadd.f32 %v622, %v685
        %v736 = vadd.f32 %v623, %v688
        %v737 = vadd.f32 %v624, %v693
        %v738 = vadd.f32 %v625, %v696
        %v739 = vadd.f32 %v626, %v701
        %v740 = vadd.f32 %v627, %v704
        %v741 = vadd.f32 %v628, %v709
        %v742 = vadd.f32 %v629, %v712
        %v743 = vadd.f32 %v630, %v717
        %v744 = vadd.f32 %v631, %v720
        %v745 = vadd.f32 %v632, %v725
        %v746 = vadd.f32 %v633, %v728
        %vm747 = vcmask 31744
        %748 = vst.msk [vmem:[#allocation2] sm:$0xff] %vm747, %v731
        %749 = vst.msk [vmem:[#allocation2 + $0x8] sm:$0xff] %vm747, %v732
        %750 = vst.msk [vmem:[#allocation2 + $0x10] sm:$0xff] %vm747, %v733
        %751 = vst.msk [vmem:[#allocation2 + $0x18] sm:$0xff] %vm747, %v734
        %752 = vst.msk [vmem:[#allocation2 + $0x20] sm:$0xff] %vm747, %v735
        %753 = vst.msk [vmem:[#allocation2 + $0x28] sm:$0xff] %vm747, %v736
        %754 = vst.msk [vmem:[#allocation2 + $0x30] sm:$0xff] %vm747, %v737
        %755 = vst.msk [vmem:[#allocation2 + $0x38] sm:$0xff] %vm747, %v738
        %756 = vst.msk [vmem:[#allocation2 + $0x40] sm:$0xff] %vm747, %v739
        %757 = vst.msk [vmem:[#allocation2 + $0x48] sm:$0xff] %vm747, %v740
        %758 = vst.msk [vmem:[#allocation2 + $0x50] sm:$0xff] %vm747, %v741
        %759 = vst.msk [vmem:[#allocation2 + $0x58] sm:$0xff] %vm747, %v742
        %760 = vst.msk [vmem:[#allocation2 + $0x60] sm:$0xff] %vm747, %v743
        %761 = vst.msk [vmem:[#allocation2 + $0x68] sm:$0xff] %vm747, %v744
        %762 = vst.msk [vmem:[#allocation2 + $0x70] sm:$0xff] %vm747, %v745
        %763 = vst.msk [vmem:[#allocation2 + $0x78] sm:$0xff] %vm747, %v746
        %p764 = scmp.eq.s32.totalorder %s26, 1
        // Predicated region
        $region87: #{gprgnn_forward.10} parent=77 // pred_check
          %p765 = pneg %p764
        $region88: #{gprgnn_forward.10} parent=77 // pred_check_branch
          %767 = sbr.rel (%p765) target = $region90
        $region89: #{gprgnn_forward.10} parent=77 // pred_region
          %v768 = vld [vmem:[#allocation2] sm:$0xff]
          %v769 = vld [vmem:[#allocation2 + $0x8] sm:$0xff]
          %v770 = vld [vmem:[#allocation2 + $0x10] sm:$0xff]
          %v771 = vld [vmem:[#allocation2 + $0x18] sm:$0xff]
          %v772 = vld [vmem:[#allocation2 + $0x20] sm:$0xff]
          %v773 = vld [vmem:[#allocation2 + $0x28] sm:$0xff]
          %v774 = vld [vmem:[#allocation2 + $0x30] sm:$0xff]
          %v775 = vld [vmem:[#allocation2 + $0x38] sm:$0xff]
          %v776 = vld [vmem:[#allocation2 + $0x40] sm:$0xff]
          %v777 = vld [vmem:[#allocation2 + $0x48] sm:$0xff]
          %v778 = vld [vmem:[#allocation2 + $0x50] sm:$0xff]
          %v779 = vld [vmem:[#allocation2 + $0x58] sm:$0xff]
          %v780 = vld [vmem:[#allocation2 + $0x60] sm:$0xff]
          %v781 = vld [vmem:[#allocation2 + $0x68] sm:$0xff]
          %v782 = vld [vmem:[#allocation2 + $0x70] sm:$0xff]
          %v783 = vld [vmem:[#allocation2 + $0x78] sm:$0xff]
          %v784 = vld [vmem:[%s415] sm:$0xff]
          %v785 = vld [vmem:[%s415 + $0x8] sm:$0xff]
          %v786 = vld [vmem:[%s415 + $0x10] sm:$0xff]
          %v787 = vld [vmem:[%s415 + $0x18] sm:$0xff]
          %v788 = vld [vmem:[%s415 + $0x20] sm:$0xff]
          %v789 = vld [vmem:[%s415 + $0x28] sm:$0xff]
          %v790 = vld [vmem:[%s415 + $0x30] sm:$0xff]
          %v791 = vld [vmem:[%s415 + $0x38] sm:$0xff]
          %v792 = vld [vmem:[%s415 + $0x40] sm:$0xff]
          %v793 = vld [vmem:[%s415 + $0x48] sm:$0xff]
          %v794 = vld [vmem:[%s415 + $0x50] sm:$0xff]
          %v795 = vld [vmem:[%s415 + $0x58] sm:$0xff]
          %v796 = vld [vmem:[%s415 + $0x60] sm:$0xff]
          %v797 = vld [vmem:[%s415 + $0x68] sm:$0xff]
          %v798 = vld [vmem:[%s415 + $0x70] sm:$0xff]
          %v799 = vld [vmem:[%s415 + $0x78] sm:$0xff]
          %801 = vset.pattern.permute.xlu0 0
          %802 = vperm.xlu0 %801, %v784
          %v803 = vpop.permute.xlu0 %802
          %806 = vset.pattern.permute.xlu0 0
          %807 = vperm.xlu0 %806, %v785
          %v808 = vpop.permute.xlu0 %807
          %811 = vset.pattern.permute.xlu0 0
          %812 = vperm.xlu0 %811, %v786
          %v813 = vpop.permute.xlu0 %812
          %816 = vset.pattern.permute.xlu0 0
          %817 = vperm.xlu0 %816, %v787
          %v818 = vpop.permute.xlu0 %817
          %821 = vset.pattern.permute.xlu0 0
          %822 = vperm.xlu0 %821, %v788
          %v823 = vpop.permute.xlu0 %822
          %826 = vset.pattern.permute.xlu0 0
          %827 = vperm.xlu0 %826, %v789
          %v828 = vpop.permute.xlu0 %827
          %831 = vset.pattern.permute.xlu0 0
          %832 = vperm.xlu0 %831, %v790
          %v833 = vpop.permute.xlu0 %832
          %836 = vset.pattern.permute.xlu0 0
          %837 = vperm.xlu0 %836, %v791
          %v838 = vpop.permute.xlu0 %837
          %841 = vset.pattern.permute.xlu0 0
          %842 = vperm.xlu0 %841, %v792
          %v843 = vpop.permute.xlu0 %842
          %846 = vset.pattern.permute.xlu0 0
          %847 = vperm.xlu0 %846, %v793
          %v848 = vpop.permute.xlu0 %847
          %851 = vset.pattern.permute.xlu0 0
          %852 = vperm.xlu0 %851, %v794
          %v853 = vpop.permute.xlu0 %852
          %856 = vset.pattern.permute.xlu0 0
          %857 = vperm.xlu0 %856, %v795
          %v858 = vpop.permute.xlu0 %857
          %861 = vset.pattern.permute.xlu0 0
          %862 = vperm.xlu0 %861, %v796
          %v863 = vpop.permute.xlu0 %862
          %866 = vset.pattern.permute.xlu0 0
          %867 = vperm.xlu0 %866, %v797
          %v868 = vpop.permute.xlu0 %867
          %871 = vset.pattern.permute.xlu0 0
          %872 = vperm.xlu0 %871, %v798
          %v873 = vpop.permute.xlu0 %872
          %876 = vset.pattern.permute.xlu0 0
          %877 = vperm.xlu0 %876, %v799
          %v878 = vpop.permute.xlu0 %877
          %v880 = vmul.f32 %v768, %v803
          %v881 = vmul.f32 %v769, %v808
          %v882 = vmul.f32 %v770, %v813
          %v883 = vmul.f32 %v771, %v818
          %v884 = vmul.f32 %v772, %v823
          %v885 = vmul.f32 %v773, %v828
          %v886 = vmul.f32 %v774, %v833
          %v887 = vmul.f32 %v775, %v838
          %v888 = vmul.f32 %v776, %v843
          %v889 = vmul.f32 %v777, %v848
          %v890 = vmul.f32 %v778, %v853
          %v891 = vmul.f32 %v779, %v858
          %v892 = vmul.f32 %v780, %v863
          %v893 = vmul.f32 %v781, %v868
          %v894 = vmul.f32 %v782, %v873
          %v895 = vmul.f32 %v783, %v878
          %896 = vst.msk [vmem:[%s440] sm:$0xff] %vm747, %v880
          %897 = vst.msk [vmem:[%s440 + $0x8] sm:$0xff] %vm747, %v881
          %898 = vst.msk [vmem:[%s440 + $0x10] sm:$0xff] %vm747, %v882
          %899 = vst.msk [vmem:[%s440 + $0x18] sm:$0xff] %vm747, %v883
          %900 = vst.msk [vmem:[%s440 + $0x20] sm:$0xff] %vm747, %v884
          %901 = vst.msk [vmem:[%s440 + $0x28] sm:$0xff] %vm747, %v885
          %902 = vst.msk [vmem:[%s440 + $0x30] sm:$0xff] %vm747, %v886
          %903 = vst.msk [vmem:[%s440 + $0x38] sm:$0xff] %vm747, %v887
          %904 = vst.msk [vmem:[%s440 + $0x40] sm:$0xff] %vm747, %v888
          %905 = vst.msk [vmem:[%s440 + $0x48] sm:$0xff] %vm747, %v889
          %906 = vst.msk [vmem:[%s440 + $0x50] sm:$0xff] %vm747, %v890
          %907 = vst.msk [vmem:[%s440 + $0x58] sm:$0xff] %vm747, %v891
          %908 = vst.msk [vmem:[%s440 + $0x60] sm:$0xff] %vm747, %v892
          %909 = vst.msk [vmem:[%s440 + $0x68] sm:$0xff] %vm747, %v893
          %910 = vst.msk [vmem:[%s440 + $0x70] sm:$0xff] %vm747, %v894
          %911 = vst.msk [vmem:[%s440 + $0x78] sm:$0xff] %vm747, %v895
          %v912 = vld [vmem:[%s434] sm:$0xff]
          %v913 = vld [vmem:[%s434 + $0x8] sm:$0xff]
          %v914 = vld [vmem:[%s434 + $0x10] sm:$0xff]
          %v915 = vld [vmem:[%s434 + $0x18] sm:$0xff]
          %v916 = vld [vmem:[%s434 + $0x20] sm:$0xff]
          %v917 = vld [vmem:[%s434 + $0x28] sm:$0xff]
          %v918 = vld [vmem:[%s434 + $0x30] sm:$0xff]
          %v919 = vld [vmem:[%s434 + $0x38] sm:$0xff]
          %v920 = vld [vmem:[%s434 + $0x40] sm:$0xff]
          %v921 = vld [vmem:[%s434 + $0x48] sm:$0xff]
          %v922 = vld [vmem:[%s434 + $0x50] sm:$0xff]
          %v923 = vld [vmem:[%s434 + $0x58] sm:$0xff]
          %v924 = vld [vmem:[%s434 + $0x60] sm:$0xff]
          %v925 = vld [vmem:[%s434 + $0x68] sm:$0xff]
          %v926 = vld [vmem:[%s434 + $0x70] sm:$0xff]
          %v927 = vld [vmem:[%s434 + $0x78] sm:$0xff]
          %v928 = vld [vmem:[#allocation3] sm:$0x1]
          %v930 = vlaneseq
          %v931 = vshrl.u32 %v930, 7
          %v932 = vsub.s32 0, %v931
          %v933 = vrot.slane %v928, %v932
          %934 = vset.pattern.permute.xlu0 0
          %935 = vperm.xlu0 %934, %v933
          %v936 = vpop.permute.xlu0 %935
          %v938 = vmul.f32 %v936, %v880
          %v939 = vmul.f32 %v936, %v881
          %v940 = vmul.f32 %v936, %v882
          %v941 = vmul.f32 %v936, %v883
          %v942 = vmul.f32 %v936, %v884
          %v943 = vmul.f32 %v936, %v885
          %v944 = vmul.f32 %v936, %v886
          %v945 = vmul.f32 %v936, %v887
          %v946 = vmul.f32 %v936, %v888
          %v947 = vmul.f32 %v936, %v889
          %v948 = vmul.f32 %v936, %v890
          %v949 = vmul.f32 %v936, %v891
          %v950 = vmul.f32 %v936, %v892
          %v951 = vmul.f32 %v936, %v893
          %v952 = vmul.f32 %v936, %v894
          %v953 = vmul.f32 %v936, %v895
          %v954 = vadd.f32 %v912, %v938
          %v955 = vadd.f32 %v913, %v939
          %v956 = vadd.f32 %v914, %v940
          %v957 = vadd.f32 %v915, %v941
          %v958 = vadd.f32 %v916, %v942
          %v959 = vadd.f32 %v917, %v943
          %v960 = vadd.f32 %v918, %v944
          %v961 = vadd.f32 %v919, %v945
          %v962 = vadd.f32 %v920, %v946
          %v963 = vadd.f32 %v921, %v947
          %v964 = vadd.f32 %v922, %v948
          %v965 = vadd.f32 %v923, %v949
          %v966 = vadd.f32 %v924, %v950
          %v967 = vadd.f32 %v925, %v951
          %v968 = vadd.f32 %v926, %v952
          %v969 = vadd.f32 %v927, %v953
          %970 = vst.msk [vmem:[%s446] sm:$0xff] %vm747, %v954
          %971 = vst.msk [vmem:[%s446 + $0x8] sm:$0xff] %vm747, %v955
          %972 = vst.msk [vmem:[%s446 + $0x10] sm:$0xff] %vm747, %v956
          %973 = vst.msk [vmem:[%s446 + $0x18] sm:$0xff] %vm747, %v957
          %974 = vst.msk [vmem:[%s446 + $0x20] sm:$0xff] %vm747, %v958
          %975 = vst.msk [vmem:[%s446 + $0x28] sm:$0xff] %vm747, %v959
          %976 = vst.msk [vmem:[%s446 + $0x30] sm:$0xff] %vm747, %v960
          %977 = vst.msk [vmem:[%s446 + $0x38] sm:$0xff] %vm747, %v961
          %978 = vst.msk [vmem:[%s446 + $0x40] sm:$0xff] %vm747, %v962
          %979 = vst.msk [vmem:[%s446 + $0x48] sm:$0xff] %vm747, %v963
          %980 = vst.msk [vmem:[%s446 + $0x50] sm:$0xff] %vm747, %v964
          %981 = vst.msk [vmem:[%s446 + $0x58] sm:$0xff] %vm747, %v965
          %982 = vst.msk [vmem:[%s446 + $0x60] sm:$0xff] %vm747, %v966
          %983 = vst.msk [vmem:[%s446 + $0x68] sm:$0xff] %vm747, %v967
          %984 = vst.msk [vmem:[%s446 + $0x70] sm:$0xff] %vm747, %v968
          %985 = vst.msk [vmem:[%s446 + $0x78] sm:$0xff] %vm747, %v969
        $region90: #{gprgnn_forward.10} parent=77 // pred_fallthru
          _
        %s986 = smul.u32 16, %s25
        %p987 = scmp.lt.s32.totalorder %s986, 31
        %s988 = scalar_select %p987, %s986, 31
        %s989 = smul.addr %s988, 8
        %s990 = scalar_lea.vmem %s6, %s989
        %s991 = smul.u32 16, %s25
        %p992 = scmp.lt.s32.totalorder %s991, 31
        %s993 = scalar_select %p992, %s991, 31
        %s994 = smul.addr %s993, 8
        %s995 = scalar_lea.vmem %s7, %s994
        // Predicated region
        $region91: #{gprgnn_forward.10} parent=77 // pred_check
          %p996 = pneg %p204
        $region92: #{gprgnn_forward.10} parent=77 // pred_check_branch
          %998 = sbr.rel (%p996) target = $region94
        $region93: #{gprgnn_forward.10} parent=77 // pred_region
          %s999 = smul.u32 16, %s25
        $region94: #{gprgnn_forward.10} parent=77 // pred_fallthru
          _
        // Predicated region
        $region95: #{gprgnn_forward.10} parent=77 // pred_check
          %p1000 = pneg %p230
        $region96: #{gprgnn_forward.10} parent=77 // pred_check_branch
          %1002 = sbr.rel (%p1000) target = $region98
        $region97: #{gprgnn_forward.10} parent=77 // pred_region
          %s1003 = smul.u32 16, %s25
        $region98: #{gprgnn_forward.10} parent=77 // pred_fallthru
          _
      $region78: #{gprgnn_forward.10} parent=5 // pred_fallthru
        _
      %p1004 = scmp.le.s32.totalorder 2, %s16
      // Predicated region
      $region99: #{gprgnn_forward.10} parent=5 // pred_check
        %p1005 = pneg %p1004
      $region100: #{gprgnn_forward.10} parent=5 // pred_check_branch
        %1007 = sbr.rel (%p1005) target = $region102
      $region101: #{gprgnn_forward.10} parent=5 // pred_region
        %s1008 = ssub.s32 %s16, 2
        // Predicated region
        $region103: #{gprgnn_forward.10} parent=101 // pred_check
          %p1009 = pneg %p210
        $region104: #{gprgnn_forward.10} parent=101 // pred_check_branch
          %1011 = sbr.rel (%p1009) target = $region106
        $region105: #{gprgnn_forward.10} parent=101 // pred_region
          %s1012 = smul.u32 16, %s27
          %p1013 = scmp.lt.s32.totalorder %s1012, 31
          %s1014 = scalar_select %p1013, %s1012, 31
          %s1015 = smul.addr %s1014, 8
          %s1016 = scalar_lea.vmem %s6, %s1015
        $region106: #{gprgnn_forward.10} parent=101 // pred_fallthru
          _
        // Predicated region
        $region107: #{gprgnn_forward.10} parent=101 // pred_check
          %p1017 = pneg %p236
        $region108: #{gprgnn_forward.10} parent=101 // pred_check_branch
          %1019 = sbr.rel (%p1017) target = $region110
        $region109: #{gprgnn_forward.10} parent=101 // pred_region
          %s1020 = smul.u32 16, %s27
          %p1021 = scmp.lt.s32.totalorder %s1020, 31
          %s1022 = scalar_select %p1021, %s1020, 31
          %s1023 = smul.addr %s1022, 8
          %s1024 = scalar_lea.vmem %s7, %s1023
        $region110: #{gprgnn_forward.10} parent=101 // pred_fallthru
          _
      $region102: #{gprgnn_forward.10} parent=5 // pred_fallthru
        _
    $region6: #{gprgnn_forward.10} parent=1 // loop_footer
      %s20 = sadd.s32 1, %s16
    $region7: #{gprgnn_forward.10} parent=1 // loop_footer_branch
      %15 = sbr.rel target = $region3
    $region8: #{gprgnn_forward.10} parent=1 // loop_exit
      _

// kernel: gprgnn_forward.17
$region0: #{gprgnn_forward.17}
  #allocation0 [shape = 'u32[]', space=smem, size = 0x4, offset = 0x4, fixed_abs, tag = 'smem constant byte address 0x4 - core index']
  #allocation1 [shape = 'u32[144,128]{1,0:T(1,128)}', space=vmem, size = 0x12000, scoped, tag = 'internal scratch']
  #allocation2 [shape = 'f32[128,4]{1,0:T(8,128)}', space=vmem, size = 0x10000, scoped, tag = 'scratch operand']
  #allocation3 [shape = 'f32[1,1]{1,0:T(1,128)S(1)}', space=vmem, size = 0x200, scoped, tag = 'scoped memory for gprgnn_forward.17']
  %s0 = inlined_call_operand.<no memory space> [shape: f32[1,1], index: 0, kind: input, shape index: {}]
  %s1 = inlined_call_operand.vmem [shape: f32[256,1], index: 1, kind: input, shape index: {}, may-alias: {1,2}]
  %s2 = inlined_call_operand.vmem [shape: f32[256,1], index: 2, kind: input, shape index: {}, may-alias: {1,2}]
  %s3 = inlined_call_operand.vmem [shape: s8[256,256], index: 3, kind: input, shape index: {}]
  %s4 = inlined_call_operand.vmem [shape: f32[256,4], index: 4, kind: input, shape index: {}]
  %s5 = inlined_call_operand.vmem [shape: f32[256,4], index: 5, kind: input, shape index: {}]
  %s6 = inlined_call_operand.hbm [shape: f32[256,4], index: 6, kind: output, shape index: {0}]
  %s7 = inlined_call_operand.vmem [shape: f32[256,4], index: 7, kind: output, shape index: {1}]
  %8 = xla_tuple %s6, %s7
  %s9 = sld [smem:[#allocation0]]
  $region111: #{gprgnn_forward.17} parent=0
    _
  %s11 = ssub.s32 1, %s9
  %s12 = scalar_select 0, %s11, %s9
  %v13 = vstv %s0
  %14 = vst [vmem:[#allocation3] sm:$0x1] %v13
  $region1: #{gprgnn_forward.17} parent=0
    #allocation4 [shape = 'u8[32768]{0}', space=vmem, size = 0x8000, scoped, tag = 'input window, operand 3']
    #allocation5 [shape = 'u8[131072]{0}', space=vmem, size = 0x20000, scoped, tag = 'output window, operand 0']
    #allocation6 [shape = 's32[2]{0}', space=sflag, size = 0x8, scoped, tag = 'scoped memory for gprgnn_forward.17']
    %15 = vsyncpa [#allocation6], 0
    %s16 = scalar_lea.sflag [#allocation6], 1
    %17 = vsyncpa %s16, 0
    loop: start=0, step=1, limit=6
    $region2: #{gprgnn_forward.17} parent=1 // loop_pre_header
      _
    $region3: #{gprgnn_forward.17} parent=1 // loop_header
      %s19 = sphi 0, %s23
      %p20 = scmp.ge.s32.totalorder %s19, 6
      %s26 = sphi 0, %s38
      %s27 = sphi 0, %s34
      %s28 = sphi 0, %s26
      %s29 = sphi 0, %s27
      %s30 = sphi 0, %s28
      %s31 = sphi 0, %s29
      %s39 = sphi 0, %s39
      %s41 = sphi 0, %s39
      %s42 = sphi 0, %s41
      %s56 = sphi 0, %s42
      %s62 = sphi 0, %s64
      %s65 = sphi 0, %s62
      %s66 = sphi 0, %s65
      %s82 = sphi 0, %s66
      %s88 = sphi 0, %s90
      %s91 = sphi 0, %s88
      %s92 = sphi 0, %s91
      %s108 = sphi 0, %s92
      %s116 = sphi 0, %s118
      %s119 = sphi 0, %s116
      %s120 = sphi 0, %s119
      %s136 = sphi 0, %s120
      %s142 = sphi 0, %s144
      %s145 = sphi 0, %s142
      %s146 = sphi 0, %s145
      %s162 = sphi 0, %s146
      %s168 = sphi 0, %s170
      %s171 = sphi 0, %s168
      %s172 = sphi 0, %s171
      %s188 = sphi 0, %s172
      %s194 = sphi 0, %s196
      %s197 = sphi 0, %s194
      %s198 = sphi 0, %s197
      %s214 = sphi 0, %s198
      %s220 = sphi 0, %s222
      %s223 = sphi 0, %s220
      %s224 = sphi 0, %s223
      %s240 = sphi 0, %s224
    $region4: #{gprgnn_forward.17} parent=1 // loop_header_branch
      %22 = sbr.rel (%p20) target = $region8
    $region5: #{gprgnn_forward.17} parent=1 // loop_body
      %s24 = ssub.s32 %s19, 1
      %s25 = ssub.s32 %s19, 2
      %s32 = sadd.s32 1, %s27
      %p33 = scmp.ge.s32.totalorder %s32, 2
      %s34 = scalar_select %p33, 0, %s32
      %s35 = sadd.s32 1, %s26
      %s36 = scalar_select %p33, %s35, %s26
      %p37 = scmp.ge.s32.totalorder %s36, 2
      %s38 = scalar_select %p37, 0, %s36
      %s40 = sadd.s32 %s39, 1
      %p43 = scmp.eq.s32.totalorder %s19, 3
      %p44 = scmp.ne.s32.totalorder %s39, %s41
      %p45 = scmp.eq.s32.totalorder %s19, 0
      %p46 = por %p44, %p45
      %p47 = scmp.ne.s32.totalorder %s39, %s41
      %p48 = scmp.eq.s32.totalorder %s24, 3
      %p49 = por %p47, %p48
      %p50 = scmp.ne.s32.totalorder %s41, %s42
      %p51 = scmp.eq.s32.totalorder %s24, 0
      %p52 = por %p50, %p51
      %p53 = scmp.ne.s32.totalorder %s41, %s42
      %p54 = scmp.eq.s32.totalorder %s25, 3
      %p55 = por %p53, %p54
      %p57 = scmp.ne.s32.totalorder %s42, %s56
      %p58 = scmp.eq.s32.totalorder %s25, 0
      %p59 = por %p57, %p58
      %s60 = ssub.s32 %s26, %s38
      %p61 = scmp.eq.s32.totalorder %s60, 0
      %s63 = sadd.s32 %s62, 1
      %s64 = scalar_select %p61, %s62, %s63
      %p67 = pneg %p61
      %p68 = scmp.eq.s32.totalorder %s19, 3
      %p69 = por %p67, %p68
      %p70 = scmp.ne.s32.totalorder %s62, %s65
      %p71 = scmp.eq.s32.totalorder %s19, 0
      %p72 = por %p70, %p71
      %p73 = scmp.ne.s32.totalorder %s62, %s65
      %p74 = scmp.eq.s32.totalorder %s24, 3
      %p75 = por %p73, %p74
      %p76 = scmp.ne.s32.totalorder %s65, %s66
      %p77 = scmp.eq.s32.totalorder %s24, 0
      %p78 = por %p76, %p77
      %p79 = scmp.ne.s32.totalorder %s65, %s66
      %p80 = scmp.eq.s32.totalorder %s25, 3
      %p81 = por %p79, %p80
      %p83 = scmp.ne.s32.totalorder %s66, %s82
      %p84 = scmp.eq.s32.totalorder %s25, 0
      %p85 = por %p83, %p84
      %s86 = ssub.s32 %s27, %s34
      %p87 = scmp.eq.s32.totalorder %s86, 0
      %s89 = sadd.s32 %s88, 1
      %s90 = scalar_select %p87, %s88, %s89
      %p93 = pneg %p87
      %p94 = scmp.eq.s32.totalorder %s19, 3
      %p95 = por %p93, %p94
      %p96 = scmp.ne.s32.totalorder %s88, %s91
      %p97 = scmp.eq.s32.totalorder %s19, 0
      %p98 = por %p96, %p97
      %p99 = scmp.ne.s32.totalorder %s88, %s91
      %p100 = scmp.eq.s32.totalorder %s24, 3
      %p101 = por %p99, %p100
      %p102 = scmp.ne.s32.totalorder %s91, %s92
      %p103 = scmp.eq.s32.totalorder %s24, 0
      %p104 = por %p102, %p103
      %p105 = scmp.ne.s32.totalorder %s91, %s92
      %p106 = scmp.eq.s32.totalorder %s25, 3
      %p107 = por %p105, %p106
      %p109 = scmp.ne.s32.totalorder %s92, %s108
      %p110 = scmp.eq.s32.totalorder %s25, 0
      %p111 = por %p109, %p110
      %s112 = ssub.s32 %s26, %s38
      %s113 = ssub.s32 %s27, %s34
      %s114 = sor.u32 %s112, %s113
      %p115 = scmp.eq.s32.totalorder %s114, 0
      %s117 = sadd.s32 %s116, 1
      %s118 = scalar_select %p115, %s116, %s117
      %p121 = pneg %p115
      %p122 = scmp.eq.s32.totalorder %s19, 3
      %p123 = por %p121, %p122
      %p124 = scmp.ne.s32.totalorder %s116, %s119
      %p125 = scmp.eq.s32.totalorder %s19, 0
      %p126 = por %p124, %p125
      %p127 = scmp.ne.s32.totalorder %s116, %s119
      %p128 = scmp.eq.s32.totalorder %s24, 3
      %p129 = por %p127, %p128
      %p130 = scmp.ne.s32.totalorder %s119, %s120
      %p131 = scmp.eq.s32.totalorder %s24, 0
      %p132 = por %p130, %p131
      %p133 = scmp.ne.s32.totalorder %s119, %s120
      %p134 = scmp.eq.s32.totalorder %s25, 3
      %p135 = por %p133, %p134
      %p137 = scmp.ne.s32.totalorder %s120, %s136
      %p138 = scmp.eq.s32.totalorder %s25, 0
      %p139 = por %p137, %p138
      %s140 = ssub.s32 %s27, %s34
      %p141 = scmp.eq.s32.totalorder %s140, 0
      %s143 = sadd.s32 %s142, 1
      %s144 = scalar_select %p141, %s142, %s143
      %p147 = pneg %p141
      %p148 = scmp.eq.s32.totalorder %s19, 3
      %p149 = por %p147, %p148
      %p150 = scmp.ne.s32.totalorder %s142, %s145
      %p151 = scmp.eq.s32.totalorder %s19, 0
      %p152 = por %p150, %p151
      %p153 = scmp.ne.s32.totalorder %s142, %s145
      %p154 = scmp.eq.s32.totalorder %s24, 3
      %p155 = por %p153, %p154
      %p156 = scmp.ne.s32.totalorder %s145, %s146
      %p157 = scmp.eq.s32.totalorder %s24, 0
      %p158 = por %p156, %p157
      %p159 = scmp.ne.s32.totalorder %s145, %s146
      %p160 = scmp.eq.s32.totalorder %s25, 3
      %p161 = por %p159, %p160
      %p163 = scmp.ne.s32.totalorder %s146, %s162
      %p164 = scmp.eq.s32.totalorder %s25, 0
      %p165 = por %p163, %p164
      %s166 = ssub.s32 %s26, %s38
      %p167 = scmp.eq.s32.totalorder %s166, 0
      %s169 = sadd.s32 %s168, 1
      %s170 = scalar_select %p167, %s168, %s169
      %p173 = pneg %p167
      %p174 = scmp.eq.s32.totalorder %s19, 3
      %p175 = por %p173, %p174
      %p176 = scmp.ne.s32.totalorder %s168, %s171
      %p177 = scmp.eq.s32.totalorder %s19, 0
      %p178 = por %p176, %p177
      %p179 = scmp.ne.s32.totalorder %s168, %s171
      %p180 = scmp.eq.s32.totalorder %s24, 3
      %p181 = por %p179, %p180
      %p182 = scmp.ne.s32.totalorder %s171, %s172
      %p183 = scmp.eq.s32.totalorder %s24, 0
      %p184 = por %p182, %p183
      %p185 = scmp.ne.s32.totalorder %s171, %s172
      %p186 = scmp.eq.s32.totalorder %s25, 3
      %p187 = por %p185, %p186
      %p189 = scmp.ne.s32.totalorder %s172, %s188
      %p190 = scmp.eq.s32.totalorder %s25, 0
      %p191 = por %p189, %p190
      %s192 = ssub.s32 %s26, %s38
      %p193 = scmp.eq.s32.totalorder %s192, 0
      %s195 = sadd.s32 %s194, 1
      %s196 = scalar_select %p193, %s194, %s195
      %p199 = pneg %p193
      %p200 = scmp.eq.s32.totalorder %s19, 3
      %p201 = por %p199, %p200
      %p202 = scmp.ne.s32.totalorder %s194, %s197
      %p203 = scmp.eq.s32.totalorder %s19, 0
      %p204 = por %p202, %p203
      %p205 = scmp.ne.s32.totalorder %s194, %s197
      %p206 = scmp.eq.s32.totalorder %s24, 3
      %p207 = por %p205, %p206
      %p208 = scmp.ne.s32.totalorder %s197, %s198
      %p209 = scmp.eq.s32.totalorder %s24, 0
      %p210 = por %p208, %p209
      %p211 = scmp.ne.s32.totalorder %s197, %s198
      %p212 = scmp.eq.s32.totalorder %s25, 3
      %p213 = por %p211, %p212
      %p215 = scmp.ne.s32.totalorder %s198, %s214
      %p216 = scmp.eq.s32.totalorder %s25, 0
      %p217 = por %p215, %p216
      %s218 = ssub.s32 %s26, %s38
      %p219 = scmp.eq.s32.totalorder %s218, 0
      %s221 = sadd.s32 %s220, 1
      %s222 = scalar_select %p219, %s220, %s221
      %p225 = pneg %p219
      %p226 = scmp.eq.s32.totalorder %s19, 3
      %p227 = por %p225, %p226
      %p228 = scmp.ne.s32.totalorder %s220, %s223
      %p229 = scmp.eq.s32.totalorder %s19, 0
      %p230 = por %p228, %p229
      %p231 = scmp.ne.s32.totalorder %s220, %s223
      %p232 = scmp.eq.s32.totalorder %s24, 3
      %p233 = por %p231, %p232
      %p234 = scmp.ne.s32.totalorder %s223, %s224
      %p235 = scmp.eq.s32.totalorder %s24, 0
      %p236 = por %p234, %p235
      %p237 = scmp.ne.s32.totalorder %s223, %s224
      %p238 = scmp.eq.s32.totalorder %s25, 3
      %p239 = por %p237, %p238
      %p241 = scmp.ne.s32.totalorder %s224, %s240
      %p242 = scmp.eq.s32.totalorder %s25, 0
      %p243 = por %p241, %p242
      %p244 = scmp.le.s32.totalorder 1, %s19
      %p245 = scmp.lt.s32.totalorder %s19, 5
      %p246 = pnand %p244, %p245
      %p247 = pneg %p246
      // Predicated region
      $region9: #{gprgnn_forward.17} parent=5 // pred_check
        _
      $region10: #{gprgnn_forward.17} parent=5 // pred_check_branch
        %249 = sbr.rel (%p246) target = $region12
      $region11: #{gprgnn_forward.17} parent=5 // pred_region
        %s250 = ssub.s32 %s19, 1
        // Predicated region
        $region13: #{gprgnn_forward.17} parent=11 // pred_check
          %p251 = pneg %p52
        $region14: #{gprgnn_forward.17} parent=11 // pred_check_branch
          %253 = sbr.rel (%p251) target = $region16
        $region15: #{gprgnn_forward.17} parent=11 // pred_region
          _
        $region16: #{gprgnn_forward.17} parent=11 // pred_fallthru
          _
      $region12: #{gprgnn_forward.17} parent=5 // pred_fallthru
        _
      %p254 = scmp.lt.s32.totalorder %s19, 4
      // Predicated region
      $region17: #{gprgnn_forward.17} parent=5 // pred_check
        %p255 = pneg %p254
      $region18: #{gprgnn_forward.17} parent=5 // pred_check_branch
        %257 = sbr.rel (%p255) target = $region20
      $region19: #{gprgnn_forward.17} parent=5 // pred_region
        // Predicated region
        $region21: #{gprgnn_forward.17} parent=19 // pred_check
          %p258 = pneg %p72
        $region22: #{gprgnn_forward.17} parent=19 // pred_check_branch
          %260 = sbr.rel (%p258) target = $region24
        $region23: #{gprgnn_forward.17} parent=19 // pred_region
          %s261 = smul.u32 16, %s26
          %p262 = scmp.lt.s32.totalorder %s261, 31
          %s263 = scalar_select %p262, %s261, 31
          %s264 = smul.addr %s263, 8
          %s265 = scalar_lea.vmem %s1, %s264
          %s266 = smul.u32 16, %s26
        $region24: #{gprgnn_forward.17} parent=19 // pred_fallthru
          _
        // Predicated region
        $region25: #{gprgnn_forward.17} parent=19 // pred_check
          %p267 = pneg %p98
        $region26: #{gprgnn_forward.17} parent=19 // pred_check_branch
          %269 = sbr.rel (%p267) target = $region28
        $region27: #{gprgnn_forward.17} parent=19 // pred_region
          %s270 = smul.u32 16, %s27
          %p271 = scmp.lt.s32.totalorder %s270, 31
          %s272 = scalar_select %p271, %s270, 31
          %s273 = smul.addr %s272, 8
          %s274 = scalar_lea.vmem %s2, %s273
          %s275 = smul.u32 16, %s27
        $region28: #{gprgnn_forward.17} parent=19 // pred_fallthru
          _
        // Predicated region
        $region29: #{gprgnn_forward.17} parent=19 // pred_check
          %p276 = pneg %p126
        $region30: #{gprgnn_forward.17} parent=19 // pred_check_branch
          %278 = sbr.rel (%p276) target = $region32
        $region31: #{gprgnn_forward.17} parent=19 // pred_region
          %s279 = sand.u32 %s116, 1
          %s280 = sand.u32 %s116, 1
          %s281 = smul.addr %s280, 32
          %s282 = scalar_lea.vmem [#allocation4], %s281
          %s283 = smul.u32 4, %s26
          %s284 = smul.addr %s283, 2
          %s285 = sadd.s32 %s27, %s284
          %s286 = smul.addr %s285, 8
          %s287 = scalar_lea.vmem %s3, %s286
          // Predicated region
          $region33: #{gprgnn_forward.17} parent=31 // pred_check
            _
          $region34: #{gprgnn_forward.17} parent=31 // pred_check_branch
            %289 = sbr.rel (0) target = $region36
          $region35: #{gprgnn_forward.17} parent=31 // pred_region
            // Predicated region
            $region37: #{gprgnn_forward.17} parent=35 // pred_check
              _
            $region38: #{gprgnn_forward.17} parent=35 // pred_check_branch
              %291 = sbr.rel (0) target = $region40
            $region39: #{gprgnn_forward.17} parent=35 // pred_region
              // Predicated region
              $region52: #{gprgnn_forward.17} parent=39 // pred_check
                _
              $region53: #{gprgnn_forward.17} parent=39 // pred_check_branch
                %312 = sbr.rel (0) target = $region55
              $region54: #{gprgnn_forward.17} parent=39 // pred_region
                loop: start=0, step=1, limit=1
                $region56: #{gprgnn_forward.17} parent=54 // loop_pre_header
                  _
                $region57: #{gprgnn_forward.17} parent=54 // loop_header
                  %s314 = sphi 0, %s318
                  %p315 = scmp.ge.s32.totalorder %s314, 1
                  %s319 = sphi %s287, %s287
                  %s320 = sphi %s282, %s282
                $region58: #{gprgnn_forward.17} parent=54 // loop_header_branch
                  %317 = sbr.rel (%p315) target = $region62
                $region59: #{gprgnn_forward.17} parent=54 // loop_body
                  %v321 = vld [vmem:[%s319] sm:$0xff]
                  %322 = vst [vmem:[%s320] sm:$0xff] %v321
                  %v323 = vld [vmem:[%s319 + $0x10] sm:$0xff]
                  %324 = vst [vmem:[%s320 + $0x8] sm:$0xff] %v323
                  %v325 = vld [vmem:[%s319 + $0x20] sm:$0xff]
                  %326 = vst [vmem:[%s320 + $0x10] sm:$0xff] %v325
                  %v327 = vld [vmem:[%s319 + $0x30] sm:$0xff]
                  %328 = vst [vmem:[%s320 + $0x18] sm:$0xff] %v327
                $region60: #{gprgnn_forward.17} parent=54 // loop_footer
                  %s318 = sadd.s32 1, %s314
                $region61: #{gprgnn_forward.17} parent=54 // loop_footer_branch
                  %313 = sbr.rel target = $region57
                $region62: #{gprgnn_forward.17} parent=54 // loop_exit
                  _
              $region55: #{gprgnn_forward.17} parent=39 // pred_fallthru
                _
              // Predicated region
              $region63: #{gprgnn_forward.17} parent=39 // pred_check
                _
              $region64: #{gprgnn_forward.17} parent=39 // pred_check_branch
                %330 = sbr.rel target = $region66
              $region65: #{gprgnn_forward.17} parent=39 // pred_region
                _
              $region66: #{gprgnn_forward.17} parent=39 // pred_fallthru
                _
            $region40: #{gprgnn_forward.17} parent=35 // pred_fallthru
              _
            // Predicated region
            $region41: #{gprgnn_forward.17} parent=35 // pred_check
              _
            $region42: #{gprgnn_forward.17} parent=35 // pred_check_branch
              %293 = sbr.rel target = $region44
            $region43: #{gprgnn_forward.17} parent=35 // pred_region
              loop: start=0, step=1, limit=1
              $region45: #{gprgnn_forward.17} parent=43 // loop_pre_header
                _
              $region46: #{gprgnn_forward.17} parent=43 // loop_header
                %s296 = sphi 0, %s300
                %p297 = scmp.ge.s32.totalorder %s296, 1
                %s301 = sphi %s287, %s287
                %s302 = sphi %s282, %s282
              $region47: #{gprgnn_forward.17} parent=43 // loop_header_branch
                %299 = sbr.rel (%p297) target = $region51
              $region48: #{gprgnn_forward.17} parent=43 // loop_body
                %v303 = vld [vmem:[%s301] sm:$0xff]
                %304 = vst [vmem:[%s302] sm:$0xff] %v303
                %v305 = vld [vmem:[%s301 + $0x10] sm:$0xff]
                %306 = vst [vmem:[%s302 + $0x8] sm:$0xff] %v305
                %v307 = vld [vmem:[%s301 + $0x20] sm:$0xff]
                %308 = vst [vmem:[%s302 + $0x10] sm:$0xff] %v307
                %v309 = vld [vmem:[%s301 + $0x30] sm:$0xff]
                %310 = vst [vmem:[%s302 + $0x18] sm:$0xff] %v309
              $region49: #{gprgnn_forward.17} parent=43 // loop_footer
                %s300 = sadd.s32 1, %s296
              $region50: #{gprgnn_forward.17} parent=43 // loop_footer_branch
                %295 = sbr.rel target = $region46
              $region51: #{gprgnn_forward.17} parent=43 // loop_exit
                _
            $region44: #{gprgnn_forward.17} parent=35 // pred_fallthru
              _
          $region36: #{gprgnn_forward.17} parent=31 // pred_fallthru
            _
          %331 = vnop
        $region32: #{gprgnn_forward.17} parent=19 // pred_fallthru
          _
        // Predicated region
        $region67: #{gprgnn_forward.17} parent=19 // pred_check
          %p332 = pneg %p152
        $region68: #{gprgnn_forward.17} parent=19 // pred_check_branch
          %334 = sbr.rel (%p332) target = $region70
        $region69: #{gprgnn_forward.17} parent=19 // pred_region
          %s335 = smul.u32 16, %s27
          %p336 = scmp.lt.s32.totalorder %s335, 31
          %s337 = scalar_select %p336, %s335, 31
          %s338 = smul.addr %s337, 8
          %s339 = scalar_lea.vmem %s4, %s338
          %s340 = smul.u32 16, %s27
        $region70: #{gprgnn_forward.17} parent=19 // pred_fallthru
          _
        // Predicated region
        $region71: #{gprgnn_forward.17} parent=19 // pred_check
          %p341 = pneg %p178
        $region72: #{gprgnn_forward.17} parent=19 // pred_check_branch
          %343 = sbr.rel (%p341) target = $region74
        $region73: #{gprgnn_forward.17} parent=19 // pred_region
          %s344 = smul.u32 16, %s26
          %p345 = scmp.lt.s32.totalorder %s344, 31
          %s346 = scalar_select %p345, %s344, 31
          %s347 = smul.addr %s346, 8
          %s348 = scalar_lea.vmem %s5, %s347
          %s349 = smul.u32 16, %s26
        $region74: #{gprgnn_forward.17} parent=19 // pred_fallthru
          _
      $region20: #{gprgnn_forward.17} parent=5 // pred_fallthru
        _
      %p350 = scmp.le.s32.totalorder 1, %s19
      %p351 = scmp.lt.s32.totalorder %s19, 5
      %p352 = pnand %p350, %p351
      %p353 = pneg %p352
      // Predicated region
      $region75: #{gprgnn_forward.17} parent=5 // pred_check
        _
      $region76: #{gprgnn_forward.17} parent=5 // pred_check_branch
        %355 = sbr.rel (%p352) target = $region78
      $region77: #{gprgnn_forward.17} parent=5 // pred_region
        %s356 = ssub.s32 %s19, 1
        %s357 = sand.u32 %s119, 1
        %s358 = sand.u32 %s119, 1
        %s359 = smul.addr %s358, 32
        %s360 = scalar_lea.vmem [#allocation4], %s359
        // Predicated region
        $region79: #{gprgnn_forward.17} parent=77 // pred_check
          %p361 = pneg %p132
        $region80: #{gprgnn_forward.17} parent=77 // pred_check_branch
          %363 = sbr.rel (%p361) target = $region82
        $region81: #{gprgnn_forward.17} parent=77 // pred_region
          _
        $region82: #{gprgnn_forward.17} parent=77 // pred_fallthru
          _
        %p364 = pneg %p52
        %p365 = pneg %p49
        %s366 = smul.u32 16, %s28
        %p367 = scmp.lt.s32.totalorder %s366, 31
        %s368 = scalar_select %p367, %s366, 31
        %s369 = smul.addr %s368, 8
        %s370 = scalar_lea.vmem %s1, %s369
        %p371 = pneg %p78
        %p372 = pneg %p75
        %s373 = smul.u32 16, %s29
        %p374 = scmp.lt.s32.totalorder %s373, 31
        %s375 = scalar_select %p374, %s373, 31
        %s376 = smul.addr %s375, 8
        %s377 = scalar_lea.vmem %s2, %s376
        %p378 = pneg %p104
        %p379 = pneg %p101
        %s380 = sand.u32 %s119, 1
        %s381 = sand.u32 %s119, 1
        %s382 = smul.addr %s381, 32
        %s383 = scalar_lea.vmem [#allocation4], %s382
        %p384 = pneg %p132
        %p385 = pneg %p129
        %s386 = smul.u32 16, %s29
        %p387 = scmp.lt.s32.totalorder %s386, 31
        %s388 = scalar_select %p387, %s386, 31
        %s389 = smul.addr %s388, 8
        %s390 = scalar_lea.vmem %s4, %s389
        %p391 = pneg %p158
        %p392 = pneg %p155
        %s393 = smul.u32 16, %s28
        %p394 = scmp.lt.s32.totalorder %s393, 31
        %s395 = scalar_select %p394, %s393, 31
        %s396 = smul.addr %s395, 8
        %s397 = scalar_lea.vmem %s5, %s396
        %p398 = pneg %p184
        %p399 = pneg %p181
        %p400 = pneg %p210
        %p401 = pneg %p207
        %s402 = sand.u32 %s197, 1
        %s403 = scalar_lea.sflag [#allocation6], %s402
        %s404 = sand.u32 %s197, 1
        %s405 = smul.addr %s404, 128
        %s406 = scalar_lea.vmem [#allocation5], %s405
        %p407 = pneg %p236
        %p408 = pneg %p233
        %s409 = smul.u32 16, %s28
        %p410 = scmp.lt.s32.totalorder %s409, 31
        %s411 = scalar_select %p410, %s409, 31
        %s412 = smul.addr %s411, 8
        %s413 = scalar_lea.vmem %s7, %s412
        %s414 = smul.u32 16, %s28
        %p415 = scmp.lt.s32.totalorder %s414, 31
        %s416 = scalar_select %p415, %s414, 31
        %s417 = smul.addr %s416, 8
        %s418 = scalar_lea.vmem %s1, %s417
        %s419 = smul.u32 16, %s28
        %s420 = smul.u32 16, %s29
        %p421 = scmp.lt.s32.totalorder %s420, 31
        %s422 = scalar_select %p421, %s420, 31
        %s423 = smul.addr %s422, 8
        %s424 = scalar_lea.vmem %s2, %s423
        %s425 = smul.u32 16, %s29
        %s426 = smul.u32 4, %s28
        %s427 = smul.u32 16, %s29
        %p428 = scmp.lt.s32.totalorder %s427, 31
        %s429 = scalar_select %p428, %s427, 31
        %s430 = smul.addr %s429, 8
        %s431 = scalar_lea.vmem %s4, %s430
        %s432 = smul.u32 16, %s29
        %s433 = smul.u32 16, %s28
        %p434 = scmp.lt.s32.totalorder %s433, 31
        %s435 = scalar_select %p434, %s433, 31
        %s436 = smul.addr %s435, 8
        %s437 = scalar_lea.vmem %s5, %s436
        %s438 = smul.u32 16, %s28
        %s439 = smul.u32 16, %s28
        %s440 = smul.u32 16, %s28
        %p441 = scmp.lt.s32.totalorder %s440, 31
        %s442 = scalar_select %p441, %s440, 31
        %s443 = smul.addr %s442, 8
        %s444 = scalar_lea.vmem %s7, %s443
        %s445 = smul.u32 16, %s28
        %p447 = scmp.eq.s32.totalorder %s29, 0
        // Predicated region
        $region83: #{gprgnn_forward.17} parent=77 // pred_check
          %p448 = pneg %p447
        $region84: #{gprgnn_forward.17} parent=77 // pred_check_branch
          %450 = sbr.rel (%p448) target = $region86
        $region85: #{gprgnn_forward.17} parent=77 // pred_region
          %vm451 = vcmask 31744
          %452 = vst.msk [vmem:[#allocation2] sm:$0xff] %vm451, 0.0
          %453 = vst.msk [vmem:[#allocation2 + $0x8] sm:$0xff] %vm451, 0.0
          %454 = vst.msk [vmem:[#allocation2 + $0x10] sm:$0xff] %vm451, 0.0
          %455 = vst.msk [vmem:[#allocation2 + $0x18] sm:$0xff] %vm451, 0.0
          %456 = vst.msk [vmem:[#allocation2 + $0x20] sm:$0xff] %vm451, 0.0
          %457 = vst.msk [vmem:[#allocation2 + $0x28] sm:$0xff] %vm451, 0.0
          %458 = vst.msk [vmem:[#allocation2 + $0x30] sm:$0xff] %vm451, 0.0
          %459 = vst.msk [vmem:[#allocation2 + $0x38] sm:$0xff] %vm451, 0.0
          %460 = vst.msk [vmem:[#allocation2 + $0x40] sm:$0xff] %vm451, 0.0
          %461 = vst.msk [vmem:[#allocation2 + $0x48] sm:$0xff] %vm451, 0.0
          %462 = vst.msk [vmem:[#allocation2 + $0x50] sm:$0xff] %vm451, 0.0
          %463 = vst.msk [vmem:[#allocation2 + $0x58] sm:$0xff] %vm451, 0.0
          %464 = vst.msk [vmem:[#allocation2 + $0x60] sm:$0xff] %vm451, 0.0
          %465 = vst.msk [vmem:[#allocation2 + $0x68] sm:$0xff] %vm451, 0.0
          %466 = vst.msk [vmem:[#allocation2 + $0x70] sm:$0xff] %vm451, 0.0
          %467 = vst.msk [vmem:[#allocation2 + $0x78] sm:$0xff] %vm451, 0.0
        $region86: #{gprgnn_forward.17} parent=77 // pred_fallthru
          _
        %v468 = vld [vmem:[%s360] sm:$0xff]
        %v469 = vld [vmem:[%s360 + $0x8] sm:$0xff]
        %v470 = vld [vmem:[%s360 + $0x10] sm:$0xff]
        %v471 = vld [vmem:[%s360 + $0x18] sm:$0xff]
        %v472 = vunpack.c.l.s8.bf16 %v468
        %v473 = vunpack.c.h.s8.bf16 %v468
        %v474 = vunpack.c.l.s8.bf16 %v469
        %v475 = vunpack.c.h.s8.bf16 %v469
        %v476 = vunpack.c.l.s8.bf16 %v470
        %v477 = vunpack.c.h.s8.bf16 %v470
        %v478 = vunpack.c.l.s8.bf16 %v471
        %v479 = vunpack.c.h.s8.bf16 %v471
        %v480 = vld [vmem:[%s431] sm:$0xff]
        %v481 = vld [vmem:[%s431 + $0x8] sm:$0xff]
        %v482 = vld [vmem:[%s431 + $0x10] sm:$0xff]
        %v483 = vld [vmem:[%s431 + $0x18] sm:$0xff]
        %v484 = vld [vmem:[%s431 + $0x20] sm:$0xff]
        %v485 = vld [vmem:[%s431 + $0x28] sm:$0xff]
        %v486 = vld [vmem:[%s431 + $0x30] sm:$0xff]
        %v487 = vld [vmem:[%s431 + $0x38] sm:$0xff]
        %v488 = vld [vmem:[%s431 + $0x40] sm:$0xff]
        %v489 = vld [vmem:[%s431 + $0x48] sm:$0xff]
        %v490 = vld [vmem:[%s431 + $0x50] sm:$0xff]
        %v491 = vld [vmem:[%s431 + $0x58] sm:$0xff]
        %v492 = vld [vmem:[%s431 + $0x60] sm:$0xff]
        %v493 = vld [vmem:[%s431 + $0x68] sm:$0xff]
        %v494 = vld [vmem:[%s431 + $0x70] sm:$0xff]
        %v495 = vld [vmem:[%s431 + $0x78] sm:$0xff]
        %v496 = vld [vmem:[%s424] sm:$0xff]
        %v497 = vld [vmem:[%s424 + $0x8] sm:$0xff]
        %v498 = vld [vmem:[%s424 + $0x10] sm:$0xff]
        %v499 = vld [vmem:[%s424 + $0x18] sm:$0xff]
        %v500 = vld [vmem:[%s424 + $0x20] sm:$0xff]
        %v501 = vld [vmem:[%s424 + $0x28] sm:$0xff]
        %v502 = vld [vmem:[%s424 + $0x30] sm:$0xff]
        %v503 = vld [vmem:[%s424 + $0x38] sm:$0xff]
        %v504 = vld [vmem:[%s424 + $0x40] sm:$0xff]
        %v505 = vld [vmem:[%s424 + $0x48] sm:$0xff]
        %v506 = vld [vmem:[%s424 + $0x50] sm:$0xff]
        %v507 = vld [vmem:[%s424 + $0x58] sm:$0xff]
        %v508 = vld [vmem:[%s424 + $0x60] sm:$0xff]
        %v509 = vld [vmem:[%s424 + $0x68] sm:$0xff]
        %v510 = vld [vmem:[%s424 + $0x70] sm:$0xff]
        %v511 = vld [vmem:[%s424 + $0x78] sm:$0xff]
        %513 = vset.pattern.permute.xlu0 0
        %514 = vperm.xlu0 %513, %v496
        %v515 = vpop.permute.xlu0 %514
        %518 = vset.pattern.permute.xlu0 0
        %519 = vperm.xlu0 %518, %v497
        %v520 = vpop.permute.xlu0 %519
        %523 = vset.pattern.permute.xlu0 0
        %524 = vperm.xlu0 %523, %v498
        %v525 = vpop.permute.xlu0 %524
        %528 = vset.pattern.permute.xlu0 0
        %529 = vperm.xlu0 %528, %v499
        %v530 = vpop.permute.xlu0 %529
        %533 = vset.pattern.permute.xlu0 0
        %534 = vperm.xlu0 %533, %v500
        %v535 = vpop.permute.xlu0 %534
        %538 = vset.pattern.permute.xlu0 0
        %539 = vperm.xlu0 %538, %v501
        %v540 = vpop.permute.xlu0 %539
        %543 = vset.pattern.permute.xlu0 0
        %544 = vperm.xlu0 %543, %v502
        %v545 = vpop.permute.xlu0 %544
        %548 = vset.pattern.permute.xlu0 0
        %549 = vperm.xlu0 %548, %v503
        %v550 = vpop.permute.xlu0 %549
        %553 = vset.pattern.permute.xlu0 0
        %554 = vperm.xlu0 %553, %v504
        %v555 = vpop.permute.xlu0 %554
        %558 = vset.pattern.permute.xlu0 0
        %559 = vperm.xlu0 %558, %v505
        %v560 = vpop.permute.xlu0 %559
        %563 = vset.pattern.permute.xlu0 0
        %564 = vperm.xlu0 %563, %v506
        %v565 = vpop.permute.xlu0 %564
        %568 = vset.pattern.permute.xlu0 0
        %569 = vperm.xlu0 %568, %v507
        %v570 = vpop.permute.xlu0 %569
        %573 = vset.pattern.permute.xlu0 0
        %574 = vperm.xlu0 %573, %v508
        %v575 = vpop.permute.xlu0 %574
        %578 = vset.pattern.permute.xlu0 0
        %579 = vperm.xlu0 %578, %v509
        %v580 = vpop.permute.xlu0 %579
        %583 = vset.pattern.permute.xlu0 0
        %584 = vperm.xlu0 %583, %v510
        %v585 = vpop.permute.xlu0 %584
        %588 = vset.pattern.permute.xlu0 0
        %589 = vperm.xlu0 %588, %v511
        %v590 = vpop.permute.xlu0 %589
        %v592 = vmul.f32 %v480, %v515
        %v593 = vmul.f32 %v481, %v520
        %v594 = vmul.f32 %v482, %v525
        %v595 = vmul.f32 %v483, %v530
        %v596 = vmul.f32 %v484, %v535
        %v597 = vmul.f32 %v485, %v540
        %v598 = vmul.f32 %v486, %v545
        %v599 = vmul.f32 %v487, %v550
        %v600 = vmul.f32 %v488, %v555
        %v601 = vmul.f32 %v489, %v560
        %v602 = vmul.f32 %v490, %v565
        %v603 = vmul.f32 %v491, %v570
        %v604 = vmul.f32 %v492, %v575
        %v605 = vmul.f32 %v493, %v580
        %v606 = vmul.f32 %v494, %v585
        %v607 = vmul.f32 %v495, %v590
        %v608 = vpack.c.bf16 %v593, %v592
        %v609 = vpack.c.bf16 %v595, %v594
        %v610 = vpack.c.bf16 %v597, %v596
        %v611 = vpack.c.bf16 %v599, %v598
        %v612 = vpack.c.bf16 %v601, %v600
        %v613 = vpack.c.bf16 %v603, %v602
        %v614 = vpack.c.bf16 %v605, %v604
        %v615 = vpack.c.bf16 %v607, %v606
        %v616 = vld [vmem:[#allocation2] sm:$0xff]
        %v617 = vld [vmem:[#allocation2 + $0x8] sm:$0xff]
        %v618 = vld [vmem:[#allocation2 + $0x10] sm:$0xff]
        %v619 = vld [vmem:[#allocation2 + $0x18] sm:$0xff]
        %v620 = vld [vmem:[#allocation2 + $0x20] sm:$0xff]
        %v621 = vld [vmem:[#allocation2 + $0x28] sm:$0xff]
        %v622 = vld [vmem:[#allocation2 + $0x30] sm:$0xff]
        %v623 = vld [vmem:[#allocation2 + $0x38] sm:$0xff]
        %v624 = vld [vmem:[#allocation2 + $0x40] sm:$0xff]
        %v625 = vld [vmem:[#allocation2 + $0x48] sm:$0xff]
        %v626 = vld [vmem:[#allocation2 + $0x50] sm:$0xff]
        %v627 = vld [vmem:[#allocation2 + $0x58] sm:$0xff]
        %v628 = vld [vmem:[#allocation2 + $0x60] sm:$0xff]
        %v629 = vld [vmem:[#allocation2 + $0x68] sm:$0xff]
        %v630 = vld [vmem:[#allocation2 + $0x70] sm:$0xff]
        %v631 = vld [vmem:[#allocation2 + $0x78] sm:$0xff]
        %632 = vmatprep.subr.bf16.mxu0 0
        %633 = vmatpush1.bf16.msra.mxu0 %v608
        %634 = vmatprep.subr.bf16.mxu0 0
        %635 = vmatpush1.bf16.msra.mxu0 %v609
        %636 = vmatprep.subr.bf16.mxu0 0
        %637 = vmatpush1.bf16.msra.mxu0 %v610
        %638 = vmatprep.subr.bf16.mxu0 0
        %639 = vmatpush1.bf16.msra.mxu0 %v611
        %640 = vmatprep.subr.bf16.mxu0 0
        %641 = vmatpush1.bf16.msra.mxu0 %v612
        %642 = vmatprep.subr.bf16.mxu0 0
        %643 = vmatpush1.bf16.msra.mxu0 %v613
        %644 = vmatprep.subr.bf16.mxu0 0
        %645 = vmatpush1.bf16.msra.mxu0 %v614
        %646 = vmatprep.subr.bf16.mxu0 0
        %647 = vmatpush1.bf16.msra.mxu0 %v615
        %648 = vmatprep.subr.bf16.mxu0 0
        %649 = vmatpush1.bf16.msra.mxu0 0
        %650 = vmatprep.subr.bf16.mxu0 0
        %651 = vmatpush1.bf16.msra.mxu0 0
        %652 = vmatprep.subr.bf16.mxu0 0
        %653 = vmatpush1.bf16.msra.mxu0 0
        %654 = vmatprep.subr.bf16.mxu0 0
        %655 = vmatpush1.bf16.msra.mxu0 0
        %656 = vmatprep.subr.bf16.mxu0 0
        %657 = vmatpush1.bf16.msra.mxu0 0
        %658 = vmatprep.subr.bf16.mxu0 0
        %659 = vmatpush1.bf16.msra.mxu0 0
        %660 = vmatprep.subr.bf16.mxu0 0
        %661 = vmatpush1.bf16.msra.mxu0 0
        %662 = vmatprep.subr.bf16.mxu0 0
        %663 = vmatpush1.bf16.msra.mxu0 0
        %664 = vmatprep.mubr.bf16.mxu0 0
        %665 = vmatmul.mubr.bf16.gmra.mrb[0].mxu0 %v472
        %v666 = vpop.f32.mrb[0].mxu0
        %v667 = vadd.f32 0.0, %v666
        %v668 = vpop.f32.mrb[0].mxu0
        %v669 = vpop.f32.mrb[0].mxu0
        %v670 = vadd.f32 0.0, %v669
        %v671 = vpop.f32.mrb[0].mxu0
        %672 = vmatprep.mubr.bf16.mxu0 0
        %673 = vmatmul.mubr.bf16.gmra.mrb[0].mxu0 %v473
        %v674 = vpop.f32.mrb[0].mxu0
        %v675 = vadd.f32 0.0, %v674
        %v676 = vpop.f32.mrb[0].mxu0
        %v677 = vpop.f32.mrb[0].mxu0
        %v678 = vadd.f32 0.0, %v677
        %v679 = vpop.f32.mrb[0].mxu0
        %680 = vmatprep.mubr.bf16.mxu0 0
        %681 = vmatmul.mubr.bf16.gmra.mrb[0].mxu0 %v474
        %v682 = vpop.f32.mrb[0].mxu0
        %v683 = vadd.f32 0.0, %v682
        %v684 = vpop.f32.mrb[0].mxu0
        %v685 = vpop.f32.mrb[0].mxu0
        %v686 = vadd.f32 0.0, %v685
        %v687 = vpop.f32.mrb[0].mxu0
        %688 = vmatprep.mubr.bf16.mxu0 0
        %689 = vmatmul.mubr.bf16.gmra.mrb[0].mxu0 %v475
        %v690 = vpop.f32.mrb[0].mxu0
        %v691 = vadd.f32 0.0, %v690
        %v692 = vpop.f32.mrb[0].mxu0
        %v693 = vpop.f32.mrb[0].mxu0
        %v694 = vadd.f32 0.0, %v693
        %v695 = vpop.f32.mrb[0].mxu0
        %696 = vmatprep.mubr.bf16.mxu0 0
        %697 = vmatmul.mubr.bf16.gmra.mrb[0].mxu0 %v476
        %v698 = vpop.f32.mrb[0].mxu0
        %v699 = vadd.f32 0.0, %v698
        %v700 = vpop.f32.mrb[0].mxu0
        %v701 = vpop.f32.mrb[0].mxu0
        %v702 = vadd.f32 0.0, %v701
        %v703 = vpop.f32.mrb[0].mxu0
        %704 = vmatprep.mubr.bf16.mxu0 0
        %705 = vmatmul.mubr.bf16.gmra.mrb[0].mxu0 %v477
        %v706 = vpop.f32.mrb[0].mxu0
        %v707 = vadd.f32 0.0, %v706
        %v708 = vpop.f32.mrb[0].mxu0
        %v709 = vpop.f32.mrb[0].mxu0
        %v710 = vadd.f32 0.0, %v709
        %v711 = vpop.f32.mrb[0].mxu0
        %712 = vmatprep.mubr.bf16.mxu0 0
        %713 = vmatmul.mubr.bf16.gmra.mrb[0].mxu0 %v478
        %v714 = vpop.f32.mrb[0].mxu0
        %v715 = vadd.f32 0.0, %v714
        %v716 = vpop.f32.mrb[0].mxu0
        %v717 = vpop.f32.mrb[0].mxu0
        %v718 = vadd.f32 0.0, %v717
        %v719 = vpop.f32.mrb[0].mxu0
        %720 = vmatprep.mubr.bf16.mxu0 0
        %721 = vmatmul.mubr.bf16.gmra.mrb[0].mxu0 %v479
        %v722 = vpop.f32.mrb[0].mxu0
        %v723 = vadd.f32 0.0, %v722
        %v724 = vpop.f32.mrb[0].mxu0
        %v725 = vpop.f32.mrb[0].mxu0
        %v726 = vadd.f32 0.0, %v725
        %v727 = vpop.f32.mrb[0].mxu0
        %728 = vdwg.mxu0
        %v729 = vadd.f32 %v616, %v667
        %v730 = vadd.f32 %v617, %v670
        %v731 = vadd.f32 %v618, %v675
        %v732 = vadd.f32 %v619, %v678
        %v733 = vadd.f32 %v620, %v683
        %v734 = vadd.f32 %v621, %v686
        %v735 = vadd.f32 %v622, %v691
        %v736 = vadd.f32 %v623, %v694
        %v737 = vadd.f32 %v624, %v699
        %v738 = vadd.f32 %v625, %v702
        %v739 = vadd.f32 %v626, %v707
        %v740 = vadd.f32 %v627, %v710
        %v741 = vadd.f32 %v628, %v715
        %v742 = vadd.f32 %v629, %v718
        %v743 = vadd.f32 %v630, %v723
        %v744 = vadd.f32 %v631, %v726
        %vm745 = vcmask 31744
        %746 = vst.msk [vmem:[#allocation2] sm:$0xff] %vm745, %v729
        %747 = vst.msk [vmem:[#allocation2 + $0x8] sm:$0xff] %vm745, %v730
        %748 = vst.msk [vmem:[#allocation2 + $0x10] sm:$0xff] %vm745, %v731
        %749 = vst.msk [vmem:[#allocation2 + $0x18] sm:$0xff] %vm745, %v732
        %750 = vst.msk [vmem:[#allocation2 + $0x20] sm:$0xff] %vm745, %v733
        %751 = vst.msk [vmem:[#allocation2 + $0x28] sm:$0xff] %vm745, %v734
        %752 = vst.msk [vmem:[#allocation2 + $0x30] sm:$0xff] %vm745, %v735
        %753 = vst.msk [vmem:[#allocation2 + $0x38] sm:$0xff] %vm745, %v736
        %754 = vst.msk [vmem:[#allocation2 + $0x40] sm:$0xff] %vm745, %v737
        %755 = vst.msk [vmem:[#allocation2 + $0x48] sm:$0xff] %vm745, %v738
        %756 = vst.msk [vmem:[#allocation2 + $0x50] sm:$0xff] %vm745, %v739
        %757 = vst.msk [vmem:[#allocation2 + $0x58] sm:$0xff] %vm745, %v740
        %758 = vst.msk [vmem:[#allocation2 + $0x60] sm:$0xff] %vm745, %v741
        %759 = vst.msk [vmem:[#allocation2 + $0x68] sm:$0xff] %vm745, %v742
        %760 = vst.msk [vmem:[#allocation2 + $0x70] sm:$0xff] %vm745, %v743
        %761 = vst.msk [vmem:[#allocation2 + $0x78] sm:$0xff] %vm745, %v744
        %p762 = scmp.eq.s32.totalorder %s29, 1
        // Predicated region
        $region87: #{gprgnn_forward.17} parent=77 // pred_check
          %p763 = pneg %p762
        $region88: #{gprgnn_forward.17} parent=77 // pred_check_branch
          %765 = sbr.rel (%p763) target = $region90
        $region89: #{gprgnn_forward.17} parent=77 // pred_region
          %v766 = vld [vmem:[#allocation2] sm:$0xff]
          %v767 = vld [vmem:[#allocation2 + $0x8] sm:$0xff]
          %v768 = vld [vmem:[#allocation2 + $0x10] sm:$0xff]
          %v769 = vld [vmem:[#allocation2 + $0x18] sm:$0xff]
          %v770 = vld [vmem:[#allocation2 + $0x20] sm:$0xff]
          %v771 = vld [vmem:[#allocation2 + $0x28] sm:$0xff]
          %v772 = vld [vmem:[#allocation2 + $0x30] sm:$0xff]
          %v773 = vld [vmem:[#allocation2 + $0x38] sm:$0xff]
          %v774 = vld [vmem:[#allocation2 + $0x40] sm:$0xff]
          %v775 = vld [vmem:[#allocation2 + $0x48] sm:$0xff]
          %v776 = vld [vmem:[#allocation2 + $0x50] sm:$0xff]
          %v777 = vld [vmem:[#allocation2 + $0x58] sm:$0xff]
          %v778 = vld [vmem:[#allocation2 + $0x60] sm:$0xff]
          %v779 = vld [vmem:[#allocation2 + $0x68] sm:$0xff]
          %v780 = vld [vmem:[#allocation2 + $0x70] sm:$0xff]
          %v781 = vld [vmem:[#allocation2 + $0x78] sm:$0xff]
          %v782 = vld [vmem:[%s418] sm:$0xff]
          %v783 = vld [vmem:[%s418 + $0x8] sm:$0xff]
          %v784 = vld [vmem:[%s418 + $0x10] sm:$0xff]
          %v785 = vld [vmem:[%s418 + $0x18] sm:$0xff]
          %v786 = vld [vmem:[%s418 + $0x20] sm:$0xff]
          %v787 = vld [vmem:[%s418 + $0x28] sm:$0xff]
          %v788 = vld [vmem:[%s418 + $0x30] sm:$0xff]
          %v789 = vld [vmem:[%s418 + $0x38] sm:$0xff]
          %v790 = vld [vmem:[%s418 + $0x40] sm:$0xff]
          %v791 = vld [vmem:[%s418 + $0x48] sm:$0xff]
          %v792 = vld [vmem:[%s418 + $0x50] sm:$0xff]
          %v793 = vld [vmem:[%s418 + $0x58] sm:$0xff]
          %v794 = vld [vmem:[%s418 + $0x60] sm:$0xff]
          %v795 = vld [vmem:[%s418 + $0x68] sm:$0xff]
          %v796 = vld [vmem:[%s418 + $0x70] sm:$0xff]
          %v797 = vld [vmem:[%s418 + $0x78] sm:$0xff]
          %799 = vset.pattern.permute.xlu0 0
          %800 = vperm.xlu0 %799, %v782
          %v801 = vpop.permute.xlu0 %800
          %804 = vset.pattern.permute.xlu0 0
          %805 = vperm.xlu0 %804, %v783
          %v806 = vpop.permute.xlu0 %805
          %809 = vset.pattern.permute.xlu0 0
          %810 = vperm.xlu0 %809, %v784
          %v811 = vpop.permute.xlu0 %810
          %814 = vset.pattern.permute.xlu0 0
          %815 = vperm.xlu0 %814, %v785
          %v816 = vpop.permute.xlu0 %815
          %819 = vset.pattern.permute.xlu0 0
          %820 = vperm.xlu0 %819, %v786
          %v821 = vpop.permute.xlu0 %820
          %824 = vset.pattern.permute.xlu0 0
          %825 = vperm.xlu0 %824, %v787
          %v826 = vpop.permute.xlu0 %825
          %829 = vset.pattern.permute.xlu0 0
          %830 = vperm.xlu0 %829, %v788
          %v831 = vpop.permute.xlu0 %830
          %834 = vset.pattern.permute.xlu0 0
          %835 = vperm.xlu0 %834, %v789
          %v836 = vpop.permute.xlu0 %835
          %839 = vset.pattern.permute.xlu0 0
          %840 = vperm.xlu0 %839, %v790
          %v841 = vpop.permute.xlu0 %840
          %844 = vset.pattern.permute.xlu0 0
          %845 = vperm.xlu0 %844, %v791
          %v846 = vpop.permute.xlu0 %845
          %849 = vset.pattern.permute.xlu0 0
          %850 = vperm.xlu0 %849, %v792
          %v851 = vpop.permute.xlu0 %850
          %854 = vset.pattern.permute.xlu0 0
          %855 = vperm.xlu0 %854, %v793
          %v856 = vpop.permute.xlu0 %855
          %859 = vset.pattern.permute.xlu0 0
          %860 = vperm.xlu0 %859, %v794
          %v861 = vpop.permute.xlu0 %860
          %864 = vset.pattern.permute.xlu0 0
          %865 = vperm.xlu0 %864, %v795
          %v866 = vpop.permute.xlu0 %865
          %869 = vset.pattern.permute.xlu0 0
          %870 = vperm.xlu0 %869, %v796
          %v871 = vpop.permute.xlu0 %870
          %874 = vset.pattern.permute.xlu0 0
          %875 = vperm.xlu0 %874, %v797
          %v876 = vpop.permute.xlu0 %875
          %v878 = vmul.f32 %v766, %v801
          %v879 = vmul.f32 %v767, %v806
          %v880 = vmul.f32 %v768, %v811
          %v881 = vmul.f32 %v769, %v816
          %v882 = vmul.f32 %v770, %v821
          %v883 = vmul.f32 %v771, %v826
          %v884 = vmul.f32 %v772, %v831
          %v885 = vmul.f32 %v773, %v836
          %v886 = vmul.f32 %v774, %v841
          %v887 = vmul.f32 %v775, %v846
          %v888 = vmul.f32 %v776, %v851
          %v889 = vmul.f32 %v777, %v856
          %v890 = vmul.f32 %v778, %v861
          %v891 = vmul.f32 %v779, %v866
          %v892 = vmul.f32 %v780, %v871
          %v893 = vmul.f32 %v781, %v876
          %894 = vst.msk [vmem:[%s406] sm:$0xff] %vm745, %v878
          %895 = vst.msk [vmem:[%s406 + $0x8] sm:$0xff] %vm745, %v879
          %896 = vst.msk [vmem:[%s406 + $0x10] sm:$0xff] %vm745, %v880
          %897 = vst.msk [vmem:[%s406 + $0x18] sm:$0xff] %vm745, %v881
          %898 = vst.msk [vmem:[%s406 + $0x20] sm:$0xff] %vm745, %v882
          %899 = vst.msk [vmem:[%s406 + $0x28] sm:$0xff] %vm745, %v883
          %900 = vst.msk [vmem:[%s406 + $0x30] sm:$0xff] %vm745, %v884
          %901 = vst.msk [vmem:[%s406 + $0x38] sm:$0xff] %vm745, %v885
          %902 = vst.msk [vmem:[%s406 + $0x40] sm:$0xff] %vm745, %v886
          %903 = vst.msk [vmem:[%s406 + $0x48] sm:$0xff] %vm745, %v887
          %904 = vst.msk [vmem:[%s406 + $0x50] sm:$0xff] %vm745, %v888
          %905 = vst.msk [vmem:[%s406 + $0x58] sm:$0xff] %vm745, %v889
          %906 = vst.msk [vmem:[%s406 + $0x60] sm:$0xff] %vm745, %v890
          %907 = vst.msk [vmem:[%s406 + $0x68] sm:$0xff] %vm745, %v891
          %908 = vst.msk [vmem:[%s406 + $0x70] sm:$0xff] %vm745, %v892
          %909 = vst.msk [vmem:[%s406 + $0x78] sm:$0xff] %vm745, %v893
          %v910 = vld [vmem:[%s437] sm:$0xff]
          %v911 = vld [vmem:[%s437 + $0x8] sm:$0xff]
          %v912 = vld [vmem:[%s437 + $0x10] sm:$0xff]
          %v913 = vld [vmem:[%s437 + $0x18] sm:$0xff]
          %v914 = vld [vmem:[%s437 + $0x20] sm:$0xff]
          %v915 = vld [vmem:[%s437 + $0x28] sm:$0xff]
          %v916 = vld [vmem:[%s437 + $0x30] sm:$0xff]
          %v917 = vld [vmem:[%s437 + $0x38] sm:$0xff]
          %v918 = vld [vmem:[%s437 + $0x40] sm:$0xff]
          %v919 = vld [vmem:[%s437 + $0x48] sm:$0xff]
          %v920 = vld [vmem:[%s437 + $0x50] sm:$0xff]
          %v921 = vld [vmem:[%s437 + $0x58] sm:$0xff]
          %v922 = vld [vmem:[%s437 + $0x60] sm:$0xff]
          %v923 = vld [vmem:[%s437 + $0x68] sm:$0xff]
          %v924 = vld [vmem:[%s437 + $0x70] sm:$0xff]
          %v925 = vld [vmem:[%s437 + $0x78] sm:$0xff]
          %v926 = vld [vmem:[#allocation3] sm:$0x1]
          %v928 = vlaneseq
          %v929 = vshrl.u32 %v928, 7
          %v930 = vsub.s32 0, %v929
          %v931 = vrot.slane %v926, %v930
          %932 = vset.pattern.permute.xlu0 0
          %933 = vperm.xlu0 %932, %v931
          %v934 = vpop.permute.xlu0 %933
          %v936 = vmul.f32 %v934, %v878
          %v937 = vmul.f32 %v934, %v879
          %v938 = vmul.f32 %v934, %v880
          %v939 = vmul.f32 %v934, %v881
          %v940 = vmul.f32 %v934, %v882
          %v941 = vmul.f32 %v934, %v883
          %v942 = vmul.f32 %v934, %v884
          %v943 = vmul.f32 %v934, %v885
          %v944 = vmul.f32 %v934, %v886
          %v945 = vmul.f32 %v934, %v887
          %v946 = vmul.f32 %v934, %v888
          %v947 = vmul.f32 %v934, %v889
          %v948 = vmul.f32 %v934, %v890
          %v949 = vmul.f32 %v934, %v891
          %v950 = vmul.f32 %v934, %v892
          %v951 = vmul.f32 %v934, %v893
          %v952 = vadd.f32 %v910, %v936
          %v953 = vadd.f32 %v911, %v937
          %v954 = vadd.f32 %v912, %v938
          %v955 = vadd.f32 %v913, %v939
          %v956 = vadd.f32 %v914, %v940
          %v957 = vadd.f32 %v915, %v941
          %v958 = vadd.f32 %v916, %v942
          %v959 = vadd.f32 %v917, %v943
          %v960 = vadd.f32 %v918, %v944
          %v961 = vadd.f32 %v919, %v945
          %v962 = vadd.f32 %v920, %v946
          %v963 = vadd.f32 %v921, %v947
          %v964 = vadd.f32 %v922, %v948
          %v965 = vadd.f32 %v923, %v949
          %v966 = vadd.f32 %v924, %v950
          %v967 = vadd.f32 %v925, %v951
          %v968 = vsel %vm745, %v952, -inf
          %969 = vmax.xlane.f32.xlu0 %v968
          %v970 = vpop.xlane.xlu0 %969
          %v971 = vsel %vm745, %v953, -inf
          %972 = vmax.xlane.f32.xlu0 %v971
          %v973 = vpop.xlane.xlu0 %972
          %v974 = vsel %vm745, %v954, -inf
          %975 = vmax.xlane.f32.xlu0 %v974
          %v976 = vpop.xlane.xlu0 %975
          %v977 = vsel %vm745, %v955, -inf
          %978 = vmax.xlane.f32.xlu0 %v977
          %v979 = vpop.xlane.xlu0 %978
          %v980 = vsel %vm745, %v956, -inf
          %981 = vmax.xlane.f32.xlu0 %v980
          %v982 = vpop.xlane.xlu0 %981
          %v983 = vsel %vm745, %v957, -inf
          %984 = vmax.xlane.f32.xlu0 %v983
          %v985 = vpop.xlane.xlu0 %984
          %v986 = vsel %vm745, %v958, -inf
          %987 = vmax.xlane.f32.xlu0 %v986
          %v988 = vpop.xlane.xlu0 %987
          %v989 = vsel %vm745, %v959, -inf
          %990 = vmax.xlane.f32.xlu0 %v989
          %v991 = vpop.xlane.xlu0 %990
          %v992 = vsel %vm745, %v960, -inf
          %993 = vmax.xlane.f32.xlu0 %v992
          %v994 = vpop.xlane.xlu0 %993
          %v995 = vsel %vm745, %v961, -inf
          %996 = vmax.xlane.f32.xlu0 %v995
          %v997 = vpop.xlane.xlu0 %996
          %v998 = vsel %vm745, %v962, -inf
          %999 = vmax.xlane.f32.xlu0 %v998
          %v1000 = vpop.xlane.xlu0 %999
          %v1001 = vsel %vm745, %v963, -inf
          %1002 = vmax.xlane.f32.xlu0 %v1001
          %v1003 = vpop.xlane.xlu0 %1002
          %v1004 = vsel %vm745, %v964, -inf
          %1005 = vmax.xlane.f32.xlu0 %v1004
          %v1006 = vpop.xlane.xlu0 %1005
          %v1007 = vsel %vm745, %v965, -inf
          %1008 = vmax.xlane.f32.xlu0 %v1007
          %v1009 = vpop.xlane.xlu0 %1008
          %v1010 = vsel %vm745, %v966, -inf
          %1011 = vmax.xlane.f32.xlu0 %v1010
          %v1012 = vpop.xlane.xlu0 %1011
          %v1013 = vsel %vm745, %v967, -inf
          %1014 = vmax.xlane.f32.xlu0 %v1013
          %v1015 = vpop.xlane.xlu0 %1014
          %v1016 = vsub.f32 %v952, %v970
          %v1017 = vsub.f32 %v953, %v973
          %v1018 = vsub.f32 %v954, %v976
          %v1019 = vsub.f32 %v955, %v979
          %v1020 = vsub.f32 %v956, %v982
          %v1021 = vsub.f32 %v957, %v985
          %v1022 = vsub.f32 %v958, %v988
          %v1023 = vsub.f32 %v959, %v991
          %v1024 = vsub.f32 %v960, %v994
          %v1025 = vsub.f32 %v961, %v997
          %v1026 = vsub.f32 %v962, %v1000
          %v1027 = vsub.f32 %v963, %v1003
          %v1028 = vsub.f32 %v964, %v1006
          %v1029 = vsub.f32 %v965, %v1009
          %v1030 = vsub.f32 %v966, %v1012
          %v1031 = vsub.f32 %v967, %v1015
          %v1032 = vmul.f32 %v1016, 1.442695
          %v1033 = vpow.pop %v1032
          %v1034 = vmul.f32 %v1017, 1.442695
          %v1035 = vpow.pop %v1034
          %v1036 = vmul.f32 %v1018, 1.442695
          %v1037 = vpow.pop %v1036
          %v1038 = vmul.f32 %v1019, 1.442695
          %v1039 = vpow.pop %v1038
          %v1040 = vmul.f32 %v1020, 1.442695
          %v1041 = vpow.pop %v1040
          %v1042 = vmul.f32 %v1021, 1.442695
          %v1043 = vpow.pop %v1042
          %v1044 = vmul.f32 %v1022, 1.442695
          %v1045 = vpow.pop %v1044
          %v1046 = vmul.f32 %v1023, 1.442695
          %v1047 = vpow.pop %v1046
          %v1048 = vmul.f32 %v1024, 1.442695
          %v1049 = vpow.pop %v1048
          %v1050 = vmul.f32 %v1025, 1.442695
          %v1051 = vpow.pop %v1050
          %v1052 = vmul.f32 %v1026, 1.442695
          %v1053 = vpow.pop %v1052
          %v1054 = vmul.f32 %v1027, 1.442695
          %v1055 = vpow.pop %v1054
          %v1056 = vmul.f32 %v1028, 1.442695
          %v1057 = vpow.pop %v1056
          %v1058 = vmul.f32 %v1029, 1.442695
          %v1059 = vpow.pop %v1058
          %v1060 = vmul.f32 %v1030, 1.442695
          %v1061 = vpow.pop %v1060
          %v1062 = vmul.f32 %v1031, 1.442695
          %v1063 = vpow.pop %v1062
          %v1064 = vsel %vm745, %v1033, 0.0
          %1065 = vadd.xlane.f32.xlu0 %v1064
          %v1066 = vpop.xlane.xlu0 %1065
          %v1067 = vsel %vm745, %v1035, 0.0
          %1068 = vadd.xlane.f32.xlu0 %v1067
          %v1069 = vpop.xlane.xlu0 %1068
          %v1070 = vsel %vm745, %v1037, 0.0
          %1071 = vadd.xlane.f32.xlu0 %v1070
          %v1072 = vpop.xlane.xlu0 %1071
          %v1073 = vsel %vm745, %v1039, 0.0
          %1074 = vadd.xlane.f32.xlu0 %v1073
          %v1075 = vpop.xlane.xlu0 %1074
          %v1076 = vsel %vm745, %v1041, 0.0
          %1077 = vadd.xlane.f32.xlu0 %v1076
          %v1078 = vpop.xlane.xlu0 %1077
          %v1079 = vsel %vm745, %v1043, 0.0
          %1080 = vadd.xlane.f32.xlu0 %v1079
          %v1081 = vpop.xlane.xlu0 %1080
          %v1082 = vsel %vm745, %v1045, 0.0
          %1083 = vadd.xlane.f32.xlu0 %v1082
          %v1084 = vpop.xlane.xlu0 %1083
          %v1085 = vsel %vm745, %v1047, 0.0
          %1086 = vadd.xlane.f32.xlu0 %v1085
          %v1087 = vpop.xlane.xlu0 %1086
          %v1088 = vsel %vm745, %v1049, 0.0
          %1089 = vadd.xlane.f32.xlu0 %v1088
          %v1090 = vpop.xlane.xlu0 %1089
          %v1091 = vsel %vm745, %v1051, 0.0
          %1092 = vadd.xlane.f32.xlu0 %v1091
          %v1093 = vpop.xlane.xlu0 %1092
          %v1094 = vsel %vm745, %v1053, 0.0
          %1095 = vadd.xlane.f32.xlu0 %v1094
          %v1096 = vpop.xlane.xlu0 %1095
          %v1097 = vsel %vm745, %v1055, 0.0
          %1098 = vadd.xlane.f32.xlu0 %v1097
          %v1099 = vpop.xlane.xlu0 %1098
          %v1100 = vsel %vm745, %v1057, 0.0
          %1101 = vadd.xlane.f32.xlu0 %v1100
          %v1102 = vpop.xlane.xlu0 %1101
          %v1103 = vsel %vm745, %v1059, 0.0
          %1104 = vadd.xlane.f32.xlu0 %v1103
          %v1105 = vpop.xlane.xlu0 %1104
          %v1106 = vsel %vm745, %v1061, 0.0
          %1107 = vadd.xlane.f32.xlu0 %v1106
          %v1108 = vpop.xlane.xlu0 %1107
          %v1109 = vsel %vm745, %v1063, 0.0
          %1110 = vadd.xlane.f32.xlu0 %v1109
          %v1111 = vpop.xlane.xlu0 %1110
          %v1112 = vlog2.pop %v1066
          %v1113 = vmul.f32 %v1112, 0.6931472
          %v1114 = vlog2.pop %v1069
          %v1115 = vmul.f32 %v1114, 0.6931472
          %v1116 = vlog2.pop %v1072
          %v1117 = vmul.f32 %v1116, 0.6931472
          %v1118 = vlog2.pop %v1075
          %v1119 = vmul.f32 %v1118, 0.6931472
          %v1120 = vlog2.pop %v1078
          %v1121 = vmul.f32 %v1120, 0.6931472
          %v1122 = vlog2.pop %v1081
          %v1123 = vmul.f32 %v1122, 0.6931472
          %v1124 = vlog2.pop %v1084
          %v1125 = vmul.f32 %v1124, 0.6931472
          %v1126 = vlog2.pop %v1087
          %v1127 = vmul.f32 %v1126, 0.6931472
          %v1128 = vlog2.pop %v1090
          %v1129 = vmul.f32 %v1128, 0.6931472
          %v1130 = vlog2.pop %v1093
          %v1131 = vmul.f32 %v1130, 0.6931472
          %v1132 = vlog2.pop %v1096
          %v1133 = vmul.f32 %v1132, 0.6931472
          %v1134 = vlog2.pop %v1099
          %v1135 = vmul.f32 %v1134, 0.6931472
          %v1136 = vlog2.pop %v1102
          %v1137 = vmul.f32 %v1136, 0.6931472
          %v1138 = vlog2.pop %v1105
          %v1139 = vmul.f32 %v1138, 0.6931472
          %v1140 = vlog2.pop %v1108
          %v1141 = vmul.f32 %v1140, 0.6931472
          %v1142 = vlog2.pop %v1111
          %v1143 = vmul.f32 %v1142, 0.6931472
          %v1144 = vsub.f32 %v1016, %v1113
          %v1145 = vsub.f32 %v1017, %v1115
          %v1146 = vsub.f32 %v1018, %v1117
          %v1147 = vsub.f32 %v1019, %v1119
          %v1148 = vsub.f32 %v1020, %v1121
          %v1149 = vsub.f32 %v1021, %v1123
          %v1150 = vsub.f32 %v1022, %v1125
          %v1151 = vsub.f32 %v1023, %v1127
          %v1152 = vsub.f32 %v1024, %v1129
          %v1153 = vsub.f32 %v1025, %v1131
          %v1154 = vsub.f32 %v1026, %v1133
          %v1155 = vsub.f32 %v1027, %v1135
          %v1156 = vsub.f32 %v1028, %v1137
          %v1157 = vsub.f32 %v1029, %v1139
          %v1158 = vsub.f32 %v1030, %v1141
          %v1159 = vsub.f32 %v1031, %v1143
          %1160 = vst.msk [vmem:[%s444] sm:$0xff] %vm745, %v1144
          %1161 = vst.msk [vmem:[%s444 + $0x8] sm:$0xff] %vm745, %v1145
          %1162 = vst.msk [vmem:[%s444 + $0x10] sm:$0xff] %vm745, %v1146
          %1163 = vst.msk [vmem:[%s444 + $0x18] sm:$0xff] %vm745, %v1147
          %1164 = vst.msk [vmem:[%s444 + $0x20] sm:$0xff] %vm745, %v1148
          %1165 = vst.msk [vmem:[%s444 + $0x28] sm:$0xff] %vm745, %v1149
          %1166 = vst.msk [vmem:[%s444 + $0x30] sm:$0xff] %vm745, %v1150
          %1167 = vst.msk [vmem:[%s444 + $0x38] sm:$0xff] %vm745, %v1151
          %1168 = vst.msk [vmem:[%s444 + $0x40] sm:$0xff] %vm745, %v1152
          %1169 = vst.msk [vmem:[%s444 + $0x48] sm:$0xff] %vm745, %v1153
          %1170 = vst.msk [vmem:[%s444 + $0x50] sm:$0xff] %vm745, %v1154
          %1171 = vst.msk [vmem:[%s444 + $0x58] sm:$0xff] %vm745, %v1155
          %1172 = vst.msk [vmem:[%s444 + $0x60] sm:$0xff] %vm745, %v1156
          %1173 = vst.msk [vmem:[%s444 + $0x68] sm:$0xff] %vm745, %v1157
          %1174 = vst.msk [vmem:[%s444 + $0x70] sm:$0xff] %vm745, %v1158
          %1175 = vst.msk [vmem:[%s444 + $0x78] sm:$0xff] %vm745, %v1159
        $region90: #{gprgnn_forward.17} parent=77 // pred_fallthru
          _
        %s1176 = sand.u32 %s197, 1
        %s1177 = scalar_lea.sflag [#allocation6], %s1176
        %s1178 = sand.u32 %s197, 1
        %s1179 = smul.addr %s1178, 128
        %s1180 = scalar_lea.vmem [#allocation5], %s1179
        %s1181 = smul.u32 16, %s28
        %p1182 = scmp.lt.s32.totalorder %s1181, 31
        %s1183 = scalar_select %p1182, %s1181, 31
        %s1184 = smul.addr %s1183, 8
        %s1185 = scalar_lea.vmem %s7, %s1184
        // Predicated region
        $region91: #{gprgnn_forward.17} parent=77 // pred_check
          %p1186 = pneg %p207
        $region92: #{gprgnn_forward.17} parent=77 // pred_check_branch
          %1188 = sbr.rel (%p1186) target = $region94
        $region93: #{gprgnn_forward.17} parent=77 // pred_region
          %s1189 = smul.u32 16, %s28
          %s1191 = ssub.s32 2048, 2048
          %1192 = vsyncadd %s1177, %s1191
          %s1193 = smul.addr %s1189, 128
          %s1194 = scalar_lea.hbm %s6, %s1193
          %s1195 = sshll.u32 %s1180, 4
          %s1196 = int_to_ptr.vmem [resolvable:$true] %s1195
          %1201 = dma.vmem_to_hbm [thread:$0]  %s1196, 2048, %s1194, %s1177, 128, 128, 8
        $region94: #{gprgnn_forward.17} parent=77 // pred_fallthru
          _
        // Predicated region
        $region95: #{gprgnn_forward.17} parent=77 // pred_check
          %p1202 = pneg %p233
        $region96: #{gprgnn_forward.17} parent=77 // pred_check_branch
          %1204 = sbr.rel (%p1202) target = $region98
        $region97: #{gprgnn_forward.17} parent=77 // pred_region
          %s1205 = smul.u32 16, %s28
        $region98: #{gprgnn_forward.17} parent=77 // pred_fallthru
          _
      $region78: #{gprgnn_forward.17} parent=5 // pred_fallthru
        _
      %p1206 = scmp.le.s32.totalorder 2, %s19
      // Predicated region
      $region99: #{gprgnn_forward.17} parent=5 // pred_check
        %p1207 = pneg %p1206
      $region100: #{gprgnn_forward.17} parent=5 // pred_check_branch
        %1209 = sbr.rel (%p1207) target = $region102
      $region101: #{gprgnn_forward.17} parent=5 // pred_region
        %s1210 = ssub.s32 %s19, 2
        // Predicated region
        $region103: #{gprgnn_forward.17} parent=101 // pred_check
          %p1211 = pneg %p213
        $region104: #{gprgnn_forward.17} parent=101 // pred_check_branch
          %1213 = sbr.rel (%p1211) target = $region106
        $region105: #{gprgnn_forward.17} parent=101 // pred_region
          %s1214 = sand.u32 %s198, 1
          %s1215 = scalar_lea.sflag [#allocation6], %s1214
          %s1216 = sand.u32 %s198, 1
          %s1217 = smul.addr %s1216, 128
          %s1218 = scalar_lea.vmem [#allocation5], %s1217
          %1219 = dma.done %s1215, 2048
        $region106: #{gprgnn_forward.17} parent=101 // pred_fallthru
          _
        // Predicated region
        $region107: #{gprgnn_forward.17} parent=101 // pred_check
          %p1220 = pneg %p239
        $region108: #{gprgnn_forward.17} parent=101 // pred_check_branch
          %1222 = sbr.rel (%p1220) target = $region110
        $region109: #{gprgnn_forward.17} parent=101 // pred_region
          %s1223 = smul.u32 16, %s30
          %p1224 = scmp.lt.s32.totalorder %s1223, 31
          %s1225 = scalar_select %p1224, %s1223, 31
          %s1226 = smul.addr %s1225, 8
          %s1227 = scalar_lea.vmem %s7, %s1226
        $region110: #{gprgnn_forward.17} parent=101 // pred_fallthru
          _
      $region102: #{gprgnn_forward.17} parent=5 // pred_fallthru
        _
    $region6: #{gprgnn_forward.17} parent=1 // loop_footer
      %s23 = sadd.s32 1, %s19
    $region7: #{gprgnn_forward.17} parent=1 // loop_footer_branch
      %18 = sbr.rel target = $region3
    $region8: #{gprgnn_forward.17} parent=1 // loop_exit
      _
    %1228 = vsyncpa [#allocation6], 1
    %s1229 = scalar_lea.sflag [#allocation6], 1
    %1230 = vsyncpa %s1229, 1

</llo_original>
